<compile_context>
chip_gen: v5e
topology: v5e:2x2
jax: 0.10.0
libtpu: 0.0.40
codegen_flags: <defaults>
</compile_context>

<pallas_src>
import functools

import jax
import jax.numpy as jnp
import numpy as np
from jax.experimental import pallas as pl
from jax.experimental.pallas import tpu as pltpu

EPS = 1e-5
K = 3  # conv kernel size (module default)


def _residual_block_kernel(x_ref, mask_ref, w1_ref, g1_ref, bt1_ref,
                           w2_ref, g2_ref, bt2_ref, alpha_ref,
                           out_ref, im_ref, yext_ref,
                           *, pad, wp, m, n_valid):
    # x_ref:     (m + 2*pad, C) f32  row-extended, zero-padded input
    # mask_ref:  (m, 1)         f32  1.0 at real (interior) pixels, 0.0 at pad
    # w*_ref:    (9*C, C)       bf16 conv weights, HWIO reshaped for im2col
    # g*/bt*:    (1, C)         f32  BN gamma / beta
    # alpha_ref: (1,)           f32  PReLU slope (SMEM scalar)
    # out_ref:   (m, C)         f32  output in padded-flat layout (border junk)
    # im_ref:    (m, 9*C)       bf16 VMEM scratch: im2col patch matrix
    # yext_ref:  (m + 2*pad, C) f32  VMEM scratch: row-extended intermediate
    c = out_ref.shape[1]
    inv_m = 1.0 / float(n_valid)

    mask = mask_ref[...]                 # (m, 1)
    alpha = alpha_ref[0]                 # scalar PReLU slope from SMEM

    def conv3x3(src_ref, w_ref):
        # src_ref is zero at every padding position and in the extension rows,
        # which realizes the conv's 'SAME' zero padding.  Tap (kh, kw) for
        # output row p is simply row p + pad + (kh-1)*Wp + (kw-1) of src, so
        # the im2col matrix is built from nine full-height row-shifted copies
        # (single aligned store each, no strided H/W window materialization).
        for kh in range(K):
            for kw in range(K):
                t = kh * K + kw
                d = (kh - 1) * wp + (kw - 1)
                im_ref[:, t * c:(t + 1) * c] = (
                    src_ref[pad + d:pad + d + m, :].astype(jnp.bfloat16))
        # Single big MXU matmul: (m, 9C) x (9C, C), bf16 in / f32 acc.
        return jnp.dot(im_ref[...], w_ref[...],
                       preferred_element_type=jnp.float32)

    def batch_norm(y, g_ref, bt_ref):
        # Training-mode BN over interior pixels only, single masked pass:
        # biased var = E[y^2] - E[y]^2.
        ym = y * mask
        s1 = jnp.sum(ym, axis=0, keepdims=True)       # (1, C)
        s2 = jnp.sum(ym * y, axis=0, keepdims=True)   # (1, C) (mask^2 == mask)
        mean = s1 * inv_m
        var = s2 * inv_m - mean * mean
        scale = g_ref[...] * jax.lax.rsqrt(var + EPS)  # EUP rsqrt
        shift = bt_ref[...] - mean * scale
        return y * scale + shift

    # --- conv_block1: Conv -> BN -> PReLU ---
    y1 = batch_norm(conv3x3(x_ref, w1_ref), g1_ref, bt1_ref)
    y1 = jnp.where(y1 >= 0.0, y1, alpha * y1)

    # Stage y1 in the row-extended scratch so conv2's taps are again pure row
    # shifts.  Mask re-zeroes the padding ring; extension rows zeroed once.
    zrows = jnp.zeros((pad, c), jnp.float32)
    yext_ref[0:pad, :] = zrows
    yext_ref[pad + m:2 * pad + m, :] = zrows
    yext_ref[pad:pad + m, :] = y1 * mask

    # --- conv_block2: Conv -> BN ---
    y2 = batch_norm(conv3x3(yext_ref, w2_ref), g2_ref, bt2_ref)

    # --- residual add; border rows hold junk and are stripped by the wrapper.
    out_ref[...] = (y2 + x_ref[pad:pad + m, :]).astype(out_ref.dtype)


def residual_block(x_nchw, params):
    """x_nchw: (N, C, H, W) float32.  Returns (N, C, H, W)."""
    (w1, b1, g1, bt1, alpha, w2, b2, g2, bt2) = params
    del b1, b2  # cancelled exactly by the training-mode BN that follows
    N, C, H, W = x_nchw.shape
    Hp, Wp = H + 2, W + 2
    m_pad = N * Hp * Wp
    # Extension rows: >= max tap shift (Wp + 1), rounded to 16 so every
    # interior-row slice/store stays sublane/packing aligned.
    PAD = ((Wp + 1 + 15) // 16) * 16
    m_ext = m_pad + 2 * PAD

    # NCHW -> NHWC -> zero pad -> padded-flat (pixel rows, channel lanes)
    # -> add PAD zero rows top/bottom (all wrapper-side, essentially free).
    x = jnp.transpose(x_nchw, (0, 2, 3, 1))
    x_pad = jnp.pad(x, ((0, 0), (1, 1), (1, 1), (0, 0)))
    x_flat = x_pad.reshape(m_pad, C)
    x_ext = jnp.pad(x_flat, ((PAD, PAD), (0, 0)))

    # Conv weights: HWIO -> (9C, C) im2col layout, bf16 for the MXU.
    w1m = w1.reshape(K * K * C, C).astype(jnp.bfloat16)
    w2m = w2.reshape(K * K * C, C).astype(jnp.bfloat16)
    g1r, bt1r = g1.reshape(1, C), bt1.reshape(1, C)
    g2r, bt2r = g2.reshape(1, C), bt2.reshape(1, C)
    alpha_s = alpha.reshape(1).astype(jnp.float32)

    # {0,1} interior mask in the padded-flat layout (built host-side, free).
    mask_np = np.zeros((N, Hp, Wp, 1), np.float32)
    mask_np[:, 1:H + 1, 1:W + 1, :] = 1.0
    mask = jnp.asarray(mask_np.reshape(m_pad, 1))

    kernel = functools.partial(_residual_block_kernel, pad=PAD, wp=Wp,
                               m=m_pad, n_valid=N * H * W)

    def vspec(shape):
        return pl.BlockSpec(shape, lambda i, _n=len(shape): (0,) * _n)

    flops = 2 * 2 * m_pad * (K * K * C) * C            # two im2col matmuls
    bytes_accessed = int((x_ext.size + m_pad * C + mask.size + 4 * C) * 4
                         + (w1m.size + w2m.size) * 2)

    out_flat = pl.pallas_call(
        kernel,
        out_shape=jax.ShapeDtypeStruct((m_pad, C), jnp.float32),
        grid=(1,),
        in_specs=[
            vspec((m_ext, C)),                              # x (row-extended)
            vspec((m_pad, 1)),                              # interior mask
            vspec((K * K * C, C)),                          # w1 (im2col bf16)
            vspec((1, C)), vspec((1, C)),                   # gamma1, beta1
            vspec((K * K * C, C)),                          # w2 (im2col bf16)
            vspec((1, C)), vspec((1, C)),                   # gamma2, beta2
            pl.BlockSpec(memory_space=pltpu.MemorySpace.SMEM),  # PReLU alpha
        ],
        out_specs=vspec((m_pad, C)),
        scratch_shapes=[pltpu.VMEM((m_pad, K * K * C), jnp.bfloat16),
                        pltpu.VMEM((m_ext, C), jnp.float32)],
        compiler_params=pltpu.CompilerParams(
            dimension_semantics=("arbitrary",),
            vmem_limit_bytes=32 * 1024 * 1024),
        cost_estimate=pl.CostEstimate(flops=flops, transcendentals=2 * C,
                                      bytes_accessed=bytes_accessed),
    )(x_ext, mask, w1m, g1r, bt1r, w2m, g2r, bt2r, alpha_s)

    # Strip the padding border and go back to NCHW.
    out = out_flat.reshape(N, Hp, Wp, C)[:, 1:H + 1, 1:W + 1, :]
    return jnp.transpose(out, (0, 3, 1, 2))


def reference_forward(x_nchw, params):
    """Pure-JAX f32 reference of the PyTorch forward (training-mode BN)."""
    (w1, b1, g1, bt1, alpha, w2, b2, g2, bt2) = params
    x = jnp.transpose(x_nchw, (0, 2, 3, 1))

    def conv(v, w, b):
        y = jax.lax.conv_general_dilated(
            v, w, window_strides=(1, 1), padding='SAME',
            dimension_numbers=('NHWC', 'HWIO', 'NHWC'))
        return y + b.reshape(1, 1, 1, -1)

    def bn(y, g, bt):
        m = jnp.mean(y, axis=(0, 1, 2), keepdims=True)
        v = jnp.mean((y - m) ** 2, axis=(0, 1, 2), keepdims=True)
        return (y - m) * jax.lax.rsqrt(v + EPS) * g.reshape(1, 1, 1, -1) \
            + bt.reshape(1, 1, 1, -1)

    y = conv(x, w1, b1)
    y = bn(y, g1, bt1)
    y = jnp.where(y >= 0.0, y, alpha.reshape(()) * y)
    y = conv(y, w2, b2)
    y = bn(y, g2, bt2)
    y = y + x
    return jnp.transpose(y, (0, 3, 1, 2))


def init_params(key, n_channels):
    """Deterministic synthetic parameters (PyTorch shapes, HWIO weight layout)."""
    ks = jax.random.split(key, 8)
    C = n_channels
    w1 = 0.05 * jax.random.normal(ks[0], (K, K, C, C), jnp.float32)
    b1 = 0.10 * jax.random.normal(ks[1], (C,), jnp.float32)
    g1 = 1.0 + 0.10 * jax.random.normal(ks[2], (C,), jnp.float32)   # BN weight
    bt1 = 0.10 * jax.random.normal(ks[3], (C,), jnp.float32)        # BN bias
    alpha = jnp.array([0.25], jnp.float32)       # PReLU init (num_parameters=1)
    w2 = 0.05 * jax.random.normal(ks[4], (K, K, C, C), jnp.float32)
    b2 = 0.10 * jax.random.normal(ks[5], (C,), jnp.float32)
    g2 = 1.0 + 0.10 * jax.random.normal(ks[6], (C,), jnp.float32)
    bt2 = 0.10 * jax.random.normal(ks[7], (C,), jnp.float32)
    return (w1, b1, g1, bt1, alpha, w2, b2, g2, bt2)


if __name__ == "__main__":
    key = jax.random.PRNGKey(0)
    k_x, k_p = jax.random.split(key)

    N, C, H, W = 2, 64, 8, 8                 # n_channels=64 (module default)
    x = jax.random.normal(k_x, (N, C, H, W), jnp.float32)
    params = init_params(k_p, C)

    out = residual_block(x, params)
    out = jax.block_until_ready(out)

    ref = jax.block_until_ready(reference_forward(x, params))
    assert out.shape == (N, C, H, W)
    # Tolerance accounts for bf16 MXU matmuls (f32 accumulation) vs f32 ref.
    assert np.allclose(np.asarray(out), np.asarray(ref), rtol=2e-2, atol=2e-2), \
        "Pallas kernel output does not match JAX reference"

    print("KERNEL_OK")
</pallas_src>

<mosaic_0001>
module attributes {stable_mosaic.version = 11 : i64} {
  func.func @_residual_block_kernel(%arg0: i32, %arg1: memref<232x64xf32, #tpu.memory_space<vmem>>, %arg2: memref<200x1xf32, #tpu.memory_space<vmem>>, %arg3: memref<576x64xbf16, #tpu.memory_space<vmem>>, %arg4: memref<1x64xf32, #tpu.memory_space<vmem>>, %arg5: memref<1x64xf32, #tpu.memory_space<vmem>>, %arg6: memref<576x64xbf16, #tpu.memory_space<vmem>>, %arg7: memref<1x64xf32, #tpu.memory_space<vmem>>, %arg8: memref<1x64xf32, #tpu.memory_space<vmem>>, %arg9: memref<1xf32, #tpu.memory_space<smem>>, %arg10: memref<200x64xf32, #tpu.memory_space<vmem>>, %arg11: memref<200x576xbf16, #tpu.memory_space<vmem>>, %arg12: memref<232x64xf32, #tpu.memory_space<vmem>>) attributes {dimension_semantics = [#tpu.dimension_semantics<arbitrary>], iteration_bounds = array<i64: 1>, scalar_prefetch = 0 : i64, scratch_operands = 2 : i64, tpu.core_type = #tpu.core_type<tc>, window_params = [{pipeline_mode = #tpu.pipeline_mode<synchronous>, transform_indices = @transform_0, window_bounds = array<i64: 232, 64>}, {pipeline_mode = #tpu.pipeline_mode<synchronous>, transform_indices = @transform_1, window_bounds = array<i64: 200, 1>}, {pipeline_mode = #tpu.pipeline_mode<synchronous>, transform_indices = @transform_2, window_bounds = array<i64: 576, 64>}, {pipeline_mode = #tpu.pipeline_mode<synchronous>, transform_indices = @transform_3, window_bounds = array<i64: 1, 64>}, {pipeline_mode = #tpu.pipeline_mode<synchronous>, transform_indices = @transform_4, window_bounds = array<i64: 1, 64>}, {pipeline_mode = #tpu.pipeline_mode<synchronous>, transform_indices = @transform_5, window_bounds = array<i64: 576, 64>}, {pipeline_mode = #tpu.pipeline_mode<synchronous>, transform_indices = @transform_6, window_bounds = array<i64: 1, 64>}, {pipeline_mode = #tpu.pipeline_mode<synchronous>, transform_indices = @transform_7, window_bounds = array<i64: 1, 64>}, {transform_indices = @transform_8, window_bounds = array<i64: 1>}, {pipeline_mode = #tpu.pipeline_mode<synchronous>, transform_indices = @transform_9, window_bounds = array<i64: 200, 64>}]} {
    %c0 = arith.constant 0 : index
    %c0_0 = arith.constant 0 : index
    %0 = vector.load %arg2[%c0, %c0_0] : memref<200x1xf32, #tpu.memory_space<vmem>>, vector<200x1xf32>
    %c0_1 = arith.constant 0 : index
    %1 = memref.load %arg9[%c0_1] : memref<1xf32, #tpu.memory_space<smem>>
    %c5 = arith.constant 5 : index
    %c0_2 = arith.constant 0 : index
    %2 = vector.load %arg1[%c5, %c0_2] : memref<232x64xf32, #tpu.memory_space<vmem>>, vector<200x64xf32>
    %3 = arith.truncf %2 : vector<200x64xf32> to vector<200x64xbf16>
    %c0_3 = arith.constant 0 : index
    %c0_4 = arith.constant 0 : index
    %4 = vector.load %arg11[%c0_3, %c0_4] : memref<200x576xbf16, #tpu.memory_space<vmem>>, vector<200x64xbf16>
    tpu.vector_store %arg11[%c0_3, %c0_4], %3 {strides = array<i32>} : memref<200x576xbf16, #tpu.memory_space<vmem>>, vector<200x64xbf16>,
    %c6 = arith.constant 6 : index
    %c0_5 = arith.constant 0 : index
    %5 = vector.load %arg1[%c6, %c0_5] : memref<232x64xf32, #tpu.memory_space<vmem>>, vector<200x64xf32>
    %6 = arith.truncf %5 : vector<200x64xf32> to vector<200x64xbf16>
    %c0_6 = arith.constant 0 : index
    %c64 = arith.constant 64 : index
    %7 = vector.load %arg11[%c0_6, %c64] : memref<200x576xbf16, #tpu.memory_space<vmem>>, vector<200x64xbf16>
    tpu.vector_store %arg11[%c0_6, %c64], %6 {strides = array<i32>} : memref<200x576xbf16, #tpu.memory_space<vmem>>, vector<200x64xbf16>,
    %c7 = arith.constant 7 : index
    %c0_7 = arith.constant 0 : index
    %8 = vector.load %arg1[%c7, %c0_7] : memref<232x64xf32, #tpu.memory_space<vmem>>, vector<200x64xf32>
    %9 = arith.truncf %8 : vector<200x64xf32> to vector<200x64xbf16>
    %c0_8 = arith.constant 0 : index
    %c128 = arith.constant 128 : index
    %10 = vector.load %arg11[%c0_8, %c128] : memref<200x576xbf16, #tpu.memory_space<vmem>>, vector<200x64xbf16>
    tpu.vector_store %arg11[%c0_8, %c128], %9 {strides = array<i32>} : memref<200x576xbf16, #tpu.memory_space<vmem>>, vector<200x64xbf16>,
    %c15 = arith.constant 15 : index
    %c0_9 = arith.constant 0 : index
    %11 = vector.load %arg1[%c15, %c0_9] : memref<232x64xf32, #tpu.memory_space<vmem>>, vector<200x64xf32>
    %12 = arith.truncf %11 : vector<200x64xf32> to vector<200x64xbf16>
    %c0_10 = arith.constant 0 : index
    %c192 = arith.constant 192 : index
    %13 = vector.load %arg11[%c0_10, %c192] : memref<200x576xbf16, #tpu.memory_space<vmem>>, vector<200x64xbf16>
    tpu.vector_store %arg11[%c0_10, %c192], %12 {strides = array<i32>} : memref<200x576xbf16, #tpu.memory_space<vmem>>, vector<200x64xbf16>,
    %c16 = arith.constant 16 : index
    %c0_11 = arith.constant 0 : index
    %14 = vector.load %arg1[%c16, %c0_11] : memref<232x64xf32, #tpu.memory_space<vmem>>, vector<200x64xf32>
    %15 = arith.truncf %14 : vector<200x64xf32> to vector<200x64xbf16>
    %c0_12 = arith.constant 0 : index
    %c256 = arith.constant 256 : index
    %16 = vector.load %arg11[%c0_12, %c256] : memref<200x576xbf16, #tpu.memory_space<vmem>>, vector<200x64xbf16>
    tpu.vector_store %arg11[%c0_12, %c256], %15 {strides = array<i32>} : memref<200x576xbf16, #tpu.memory_space<vmem>>, vector<200x64xbf16>,
    %c17 = arith.constant 17 : index
    %c0_13 = arith.constant 0 : index
    %17 = vector.load %arg1[%c17, %c0_13] : memref<232x64xf32, #tpu.memory_space<vmem>>, vector<200x64xf32>
    %18 = arith.truncf %17 : vector<200x64xf32> to vector<200x64xbf16>
    %c0_14 = arith.constant 0 : index
    %c320 = arith.constant 320 : index
    %19 = vector.load %arg11[%c0_14, %c320] : memref<200x576xbf16, #tpu.memory_space<vmem>>, vector<200x64xbf16>
    tpu.vector_store %arg11[%c0_14, %c320], %18 {strides = array<i32>} : memref<200x576xbf16, #tpu.memory_space<vmem>>, vector<200x64xbf16>,
    %c25 = arith.constant 25 : index
    %c0_15 = arith.constant 0 : index
    %20 = vector.load %arg1[%c25, %c0_15] : memref<232x64xf32, #tpu.memory_space<vmem>>, vector<200x64xf32>
    %21 = arith.truncf %20 : vector<200x64xf32> to vector<200x64xbf16>
    %c0_16 = arith.constant 0 : index
    %c384 = arith.constant 384 : index
    %22 = vector.load %arg11[%c0_16, %c384] : memref<200x576xbf16, #tpu.memory_space<vmem>>, vector<200x64xbf16>
    tpu.vector_store %arg11[%c0_16, %c384], %21 {strides = array<i32>} : memref<200x576xbf16, #tpu.memory_space<vmem>>, vector<200x64xbf16>,
    %c26 = arith.constant 26 : index
    %c0_17 = arith.constant 0 : index
    %23 = vector.load %arg1[%c26, %c0_17] : memref<232x64xf32, #tpu.memory_space<vmem>>, vector<200x64xf32>
    %24 = arith.truncf %23 : vector<200x64xf32> to vector<200x64xbf16>
    %c0_18 = arith.constant 0 : index
    %c448 = arith.constant 448 : index
    %25 = vector.load %arg11[%c0_18, %c448] : memref<200x576xbf16, #tpu.memory_space<vmem>>, vector<200x64xbf16>
    tpu.vector_store %arg11[%c0_18, %c448], %24 {strides = array<i32>} : memref<200x576xbf16, #tpu.memory_space<vmem>>, vector<200x64xbf16>,
    %c27 = arith.constant 27 : index
    %c0_19 = arith.constant 0 : index
    %26 = vector.load %arg1[%c27, %c0_19] : memref<232x64xf32, #tpu.memory_space<vmem>>, vector<200x64xf32>
    %27 = arith.truncf %26 : vector<200x64xf32> to vector<200x64xbf16>
    %c0_20 = arith.constant 0 : index
    %c512 = arith.constant 512 : index
    %28 = vector.load %arg11[%c0_20, %c512] : memref<200x576xbf16, #tpu.memory_space<vmem>>, vector<200x64xbf16>
    tpu.vector_store %arg11[%c0_20, %c512], %27 {strides = array<i32>} : memref<200x576xbf16, #tpu.memory_space<vmem>>, vector<200x64xbf16>,
    %c0_21 = arith.constant 0 : index
    %c0_22 = arith.constant 0 : index
    %29 = vector.load %arg11[%c0_21, %c0_22] : memref<200x576xbf16, #tpu.memory_space<vmem>>, vector<200x576xbf16>
    %c0_23 = arith.constant 0 : index
    %c0_24 = arith.constant 0 : index
    %30 = vector.load %arg3[%c0_23, %c0_24] : memref<576x64xbf16, #tpu.memory_space<vmem>>, vector<576x64xbf16>
    %cst = arith.constant dense<0.000000e+00> : vector<200x64xf32>
    %31 = tpu.matmul %29, %30, %cst {dimension_numbers = #tpu.dot_dimension_numbers<[1], [0], [0], [1], [0, 0, 1, 1], [], []>} : vector<200x576xbf16>, vector<576x64xbf16>, vector<200x64xf32> -> vector<200x64xf32>
    %32 = vector.broadcast %0 : vector<200x1xf32> to vector<200x64xf32>
    %33 = arith.mulf %31, %32 : vector<200x64xf32>
    %cst_25 = arith.constant dense<0.000000e+00> : vector<64xf32>
    %34 = vector.multi_reduction <add>, %33, %cst_25 [0] : vector<200x64xf32> to vector<64xf32>
    %35 = vector.shape_cast %34 : vector<64xf32> to vector<1x64xf32>
    %36 = arith.mulf %33, %31 : vector<200x64xf32>
    %cst_26 = arith.constant dense<0.000000e+00> : vector<64xf32>
    %37 = vector.multi_reduction <add>, %36, %cst_26 [0] : vector<200x64xf32> to vector<64xf32>
    %38 = vector.shape_cast %37 : vector<64xf32> to vector<1x64xf32>
    %cst_27 = arith.constant 7.812500e-03 : f32
    %39 = vector.broadcast %cst_27 : f32 to vector<1x64xf32>
    %40 = arith.mulf %35, %39 : vector<1x64xf32>
    %cst_28 = arith.constant 7.812500e-03 : f32
    %41 = vector.broadcast %cst_28 : f32 to vector<1x64xf32>
    %42 = arith.mulf %38, %41 : vector<1x64xf32>
    %43 = arith.mulf %40, %40 : vector<1x64xf32>
    %44 = arith.subf %42, %43 : vector<1x64xf32>
    %c0_29 = arith.constant 0 : index
    %c0_30 = arith.constant 0 : index
    %45 = vector.load %arg4[%c0_29, %c0_30] : memref<1x64xf32, #tpu.memory_space<vmem>>, vector<1x64xf32>
    %cst_31 = arith.constant 9.99999974E-6 : f32
    %46 = vector.broadcast %cst_31 : f32 to vector<1x64xf32>
    %47 = arith.addf %44, %46 : vector<1x64xf32>
    %48 = math.rsqrt %47 : vector<1x64xf32>
    %49 = arith.mulf %45, %48 : vector<1x64xf32>
    %c0_32 = arith.constant 0 : index
    %c0_33 = arith.constant 0 : index
    %50 = vector.load %arg5[%c0_32, %c0_33] : memref<1x64xf32, #tpu.memory_space<vmem>>, vector<1x64xf32>
    %51 = arith.mulf %40, %49 : vector<1x64xf32>
    %52 = arith.subf %50, %51 : vector<1x64xf32>
    %53 = vector.broadcast %49 : vector<1x64xf32> to vector<200x64xf32>
    %54 = arith.mulf %31, %53 : vector<200x64xf32>
    %55 = vector.broadcast %52 : vector<1x64xf32> to vector<200x64xf32>
    %56 = arith.addf %54, %55 : vector<200x64xf32>
    %cst_34 = arith.constant 0.000000e+00 : f32
    %57 = vector.broadcast %cst_34 : f32 to vector<200x64xf32>
    %58 = arith.cmpf oge, %56, %57 : vector<200x64xf32>
    %59 = vector.broadcast %1 : f32 to vector<200x64xf32>
    %60 = arith.mulf %59, %56 : vector<200x64xf32>
    %61 = arith.select %58, %56, %60 : vector<200x64xi1>, vector<200x64xf32>
    %cst_35 = arith.constant 0.000000e+00 : f32
    %62 = vector.broadcast %cst_35 : f32 to vector<16x64xf32>
    %c0_36 = arith.constant 0 : index
    %c0_37 = arith.constant 0 : index
    %63 = vector.load %arg12[%c0_36, %c0_37] : memref<232x64xf32, #tpu.memory_space<vmem>>, vector<16x64xf32>
    tpu.vector_store %arg12[%c0_36, %c0_37], %62 {strides = array<i32>} : memref<232x64xf32, #tpu.memory_space<vmem>>, vector<16x64xf32>,
    %c216 = arith.constant 216 : index
    %c0_38 = arith.constant 0 : index
    %64 = vector.load %arg12[%c216, %c0_38] : memref<232x64xf32, #tpu.memory_space<vmem>>, vector<16x64xf32>
    tpu.vector_store %arg12[%c216, %c0_38], %62 {strides = array<i32>} : memref<232x64xf32, #tpu.memory_space<vmem>>, vector<16x64xf32>,
    %65 = vector.broadcast %0 : vector<200x1xf32> to vector<200x64xf32>
    %66 = arith.mulf %61, %65 : vector<200x64xf32>
    %c16_39 = arith.constant 16 : index
    %c0_40 = arith.constant 0 : index
    %67 = vector.load %arg12[%c16_39, %c0_40] : memref<232x64xf32, #tpu.memory_space<vmem>>, vector<200x64xf32>
    tpu.vector_store %arg12[%c16_39, %c0_40], %66 {strides = array<i32>} : memref<232x64xf32, #tpu.memory_space<vmem>>, vector<200x64xf32>,
    %c5_41 = arith.constant 5 : index
    %c0_42 = arith.constant 0 : index
    %68 = vector.load %arg12[%c5_41, %c0_42] : memref<232x64xf32, #tpu.memory_space<vmem>>, vector<200x64xf32>
    %69 = arith.truncf %68 : vector<200x64xf32> to vector<200x64xbf16>
    %c0_43 = arith.constant 0 : index
    %c0_44 = arith.constant 0 : index
    %70 = vector.load %arg11[%c0_43, %c0_44] : memref<200x576xbf16, #tpu.memory_space<vmem>>, vector<200x64xbf16>
    tpu.vector_store %arg11[%c0_43, %c0_44], %69 {strides = array<i32>} : memref<200x576xbf16, #tpu.memory_space<vmem>>, vector<200x64xbf16>,
    %c6_45 = arith.constant 6 : index
    %c0_46 = arith.constant 0 : index
    %71 = vector.load %arg12[%c6_45, %c0_46] : memref<232x64xf32, #tpu.memory_space<vmem>>, vector<200x64xf32>
    %72 = arith.truncf %71 : vector<200x64xf32> to vector<200x64xbf16>
    %c0_47 = arith.constant 0 : index
    %c64_48 = arith.constant 64 : index
    %73 = vector.load %arg11[%c0_47, %c64_48] : memref<200x576xbf16, #tpu.memory_space<vmem>>, vector<200x64xbf16>
    tpu.vector_store %arg11[%c0_47, %c64_48], %72 {strides = array<i32>} : memref<200x576xbf16, #tpu.memory_space<vmem>>, vector<200x64xbf16>,
    %c7_49 = arith.constant 7 : index
    %c0_50 = arith.constant 0 : index
    %74 = vector.load %arg12[%c7_49, %c0_50] : memref<232x64xf32, #tpu.memory_space<vmem>>, vector<200x64xf32>
    %75 = arith.truncf %74 : vector<200x64xf32> to vector<200x64xbf16>
    %c0_51 = arith.constant 0 : index
    %c128_52 = arith.constant 128 : index
    %76 = vector.load %arg11[%c0_51, %c128_52] : memref<200x576xbf16, #tpu.memory_space<vmem>>, vector<200x64xbf16>
    tpu.vector_store %arg11[%c0_51, %c128_52], %75 {strides = array<i32>} : memref<200x576xbf16, #tpu.memory_space<vmem>>, vector<200x64xbf16>,
    %c15_53 = arith.constant 15 : index
    %c0_54 = arith.constant 0 : index
    %77 = vector.load %arg12[%c15_53, %c0_54] : memref<232x64xf32, #tpu.memory_space<vmem>>, vector<200x64xf32>
    %78 = arith.truncf %77 : vector<200x64xf32> to vector<200x64xbf16>
    %c0_55 = arith.constant 0 : index
    %c192_56 = arith.constant 192 : index
    %79 = vector.load %arg11[%c0_55, %c192_56] : memref<200x576xbf16, #tpu.memory_space<vmem>>, vector<200x64xbf16>
    tpu.vector_store %arg11[%c0_55, %c192_56], %78 {strides = array<i32>} : memref<200x576xbf16, #tpu.memory_space<vmem>>, vector<200x64xbf16>,
    %c16_57 = arith.constant 16 : index
    %c0_58 = arith.constant 0 : index
    %80 = vector.load %arg12[%c16_57, %c0_58] : memref<232x64xf32, #tpu.memory_space<vmem>>, vector<200x64xf32>
    %81 = arith.truncf %80 : vector<200x64xf32> to vector<200x64xbf16>
    %c0_59 = arith.constant 0 : index
    %c256_60 = arith.constant 256 : index
    %82 = vector.load %arg11[%c0_59, %c256_60] : memref<200x576xbf16, #tpu.memory_space<vmem>>, vector<200x64xbf16>
    tpu.vector_store %arg11[%c0_59, %c256_60], %81 {strides = array<i32>} : memref<200x576xbf16, #tpu.memory_space<vmem>>, vector<200x64xbf16>,
    %c17_61 = arith.constant 17 : index
    %c0_62 = arith.constant 0 : index
    %83 = vector.load %arg12[%c17_61, %c0_62] : memref<232x64xf32, #tpu.memory_space<vmem>>, vector<200x64xf32>
    %84 = arith.truncf %83 : vector<200x64xf32> to vector<200x64xbf16>
    %c0_63 = arith.constant 0 : index
    %c320_64 = arith.constant 320 : index
    %85 = vector.load %arg11[%c0_63, %c320_64] : memref<200x576xbf16, #tpu.memory_space<vmem>>, vector<200x64xbf16>
    tpu.vector_store %arg11[%c0_63, %c320_64], %84 {strides = array<i32>} : memref<200x576xbf16, #tpu.memory_space<vmem>>, vector<200x64xbf16>,
    %c25_65 = arith.constant 25 : index
    %c0_66 = arith.constant 0 : index
    %86 = vector.load %arg12[%c25_65, %c0_66] : memref<232x64xf32, #tpu.memory_space<vmem>>, vector<200x64xf32>
    %87 = arith.truncf %86 : vector<200x64xf32> to vector<200x64xbf16>
    %c0_67 = arith.constant 0 : index
    %c384_68 = arith.constant 384 : index
    %88 = vector.load %arg11[%c0_67, %c384_68] : memref<200x576xbf16, #tpu.memory_space<vmem>>, vector<200x64xbf16>
    tpu.vector_store %arg11[%c0_67, %c384_68], %87 {strides = array<i32>} : memref<200x576xbf16, #tpu.memory_space<vmem>>, vector<200x64xbf16>,
    %c26_69 = arith.constant 26 : index
    %c0_70 = arith.constant 0 : index
    %89 = vector.load %arg12[%c26_69, %c0_70] : memref<232x64xf32, #tpu.memory_space<vmem>>, vector<200x64xf32>
    %90 = arith.truncf %89 : vector<200x64xf32> to vector<200x64xbf16>
    %c0_71 = arith.constant 0 : index
    %c448_72 = arith.constant 448 : index
    %91 = vector.load %arg11[%c0_71, %c448_72] : memref<200x576xbf16, #tpu.memory_space<vmem>>, vector<200x64xbf16>
    tpu.vector_store %arg11[%c0_71, %c448_72], %90 {strides = array<i32>} : memref<200x576xbf16, #tpu.memory_space<vmem>>, vector<200x64xbf16>,
    %c27_73 = arith.constant 27 : index
    %c0_74 = arith.constant 0 : index
    %92 = vector.load %arg12[%c27_73, %c0_74] : memref<232x64xf32, #tpu.memory_space<vmem>>, vector<200x64xf32>
    %93 = arith.truncf %92 : vector<200x64xf32> to vector<200x64xbf16>
    %c0_75 = arith.constant 0 : index
    %c512_76 = arith.constant 512 : index
    %94 = vector.load %arg11[%c0_75, %c512_76] : memref<200x576xbf16, #tpu.memory_space<vmem>>, vector<200x64xbf16>
    tpu.vector_store %arg11[%c0_75, %c512_76], %93 {strides = array<i32>} : memref<200x576xbf16, #tpu.memory_space<vmem>>, vector<200x64xbf16>,
    %c0_77 = arith.constant 0 : index
    %c0_78 = arith.constant 0 : index
    %95 = vector.load %arg11[%c0_77, %c0_78] : memref<200x576xbf16, #tpu.memory_space<vmem>>, vector<200x576xbf16>
    %c0_79 = arith.constant 0 : index
    %c0_80 = arith.constant 0 : index
    %96 = vector.load %arg6[%c0_79, %c0_80] : memref<576x64xbf16, #tpu.memory_space<vmem>>, vector<576x64xbf16>
    %cst_81 = arith.constant dense<0.000000e+00> : vector<200x64xf32>
    %97 = tpu.matmul %95, %96, %cst_81 {dimension_numbers = #tpu.dot_dimension_numbers<[1], [0], [0], [1], [0, 0, 1, 1], [], []>} : vector<200x576xbf16>, vector<576x64xbf16>, vector<200x64xf32> -> vector<200x64xf32>
    %98 = vector.broadcast %0 : vector<200x1xf32> to vector<200x64xf32>
    %99 = arith.mulf %97, %98 : vector<200x64xf32>
    %cst_82 = arith.constant dense<0.000000e+00> : vector<64xf32>
    %100 = vector.multi_reduction <add>, %99, %cst_82 [0] : vector<200x64xf32> to vector<64xf32>
    %101 = vector.shape_cast %100 : vector<64xf32> to vector<1x64xf32>
    %102 = arith.mulf %99, %97 : vector<200x64xf32>
    %cst_83 = arith.constant dense<0.000000e+00> : vector<64xf32>
    %103 = vector.multi_reduction <add>, %102, %cst_83 [0] : vector<200x64xf32> to vector<64xf32>
    %104 = vector.shape_cast %103 : vector<64xf32> to vector<1x64xf32>
    %cst_84 = arith.constant 7.812500e-03 : f32
    %105 = vector.broadcast %cst_84 : f32 to vector<1x64xf32>
    %106 = arith.mulf %101, %105 : vector<1x64xf32>
    %cst_85 = arith.constant 7.812500e-03 : f32
    %107 = vector.broadcast %cst_85 : f32 to vector<1x64xf32>
    %108 = arith.mulf %104, %107 : vector<1x64xf32>
    %109 = arith.mulf %106, %106 : vector<1x64xf32>
    %110 = arith.subf %108, %109 : vector<1x64xf32>
    %c0_86 = arith.constant 0 : index
    %c0_87 = arith.constant 0 : index
    %111 = vector.load %arg7[%c0_86, %c0_87] : memref<1x64xf32, #tpu.memory_space<vmem>>, vector<1x64xf32>
    %cst_88 = arith.constant 9.99999974E-6 : f32
    %112 = vector.broadcast %cst_88 : f32 to vector<1x64xf32>
    %113 = arith.addf %110, %112 : vector<1x64xf32>
    %114 = math.rsqrt %113 : vector<1x64xf32>
    %115 = arith.mulf %111, %114 : vector<1x64xf32>
    %c0_89 = arith.constant 0 : index
    %c0_90 = arith.constant 0 : index
    %116 = vector.load %arg8[%c0_89, %c0_90] : memref<1x64xf32, #tpu.memory_space<vmem>>, vector<1x64xf32>
    %117 = arith.mulf %106, %115 : vector<1x64xf32>
    %118 = arith.subf %116, %117 : vector<1x64xf32>
    %119 = vector.broadcast %115 : vector<1x64xf32> to vector<200x64xf32>
    %120 = arith.mulf %97, %119 : vector<200x64xf32>
    %121 = vector.broadcast %118 : vector<1x64xf32> to vector<200x64xf32>
    %122 = arith.addf %120, %121 : vector<200x64xf32>
    %c16_91 = arith.constant 16 : index
    %c0_92 = arith.constant 0 : index
    %123 = vector.load %arg1[%c16_91, %c0_92] : memref<232x64xf32, #tpu.memory_space<vmem>>, vector<200x64xf32>
    %124 = arith.addf %122, %123 : vector<200x64xf32>
    %c0_93 = arith.constant 0 : index
    %c0_94 = arith.constant 0 : index
    %125 = vector.load %arg10[%c0_93, %c0_94] : memref<200x64xf32, #tpu.memory_space<vmem>>, vector<200x64xf32>
    tpu.vector_store %arg10[%c0_93, %c0_94], %124 {strides = array<i32>} : memref<200x64xf32, #tpu.memory_space<vmem>>, vector<200x64xf32>,
    return
  }
  func.func @transform_0(%arg0: i32) -> (i32, i32) {
    %c0_i32 = arith.constant 0 : i32
    %c0_i32_0 = arith.constant 0 : i32
    %c0_i32_1 = arith.constant 0 : i32
    return %c0_i32, %c0_i32_0 : i32, i32
  }
  func.func @transform_1(%arg0: i32) -> (i32, i32) {
    %c0_i32 = arith.constant 0 : i32
    %c0_i32_0 = arith.constant 0 : i32
    %c0_i32_1 = arith.constant 0 : i32
    return %c0_i32, %c0_i32_0 : i32, i32
  }
  func.func @transform_2(%arg0: i32) -> (i32, i32) {
    %c0_i32 = arith.constant 0 : i32
    %c0_i32_0 = arith.constant 0 : i32
    %c0_i32_1 = arith.constant 0 : i32
    return %c0_i32, %c0_i32_0 : i32, i32
  }
  func.func @transform_3(%arg0: i32) -> (i32, i32) {
    %c0_i32 = arith.constant 0 : i32
    %c0_i32_0 = arith.constant 0 : i32
    %c0_i32_1 = arith.constant 0 : i32
    return %c0_i32, %c0_i32_0 : i32, i32
  }
  func.func @transform_4(%arg0: i32) -> (i32, i32) {
    %c0_i32 = arith.constant 0 : i32
    %c0_i32_0 = arith.constant 0 : i32
    %c0_i32_1 = arith.constant 0 : i32
    return %c0_i32, %c0_i32_0 : i32, i32
  }
  func.func @transform_5(%arg0: i32) -> (i32, i32) {
    %c0_i32 = arith.constant 0 : i32
    %c0_i32_0 = arith.constant 0 : i32
    %c0_i32_1 = arith.constant 0 : i32
    return %c0_i32, %c0_i32_0 : i32, i32
  }
  func.func @transform_6(%arg0: i32) -> (i32, i32) {
    %c0_i32 = arith.constant 0 : i32
    %c0_i32_0 = arith.constant 0 : i32
    %c0_i32_1 = arith.constant 0 : i32
    return %c0_i32, %c0_i32_0 : i32, i32
  }
  func.func @transform_7(%arg0: i32) -> (i32, i32) {
    %c0_i32 = arith.constant 0 : i32
    %c0_i32_0 = arith.constant 0 : i32
    %c0_i32_1 = arith.constant 0 : i32
    return %c0_i32, %c0_i32_0 : i32, i32
  }
  func.func @transform_8(%arg0: i32) -> i32 {
    %c0_i32 = arith.constant 0 : i32
    %c0_i32_0 = arith.constant 0 : i32
    return %c0_i32 : i32
  }
  func.func @transform_9(%arg0: i32) -> (i32, i32) {
    %c0_i32 = arith.constant 0 : i32
    %c0_i32_0 = arith.constant 0 : i32
    %c0_i32_1 = arith.constant 0 : i32
    return %c0_i32, %c0_i32_0 : i32, i32
  }
}

</mosaic_0001>

<llo_original>
// kernel: tpu_custom_call.1
$region0: #{tpu_custom_call.1}
  #allocation0 [shape = 'u32[]', space=smem, size = 0x4, offset = 0x4, fixed_abs, tag = 'smem constant byte address 0x4 - core index']
  #allocation1 [shape = 'u32[72,128]{1,0:T(1,128)}', space=vmem, size = 0x9000, scoped, tag = 'internal scratch']
  #allocation2 [shape = 'bf16[200,576]{1,0:T(8,128)(2,1)}', space=vmem, size = 0x3e800, scoped, tag = 'scratch operand']
  #allocation3 [shape = 'f32[232,64]{1,0:T(8,128)}', space=vmem, size = 0x1d000, scoped, tag = 'scratch operand']
  #allocation4 [shape = 'f32[1]{0:T(128)S(6)}', space=smem, size = 0x200, scoped, tag = 'scoped memory for tpu_custom_call.1']
  %s0 = inlined_call_operand.vmem [shape: f32[232,64], index: 0, kind: input, shape index: {}]
  %s1 = inlined_call_operand.vmem [shape: f32[200,1], index: 1, kind: input, shape index: {}]
  %s2 = inlined_call_operand.vmem [shape: bf16[576,64], index: 2, kind: input, shape index: {}]
  %s3 = inlined_call_operand.vmem [shape: f32[1,64], index: 3, kind: input, shape index: {}]
  %s4 = inlined_call_operand.vmem [shape: f32[1,64], index: 4, kind: input, shape index: {}]
  %s5 = inlined_call_operand.vmem [shape: bf16[576,64], index: 5, kind: input, shape index: {}]
  %s6 = inlined_call_operand.vmem [shape: f32[1,64], index: 6, kind: input, shape index: {}]
  %s7 = inlined_call_operand.vmem [shape: f32[1,64], index: 7, kind: input, shape index: {}]
  %s8 = inlined_call_operand.<no memory space> [shape: f32[1], index: 8, kind: input, shape index: {}]
  %s9 = inlined_call_operand.vmem [shape: f32[200,64], index: 9, kind: output, shape index: {}]
  %s10 = sld [smem:[#allocation0]]
  $region46: #{tpu_custom_call.1} parent=0
    _
  %s12 = ssub.s32 1, %s10
  %s13 = scalar_select 0, %s12, %s10
  %14 = sst [smem:[#allocation4]] %s8
  // Predicated region
  $region2: #{tpu_custom_call.1} parent=0 // pred_check
    _
  $region3: #{tpu_custom_call.1} parent=0 // pred_check_branch
    %16 = sbr.rel (0) target = $region5
  $region4: #{tpu_custom_call.1} parent=0 // pred_region
    _
  $region5: #{tpu_custom_call.1} parent=0 // pred_fallthru
    _
  // Predicated region
  $region6: #{tpu_custom_call.1} parent=0 // pred_check
    _
  $region7: #{tpu_custom_call.1} parent=0 // pred_check_branch
    %18 = sbr.rel (0) target = $region9
  $region8: #{tpu_custom_call.1} parent=0 // pred_region
    _
  $region9: #{tpu_custom_call.1} parent=0 // pred_fallthru
    _
  // Predicated region
  $region10: #{tpu_custom_call.1} parent=0 // pred_check
    _
  $region11: #{tpu_custom_call.1} parent=0 // pred_check_branch
    %20 = sbr.rel (0) target = $region13
  $region12: #{tpu_custom_call.1} parent=0 // pred_region
    _
  $region13: #{tpu_custom_call.1} parent=0 // pred_fallthru
    _
  // Predicated region
  $region14: #{tpu_custom_call.1} parent=0 // pred_check
    _
  $region15: #{tpu_custom_call.1} parent=0 // pred_check_branch
    %22 = sbr.rel (0) target = $region17
  $region16: #{tpu_custom_call.1} parent=0 // pred_region
    _
  $region17: #{tpu_custom_call.1} parent=0 // pred_fallthru
    _
  // Predicated region
  $region18: #{tpu_custom_call.1} parent=0 // pred_check
    _
  $region19: #{tpu_custom_call.1} parent=0 // pred_check_branch
    %24 = sbr.rel (0) target = $region21
  $region20: #{tpu_custom_call.1} parent=0 // pred_region
    _
  $region21: #{tpu_custom_call.1} parent=0 // pred_fallthru
    _
  // Predicated region
  $region22: #{tpu_custom_call.1} parent=0 // pred_check
    _
  $region23: #{tpu_custom_call.1} parent=0 // pred_check_branch
    %26 = sbr.rel (0) target = $region25
  $region24: #{tpu_custom_call.1} parent=0 // pred_region
    _
  $region25: #{tpu_custom_call.1} parent=0 // pred_fallthru
    _
  // Predicated region
  $region26: #{tpu_custom_call.1} parent=0 // pred_check
    _
  $region27: #{tpu_custom_call.1} parent=0 // pred_check_branch
    %28 = sbr.rel (0) target = $region29
  $region28: #{tpu_custom_call.1} parent=0 // pred_region
    _
  $region29: #{tpu_custom_call.1} parent=0 // pred_fallthru
    _
  // Predicated region
  $region30: #{tpu_custom_call.1} parent=0 // pred_check
    _
  $region31: #{tpu_custom_call.1} parent=0 // pred_check_branch
    %30 = sbr.rel (0) target = $region33
  $region32: #{tpu_custom_call.1} parent=0 // pred_region
    _
  $region33: #{tpu_custom_call.1} parent=0 // pred_fallthru
    _
  // Predicated region
  $region34: #{tpu_custom_call.1} parent=0 // pred_check
    _
  $region35: #{tpu_custom_call.1} parent=0 // pred_check_branch
    %32 = sbr.rel (0) target = $region37
  $region36: #{tpu_custom_call.1} parent=0 // pred_region
    _
  $region37: #{tpu_custom_call.1} parent=0 // pred_fallthru
    _
  %v34 = vld [vmem:[%s1] sm:$0xff]
  %v35 = vld [vmem:[%s1 + $0x8] sm:$0xff]
  %v36 = vld [vmem:[%s1 + $0x10] sm:$0xff]
  %v37 = vld [vmem:[%s1 + $0x18] sm:$0xff]
  %v38 = vld [vmem:[%s1 + $0x20] sm:$0xff]
  %v39 = vld [vmem:[%s1 + $0x28] sm:$0xff]
  %v40 = vld [vmem:[%s1 + $0x30] sm:$0xff]
  %v41 = vld [vmem:[%s1 + $0x38] sm:$0xff]
  %v42 = vld [vmem:[%s1 + $0x40] sm:$0xff]
  %v43 = vld [vmem:[%s1 + $0x48] sm:$0xff]
  %v44 = vld [vmem:[%s1 + $0x50] sm:$0xff]
  %v45 = vld [vmem:[%s1 + $0x58] sm:$0xff]
  %v46 = vld [vmem:[%s1 + $0x60] sm:$0xff]
  %v47 = vld [vmem:[%s1 + $0x68] sm:$0xff]
  %v48 = vld [vmem:[%s1 + $0x70] sm:$0xff]
  %v49 = vld [vmem:[%s1 + $0x78] sm:$0xff]
  %v50 = vld [vmem:[%s1 + $0x80] sm:$0xff]
  %v51 = vld [vmem:[%s1 + $0x88] sm:$0xff]
  %v52 = vld [vmem:[%s1 + $0x90] sm:$0xff]
  %v53 = vld [vmem:[%s1 + $0x98] sm:$0xff]
  %v54 = vld [vmem:[%s1 + $0xa0] sm:$0xff]
  %v55 = vld [vmem:[%s1 + $0xa8] sm:$0xff]
  %v56 = vld [vmem:[%s1 + $0xb0] sm:$0xff]
  %v57 = vld [vmem:[%s1 + $0xb8] sm:$0xff]
  %v58 = vld [vmem:[%s1 + $0xc0] sm:$0xff]
  %s59 = sld [smem:[#allocation4]]
  %v60 = vld [vmem:[%s0 + $0x5] sm:$0xff]
  %v61 = vld [vmem:[%s0 + $0xd] sm:$0xff]
  %v62 = vld [vmem:[%s0 + $0x15] sm:$0xff]
  %v63 = vld [vmem:[%s0 + $0x1d] sm:$0xff]
  %v64 = vld [vmem:[%s0 + $0x25] sm:$0xff]
  %v65 = vld [vmem:[%s0 + $0x2d] sm:$0xff]
  %v66 = vld [vmem:[%s0 + $0x35] sm:$0xff]
  %v67 = vld [vmem:[%s0 + $0x3d] sm:$0xff]
  %v68 = vld [vmem:[%s0 + $0x45] sm:$0xff]
  %v69 = vld [vmem:[%s0 + $0x4d] sm:$0xff]
  %v70 = vld [vmem:[%s0 + $0x55] sm:$0xff]
  %v71 = vld [vmem:[%s0 + $0x5d] sm:$0xff]
  %v72 = vld [vmem:[%s0 + $0x65] sm:$0xff]
  %v73 = vld [vmem:[%s0 + $0x6d] sm:$0xff]
  %v74 = vld [vmem:[%s0 + $0x75] sm:$0xff]
  %v75 = vld [vmem:[%s0 + $0x7d] sm:$0xff]
  %v76 = vld [vmem:[%s0 + $0x85] sm:$0xff]
  %v77 = vld [vmem:[%s0 + $0x8d] sm:$0xff]
  %v78 = vld [vmem:[%s0 + $0x95] sm:$0xff]
  %v79 = vld [vmem:[%s0 + $0x9d] sm:$0xff]
  %v80 = vld [vmem:[%s0 + $0xa5] sm:$0xff]
  %v81 = vld [vmem:[%s0 + $0xad] sm:$0xff]
  %v82 = vld [vmem:[%s0 + $0xb5] sm:$0xff]
  %v83 = vld [vmem:[%s0 + $0xbd] sm:$0xff]
  %v84 = vld [vmem:[%s0 + $0xc5] sm:$0xff]
  %v85 = vpack.c.bf16 %v60, %v60
  %v86 = vpack.c.bf16 %v61, %v61
  %v87 = vpack.c.bf16 %v62, %v62
  %v88 = vpack.c.bf16 %v63, %v63
  %v89 = vpack.c.bf16 %v64, %v64
  %v90 = vpack.c.bf16 %v65, %v65
  %v91 = vpack.c.bf16 %v66, %v66
  %v92 = vpack.c.bf16 %v67, %v67
  %v93 = vpack.c.bf16 %v68, %v68
  %v94 = vpack.c.bf16 %v69, %v69
  %v95 = vpack.c.bf16 %v70, %v70
  %v96 = vpack.c.bf16 %v71, %v71
  %v97 = vpack.c.bf16 %v72, %v72
  %v98 = vpack.c.bf16 %v73, %v73
  %v99 = vpack.c.bf16 %v74, %v74
  %v100 = vpack.c.bf16 %v75, %v75
  %v101 = vpack.c.bf16 %v76, %v76
  %v102 = vpack.c.bf16 %v77, %v77
  %v103 = vpack.c.bf16 %v78, %v78
  %v104 = vpack.c.bf16 %v79, %v79
  %v105 = vpack.c.bf16 %v80, %v80
  %v106 = vpack.c.bf16 %v81, %v81
  %v107 = vpack.c.bf16 %v82, %v82
  %v108 = vpack.c.bf16 %v83, %v83
  %v109 = vpack.c.bf16 %v84, %v84
  %vm110 = vcmask 519168
  %111 = vst.msk [vmem:[#allocation2] sm:$0xf] %vm110, %v85
  %112 = vst.msk [vmem:[#allocation2 + $0x14] sm:$0xf] %vm110, %v86
  %113 = vst.msk [vmem:[#allocation2 + $0x28] sm:$0xf] %vm110, %v87
  %114 = vst.msk [vmem:[#allocation2 + $0x3c] sm:$0xf] %vm110, %v88
  %115 = vst.msk [vmem:[#allocation2 + $0x50] sm:$0xf] %vm110, %v89
  %116 = vst.msk [vmem:[#allocation2 + $0x64] sm:$0xf] %vm110, %v90
  %117 = vst.msk [vmem:[#allocation2 + $0x78] sm:$0xf] %vm110, %v91
  %118 = vst.msk [vmem:[#allocation2 + $0x8c] sm:$0xf] %vm110, %v92
  %119 = vst.msk [vmem:[#allocation2 + $0xa0] sm:$0xf] %vm110, %v93
  %120 = vst.msk [vmem:[#allocation2 + $0xb4] sm:$0xf] %vm110, %v94
  %121 = vst.msk [vmem:[#allocation2 + $0xc8] sm:$0xf] %vm110, %v95
  %122 = vst.msk [vmem:[#allocation2 + $0xdc] sm:$0xf] %vm110, %v96
  %123 = vst.msk [vmem:[#allocation2 + $0xf0] sm:$0xf] %vm110, %v97
  %124 = vst.msk [vmem:[#allocation2 + $0x104] sm:$0xf] %vm110, %v98
  %125 = vst.msk [vmem:[#allocation2 + $0x118] sm:$0xf] %vm110, %v99
  %126 = vst.msk [vmem:[#allocation2 + $0x12c] sm:$0xf] %vm110, %v100
  %127 = vst.msk [vmem:[#allocation2 + $0x140] sm:$0xf] %vm110, %v101
  %128 = vst.msk [vmem:[#allocation2 + $0x154] sm:$0xf] %vm110, %v102
  %129 = vst.msk [vmem:[#allocation2 + $0x168] sm:$0xf] %vm110, %v103
  %130 = vst.msk [vmem:[#allocation2 + $0x17c] sm:$0xf] %vm110, %v104
  %131 = vst.msk [vmem:[#allocation2 + $0x190] sm:$0xf] %vm110, %v105
  %132 = vst.msk [vmem:[#allocation2 + $0x1a4] sm:$0xf] %vm110, %v106
  %133 = vst.msk [vmem:[#allocation2 + $0x1b8] sm:$0xf] %vm110, %v107
  %134 = vst.msk [vmem:[#allocation2 + $0x1cc] sm:$0xf] %vm110, %v108
  %135 = vst.msk [vmem:[#allocation2 + $0x1e0] sm:$0xf] %vm110, %v109
  %v136 = vld [vmem:[%s0 + $0x6] sm:$0xff]
  %v137 = vld [vmem:[%s0 + $0xe] sm:$0xff]
  %v138 = vld [vmem:[%s0 + $0x16] sm:$0xff]
  %v139 = vld [vmem:[%s0 + $0x1e] sm:$0xff]
  %v140 = vld [vmem:[%s0 + $0x26] sm:$0xff]
  %v141 = vld [vmem:[%s0 + $0x2e] sm:$0xff]
  %v142 = vld [vmem:[%s0 + $0x36] sm:$0xff]
  %v143 = vld [vmem:[%s0 + $0x3e] sm:$0xff]
  %v144 = vld [vmem:[%s0 + $0x46] sm:$0xff]
  %v145 = vld [vmem:[%s0 + $0x4e] sm:$0xff]
  %v146 = vld [vmem:[%s0 + $0x56] sm:$0xff]
  %v147 = vld [vmem:[%s0 + $0x5e] sm:$0xff]
  %v148 = vld [vmem:[%s0 + $0x66] sm:$0xff]
  %v149 = vld [vmem:[%s0 + $0x6e] sm:$0xff]
  %v150 = vld [vmem:[%s0 + $0x76] sm:$0xff]
  %v151 = vld [vmem:[%s0 + $0x7e] sm:$0xff]
  %v152 = vld [vmem:[%s0 + $0x86] sm:$0xff]
  %v153 = vld [vmem:[%s0 + $0x8e] sm:$0xff]
  %v154 = vld [vmem:[%s0 + $0x96] sm:$0xff]
  %v155 = vld [vmem:[%s0 + $0x9e] sm:$0xff]
  %v156 = vld [vmem:[%s0 + $0xa6] sm:$0xff]
  %v157 = vld [vmem:[%s0 + $0xae] sm:$0xff]
  %v158 = vld [vmem:[%s0 + $0xb6] sm:$0xff]
  %v159 = vld [vmem:[%s0 + $0xbe] sm:$0xff]
  %v160 = vld [vmem:[%s0 + $0xc6] sm:$0xff]
  %v161 = vpack.c.bf16 %v136, %v136
  %v162 = vpack.c.bf16 %v137, %v137
  %v163 = vpack.c.bf16 %v138, %v138
  %v164 = vpack.c.bf16 %v139, %v139
  %v165 = vpack.c.bf16 %v140, %v140
  %v166 = vpack.c.bf16 %v141, %v141
  %v167 = vpack.c.bf16 %v142, %v142
  %v168 = vpack.c.bf16 %v143, %v143
  %v169 = vpack.c.bf16 %v144, %v144
  %v170 = vpack.c.bf16 %v145, %v145
  %v171 = vpack.c.bf16 %v146, %v146
  %v172 = vpack.c.bf16 %v147, %v147
  %v173 = vpack.c.bf16 %v148, %v148
  %v174 = vpack.c.bf16 %v149, %v149
  %v175 = vpack.c.bf16 %v150, %v150
  %v176 = vpack.c.bf16 %v151, %v151
  %v177 = vpack.c.bf16 %v152, %v152
  %v178 = vpack.c.bf16 %v153, %v153
  %v179 = vpack.c.bf16 %v154, %v154
  %v180 = vpack.c.bf16 %v155, %v155
  %v181 = vpack.c.bf16 %v156, %v156
  %v182 = vpack.c.bf16 %v157, %v157
  %v183 = vpack.c.bf16 %v158, %v158
  %v184 = vpack.c.bf16 %v159, %v159
  %v185 = vpack.c.bf16 %v160, %v160
  %211 = vrot.lane.b32.xlu0 %v161, 64
  %v212 = vpop.permute.xlu0 %211
  %213 = vrot.lane.b32.xlu0 %v162, 64
  %v214 = vpop.permute.xlu0 %213
  %215 = vrot.lane.b32.xlu0 %v163, 64
  %v216 = vpop.permute.xlu0 %215
  %217 = vrot.lane.b32.xlu0 %v164, 64
  %v218 = vpop.permute.xlu0 %217
  %219 = vrot.lane.b32.xlu0 %v165, 64
  %v220 = vpop.permute.xlu0 %219
  %221 = vrot.lane.b32.xlu0 %v166, 64
  %v222 = vpop.permute.xlu0 %221
  %223 = vrot.lane.b32.xlu0 %v167, 64
  %v224 = vpop.permute.xlu0 %223
  %225 = vrot.lane.b32.xlu0 %v168, 64
  %v226 = vpop.permute.xlu0 %225
  %227 = vrot.lane.b32.xlu0 %v169, 64
  %v228 = vpop.permute.xlu0 %227
  %229 = vrot.lane.b32.xlu0 %v170, 64
  %v230 = vpop.permute.xlu0 %229
  %231 = vrot.lane.b32.xlu0 %v171, 64
  %v232 = vpop.permute.xlu0 %231
  %233 = vrot.lane.b32.xlu0 %v172, 64
  %v234 = vpop.permute.xlu0 %233
  %235 = vrot.lane.b32.xlu0 %v173, 64
  %v236 = vpop.permute.xlu0 %235
  %237 = vrot.lane.b32.xlu0 %v174, 64
  %v238 = vpop.permute.xlu0 %237
  %239 = vrot.lane.b32.xlu0 %v175, 64
  %v240 = vpop.permute.xlu0 %239
  %241 = vrot.lane.b32.xlu0 %v176, 64
  %v242 = vpop.permute.xlu0 %241
  %243 = vrot.lane.b32.xlu0 %v177, 64
  %v244 = vpop.permute.xlu0 %243
  %245 = vrot.lane.b32.xlu0 %v178, 64
  %v246 = vpop.permute.xlu0 %245
  %247 = vrot.lane.b32.xlu0 %v179, 64
  %v248 = vpop.permute.xlu0 %247
  %249 = vrot.lane.b32.xlu0 %v180, 64
  %v250 = vpop.permute.xlu0 %249
  %251 = vrot.lane.b32.xlu0 %v181, 64
  %v252 = vpop.permute.xlu0 %251
  %253 = vrot.lane.b32.xlu0 %v182, 64
  %v254 = vpop.permute.xlu0 %253
  %255 = vrot.lane.b32.xlu0 %v183, 64
  %v256 = vpop.permute.xlu0 %255
  %257 = vrot.lane.b32.xlu0 %v184, 64
  %v258 = vpop.permute.xlu0 %257
  %259 = vrot.lane.b32.xlu0 %v185, 64
  %v260 = vpop.permute.xlu0 %259
  %vm286 = vcmask 1043968
  %287 = vst.msk [vmem:[#allocation2] sm:$0xf] %vm286, %v212
  %288 = vst.msk [vmem:[#allocation2 + $0x14] sm:$0xf] %vm286, %v214
  %289 = vst.msk [vmem:[#allocation2 + $0x28] sm:$0xf] %vm286, %v216
  %290 = vst.msk [vmem:[#allocation2 + $0x3c] sm:$0xf] %vm286, %v218
  %291 = vst.msk [vmem:[#allocation2 + $0x50] sm:$0xf] %vm286, %v220
  %292 = vst.msk [vmem:[#allocation2 + $0x64] sm:$0xf] %vm286, %v222
  %293 = vst.msk [vmem:[#allocation2 + $0x78] sm:$0xf] %vm286, %v224
  %294 = vst.msk [vmem:[#allocation2 + $0x8c] sm:$0xf] %vm286, %v226
  %295 = vst.msk [vmem:[#allocation2 + $0xa0] sm:$0xf] %vm286, %v228
  %296 = vst.msk [vmem:[#allocation2 + $0xb4] sm:$0xf] %vm286, %v230
  %297 = vst.msk [vmem:[#allocation2 + $0xc8] sm:$0xf] %vm286, %v232
  %298 = vst.msk [vmem:[#allocation2 + $0xdc] sm:$0xf] %vm286, %v234
  %299 = vst.msk [vmem:[#allocation2 + $0xf0] sm:$0xf] %vm286, %v236
  %300 = vst.msk [vmem:[#allocation2 + $0x104] sm:$0xf] %vm286, %v238
  %301 = vst.msk [vmem:[#allocation2 + $0x118] sm:$0xf] %vm286, %v240
  %302 = vst.msk [vmem:[#allocation2 + $0x12c] sm:$0xf] %vm286, %v242
  %303 = vst.msk [vmem:[#allocation2 + $0x140] sm:$0xf] %vm286, %v244
  %304 = vst.msk [vmem:[#allocation2 + $0x154] sm:$0xf] %vm286, %v246
  %305 = vst.msk [vmem:[#allocation2 + $0x168] sm:$0xf] %vm286, %v248
  %306 = vst.msk [vmem:[#allocation2 + $0x17c] sm:$0xf] %vm286, %v250
  %307 = vst.msk [vmem:[#allocation2 + $0x190] sm:$0xf] %vm286, %v252
  %308 = vst.msk [vmem:[#allocation2 + $0x1a4] sm:$0xf] %vm286, %v254
  %309 = vst.msk [vmem:[#allocation2 + $0x1b8] sm:$0xf] %vm286, %v256
  %310 = vst.msk [vmem:[#allocation2 + $0x1cc] sm:$0xf] %vm286, %v258
  %311 = vst.msk [vmem:[#allocation2 + $0x1e0] sm:$0xf] %vm286, %v260
  %v312 = vld [vmem:[%s0 + $0x7] sm:$0xff]
  %v313 = vld [vmem:[%s0 + $0xf] sm:$0xff]
  %v314 = vld [vmem:[%s0 + $0x17] sm:$0xff]
  %v315 = vld [vmem:[%s0 + $0x1f] sm:$0xff]
  %v316 = vld [vmem:[%s0 + $0x27] sm:$0xff]
  %v317 = vld [vmem:[%s0 + $0x2f] sm:$0xff]
  %v318 = vld [vmem:[%s0 + $0x37] sm:$0xff]
  %v319 = vld [vmem:[%s0 + $0x3f] sm:$0xff]
  %v320 = vld [vmem:[%s0 + $0x47] sm:$0xff]
  %v321 = vld [vmem:[%s0 + $0x4f] sm:$0xff]
  %v322 = vld [vmem:[%s0 + $0x57] sm:$0xff]
  %v323 = vld [vmem:[%s0 + $0x5f] sm:$0xff]
  %v324 = vld [vmem:[%s0 + $0x67] sm:$0xff]
  %v325 = vld [vmem:[%s0 + $0x6f] sm:$0xff]
  %v326 = vld [vmem:[%s0 + $0x77] sm:$0xff]
  %v327 = vld [vmem:[%s0 + $0x7f] sm:$0xff]
  %v328 = vld [vmem:[%s0 + $0x87] sm:$0xff]
  %v329 = vld [vmem:[%s0 + $0x8f] sm:$0xff]
  %v330 = vld [vmem:[%s0 + $0x97] sm:$0xff]
  %v331 = vld [vmem:[%s0 + $0x9f] sm:$0xff]
  %v332 = vld [vmem:[%s0 + $0xa7] sm:$0xff]
  %v333 = vld [vmem:[%s0 + $0xaf] sm:$0xff]
  %v334 = vld [vmem:[%s0 + $0xb7] sm:$0xff]
  %v335 = vld [vmem:[%s0 + $0xbf] sm:$0xff]
  %v336 = vld [vmem:[%s0 + $0xc7] sm:$0xff]
  %v337 = vpack.c.bf16 %v312, %v312
  %v338 = vpack.c.bf16 %v313, %v313
  %v339 = vpack.c.bf16 %v314, %v314
  %v340 = vpack.c.bf16 %v315, %v315
  %v341 = vpack.c.bf16 %v316, %v316
  %v342 = vpack.c.bf16 %v317, %v317
  %v343 = vpack.c.bf16 %v318, %v318
  %v344 = vpack.c.bf16 %v319, %v319
  %v345 = vpack.c.bf16 %v320, %v320
  %v346 = vpack.c.bf16 %v321, %v321
  %v347 = vpack.c.bf16 %v322, %v322
  %v348 = vpack.c.bf16 %v323, %v323
  %v349 = vpack.c.bf16 %v324, %v324
  %v350 = vpack.c.bf16 %v325, %v325
  %v351 = vpack.c.bf16 %v326, %v326
  %v352 = vpack.c.bf16 %v327, %v327
  %v353 = vpack.c.bf16 %v328, %v328
  %v354 = vpack.c.bf16 %v329, %v329
  %v355 = vpack.c.bf16 %v330, %v330
  %v356 = vpack.c.bf16 %v331, %v331
  %v357 = vpack.c.bf16 %v332, %v332
  %v358 = vpack.c.bf16 %v333, %v333
  %v359 = vpack.c.bf16 %v334, %v334
  %v360 = vpack.c.bf16 %v335, %v335
  %v361 = vpack.c.bf16 %v336, %v336
  %362 = vst.msk [vmem:[#allocation2 + $0x4] sm:$0xf] %vm110, %v337
  %363 = vst.msk [vmem:[#allocation2 + $0x18] sm:$0xf] %vm110, %v338
  %364 = vst.msk [vmem:[#allocation2 + $0x2c] sm:$0xf] %vm110, %v339
  %365 = vst.msk [vmem:[#allocation2 + $0x40] sm:$0xf] %vm110, %v340
  %366 = vst.msk [vmem:[#allocation2 + $0x54] sm:$0xf] %vm110, %v341
  %367 = vst.msk [vmem:[#allocation2 + $0x68] sm:$0xf] %vm110, %v342
  %368 = vst.msk [vmem:[#allocation2 + $0x7c] sm:$0xf] %vm110, %v343
  %369 = vst.msk [vmem:[#allocation2 + $0x90] sm:$0xf] %vm110, %v344
  %370 = vst.msk [vmem:[#allocation2 + $0xa4] sm:$0xf] %vm110, %v345
  %371 = vst.msk [vmem:[#allocation2 + $0xb8] sm:$0xf] %vm110, %v346
  %372 = vst.msk [vmem:[#allocation2 + $0xcc] sm:$0xf] %vm110, %v347
  %373 = vst.msk [vmem:[#allocation2 + $0xe0] sm:$0xf] %vm110, %v348
  %374 = vst.msk [vmem:[#allocation2 + $0xf4] sm:$0xf] %vm110, %v349
  %375 = vst.msk [vmem:[#allocation2 + $0x108] sm:$0xf] %vm110, %v350
  %376 = vst.msk [vmem:[#allocation2 + $0x11c] sm:$0xf] %vm110, %v351
  %377 = vst.msk [vmem:[#allocation2 + $0x130] sm:$0xf] %vm110, %v352
  %378 = vst.msk [vmem:[#allocation2 + $0x144] sm:$0xf] %vm110, %v353
  %379 = vst.msk [vmem:[#allocation2 + $0x158] sm:$0xf] %vm110, %v354
  %380 = vst.msk [vmem:[#allocation2 + $0x16c] sm:$0xf] %vm110, %v355
  %381 = vst.msk [vmem:[#allocation2 + $0x180] sm:$0xf] %vm110, %v356
  %382 = vst.msk [vmem:[#allocation2 + $0x194] sm:$0xf] %vm110, %v357
  %383 = vst.msk [vmem:[#allocation2 + $0x1a8] sm:$0xf] %vm110, %v358
  %384 = vst.msk [vmem:[#allocation2 + $0x1bc] sm:$0xf] %vm110, %v359
  %385 = vst.msk [vmem:[#allocation2 + $0x1d0] sm:$0xf] %vm110, %v360
  %386 = vst.msk [vmem:[#allocation2 + $0x1e4] sm:$0xf] %vm110, %v361
  %v387 = vld [vmem:[%s0 + $0xf] sm:$0xff]
  %v388 = vld [vmem:[%s0 + $0x17] sm:$0xff]
  %v389 = vld [vmem:[%s0 + $0x1f] sm:$0xff]
  %v390 = vld [vmem:[%s0 + $0x27] sm:$0xff]
  %v391 = vld [vmem:[%s0 + $0x2f] sm:$0xff]
  %v392 = vld [vmem:[%s0 + $0x37] sm:$0xff]
  %v393 = vld [vmem:[%s0 + $0x3f] sm:$0xff]
  %v394 = vld [vmem:[%s0 + $0x47] sm:$0xff]
  %v395 = vld [vmem:[%s0 + $0x4f] sm:$0xff]
  %v396 = vld [vmem:[%s0 + $0x57] sm:$0xff]
  %v397 = vld [vmem:[%s0 + $0x5f] sm:$0xff]
  %v398 = vld [vmem:[%s0 + $0x67] sm:$0xff]
  %v399 = vld [vmem:[%s0 + $0x6f] sm:$0xff]
  %v400 = vld [vmem:[%s0 + $0x77] sm:$0xff]
  %v401 = vld [vmem:[%s0 + $0x7f] sm:$0xff]
  %v402 = vld [vmem:[%s0 + $0x87] sm:$0xff]
  %v403 = vld [vmem:[%s0 + $0x8f] sm:$0xff]
  %v404 = vld [vmem:[%s0 + $0x97] sm:$0xff]
  %v405 = vld [vmem:[%s0 + $0x9f] sm:$0xff]
  %v406 = vld [vmem:[%s0 + $0xa7] sm:$0xff]
  %v407 = vld [vmem:[%s0 + $0xaf] sm:$0xff]
  %v408 = vld [vmem:[%s0 + $0xb7] sm:$0xff]
  %v409 = vld [vmem:[%s0 + $0xbf] sm:$0xff]
  %v410 = vld [vmem:[%s0 + $0xc7] sm:$0xff]
  %v411 = vld [vmem:[%s0 + $0xcf] sm:$0xff]
  %v412 = vpack.c.bf16 %v387, %v387
  %v413 = vpack.c.bf16 %v388, %v388
  %v414 = vpack.c.bf16 %v389, %v389
  %v415 = vpack.c.bf16 %v390, %v390
  %v416 = vpack.c.bf16 %v391, %v391
  %v417 = vpack.c.bf16 %v392, %v392
  %v418 = vpack.c.bf16 %v393, %v393
  %v419 = vpack.c.bf16 %v394, %v394
  %v420 = vpack.c.bf16 %v395, %v395
  %v421 = vpack.c.bf16 %v396, %v396
  %v422 = vpack.c.bf16 %v397, %v397
  %v423 = vpack.c.bf16 %v398, %v398
  %v424 = vpack.c.bf16 %v399, %v399
  %v425 = vpack.c.bf16 %v400, %v400
  %v426 = vpack.c.bf16 %v401, %v401
  %v427 = vpack.c.bf16 %v402, %v402
  %v428 = vpack.c.bf16 %v403, %v403
  %v429 = vpack.c.bf16 %v404, %v404
  %v430 = vpack.c.bf16 %v405, %v405
  %v431 = vpack.c.bf16 %v406, %v406
  %v432 = vpack.c.bf16 %v407, %v407
  %v433 = vpack.c.bf16 %v408, %v408
  %v434 = vpack.c.bf16 %v409, %v409
  %v435 = vpack.c.bf16 %v410, %v410
  %v436 = vpack.c.bf16 %v411, %v411
  %462 = vrot.lane.b32.xlu0 %v412, 64
  %v463 = vpop.permute.xlu0 %462
  %464 = vrot.lane.b32.xlu0 %v413, 64
  %v465 = vpop.permute.xlu0 %464
  %466 = vrot.lane.b32.xlu0 %v414, 64
  %v467 = vpop.permute.xlu0 %466
  %468 = vrot.lane.b32.xlu0 %v415, 64
  %v469 = vpop.permute.xlu0 %468
  %470 = vrot.lane.b32.xlu0 %v416, 64
  %v471 = vpop.permute.xlu0 %470
  %472 = vrot.lane.b32.xlu0 %v417, 64
  %v473 = vpop.permute.xlu0 %472
  %474 = vrot.lane.b32.xlu0 %v418, 64
  %v475 = vpop.permute.xlu0 %474
  %476 = vrot.lane.b32.xlu0 %v419, 64
  %v477 = vpop.permute.xlu0 %476
  %478 = vrot.lane.b32.xlu0 %v420, 64
  %v479 = vpop.permute.xlu0 %478
  %480 = vrot.lane.b32.xlu0 %v421, 64
  %v481 = vpop.permute.xlu0 %480
  %482 = vrot.lane.b32.xlu0 %v422, 64
  %v483 = vpop.permute.xlu0 %482
  %484 = vrot.lane.b32.xlu0 %v423, 64
  %v485 = vpop.permute.xlu0 %484
  %486 = vrot.lane.b32.xlu0 %v424, 64
  %v487 = vpop.permute.xlu0 %486
  %488 = vrot.lane.b32.xlu0 %v425, 64
  %v489 = vpop.permute.xlu0 %488
  %490 = vrot.lane.b32.xlu0 %v426, 64
  %v491 = vpop.permute.xlu0 %490
  %492 = vrot.lane.b32.xlu0 %v427, 64
  %v493 = vpop.permute.xlu0 %492
  %494 = vrot.lane.b32.xlu0 %v428, 64
  %v495 = vpop.permute.xlu0 %494
  %496 = vrot.lane.b32.xlu0 %v429, 64
  %v497 = vpop.permute.xlu0 %496
  %498 = vrot.lane.b32.xlu0 %v430, 64
  %v499 = vpop.permute.xlu0 %498
  %500 = vrot.lane.b32.xlu0 %v431, 64
  %v501 = vpop.permute.xlu0 %500
  %502 = vrot.lane.b32.xlu0 %v432, 64
  %v503 = vpop.permute.xlu0 %502
  %504 = vrot.lane.b32.xlu0 %v433, 64
  %v505 = vpop.permute.xlu0 %504
  %506 = vrot.lane.b32.xlu0 %v434, 64
  %v507 = vpop.permute.xlu0 %506
  %508 = vrot.lane.b32.xlu0 %v435, 64
  %v509 = vpop.permute.xlu0 %508
  %510 = vrot.lane.b32.xlu0 %v436, 64
  %v511 = vpop.permute.xlu0 %510
  %537 = vst.msk [vmem:[#allocation2 + $0x4] sm:$0xf] %vm286, %v463
  %538 = vst.msk [vmem:[#allocation2 + $0x18] sm:$0xf] %vm286, %v465
  %539 = vst.msk [vmem:[#allocation2 + $0x2c] sm:$0xf] %vm286, %v467
  %540 = vst.msk [vmem:[#allocation2 + $0x40] sm:$0xf] %vm286, %v469
  %541 = vst.msk [vmem:[#allocation2 + $0x54] sm:$0xf] %vm286, %v471
  %542 = vst.msk [vmem:[#allocation2 + $0x68] sm:$0xf] %vm286, %v473
  %543 = vst.msk [vmem:[#allocation2 + $0x7c] sm:$0xf] %vm286, %v475
  %544 = vst.msk [vmem:[#allocation2 + $0x90] sm:$0xf] %vm286, %v477
  %545 = vst.msk [vmem:[#allocation2 + $0xa4] sm:$0xf] %vm286, %v479
  %546 = vst.msk [vmem:[#allocation2 + $0xb8] sm:$0xf] %vm286, %v481
  %547 = vst.msk [vmem:[#allocation2 + $0xcc] sm:$0xf] %vm286, %v483
  %548 = vst.msk [vmem:[#allocation2 + $0xe0] sm:$0xf] %vm286, %v485
  %549 = vst.msk [vmem:[#allocation2 + $0xf4] sm:$0xf] %vm286, %v487
  %550 = vst.msk [vmem:[#allocation2 + $0x108] sm:$0xf] %vm286, %v489
  %551 = vst.msk [vmem:[#allocation2 + $0x11c] sm:$0xf] %vm286, %v491
  %552 = vst.msk [vmem:[#allocation2 + $0x130] sm:$0xf] %vm286, %v493
  %553 = vst.msk [vmem:[#allocation2 + $0x144] sm:$0xf] %vm286, %v495
  %554 = vst.msk [vmem:[#allocation2 + $0x158] sm:$0xf] %vm286, %v497
  %555 = vst.msk [vmem:[#allocation2 + $0x16c] sm:$0xf] %vm286, %v499
  %556 = vst.msk [vmem:[#allocation2 + $0x180] sm:$0xf] %vm286, %v501
  %557 = vst.msk [vmem:[#allocation2 + $0x194] sm:$0xf] %vm286, %v503
  %558 = vst.msk [vmem:[#allocation2 + $0x1a8] sm:$0xf] %vm286, %v505
  %559 = vst.msk [vmem:[#allocation2 + $0x1bc] sm:$0xf] %vm286, %v507
  %560 = vst.msk [vmem:[#allocation2 + $0x1d0] sm:$0xf] %vm286, %v509
  %561 = vst.msk [vmem:[#allocation2 + $0x1e4] sm:$0xf] %vm286, %v511
  %v562 = vld [vmem:[%s0 + $0x10] sm:$0xff]
  %v563 = vld [vmem:[%s0 + $0x18] sm:$0xff]
  %v564 = vld [vmem:[%s0 + $0x20] sm:$0xff]
  %v565 = vld [vmem:[%s0 + $0x28] sm:$0xff]
  %v566 = vld [vmem:[%s0 + $0x30] sm:$0xff]
  %v567 = vld [vmem:[%s0 + $0x38] sm:$0xff]
  %v568 = vld [vmem:[%s0 + $0x40] sm:$0xff]
  %v569 = vld [vmem:[%s0 + $0x48] sm:$0xff]
  %v570 = vld [vmem:[%s0 + $0x50] sm:$0xff]
  %v571 = vld [vmem:[%s0 + $0x58] sm:$0xff]
  %v572 = vld [vmem:[%s0 + $0x60] sm:$0xff]
  %v573 = vld [vmem:[%s0 + $0x68] sm:$0xff]
  %v574 = vld [vmem:[%s0 + $0x70] sm:$0xff]
  %v575 = vld [vmem:[%s0 + $0x78] sm:$0xff]
  %v576 = vld [vmem:[%s0 + $0x80] sm:$0xff]
  %v577 = vld [vmem:[%s0 + $0x88] sm:$0xff]
  %v578 = vld [vmem:[%s0 + $0x90] sm:$0xff]
  %v579 = vld [vmem:[%s0 + $0x98] sm:$0xff]
  %v580 = vld [vmem:[%s0 + $0xa0] sm:$0xff]
  %v581 = vld [vmem:[%s0 + $0xa8] sm:$0xff]
  %v582 = vld [vmem:[%s0 + $0xb0] sm:$0xff]
  %v583 = vld [vmem:[%s0 + $0xb8] sm:$0xff]
  %v584 = vld [vmem:[%s0 + $0xc0] sm:$0xff]
  %v585 = vld [vmem:[%s0 + $0xc8] sm:$0xff]
  %v586 = vld [vmem:[%s0 + $0xd0] sm:$0xff]
  %v587 = vpack.c.bf16 %v562, %v562
  %v588 = vpack.c.bf16 %v563, %v563
  %v589 = vpack.c.bf16 %v564, %v564
  %v590 = vpack.c.bf16 %v565, %v565
  %v591 = vpack.c.bf16 %v566, %v566
  %v592 = vpack.c.bf16 %v567, %v567
  %v593 = vpack.c.bf16 %v568, %v568
  %v594 = vpack.c.bf16 %v569, %v569
  %v595 = vpack.c.bf16 %v570, %v570
  %v596 = vpack.c.bf16 %v571, %v571
  %v597 = vpack.c.bf16 %v572, %v572
  %v598 = vpack.c.bf16 %v573, %v573
  %v599 = vpack.c.bf16 %v574, %v574
  %v600 = vpack.c.bf16 %v575, %v575
  %v601 = vpack.c.bf16 %v576, %v576
  %v602 = vpack.c.bf16 %v577, %v577
  %v603 = vpack.c.bf16 %v578, %v578
  %v604 = vpack.c.bf16 %v579, %v579
  %v605 = vpack.c.bf16 %v580, %v580
  %v606 = vpack.c.bf16 %v581, %v581
  %v607 = vpack.c.bf16 %v582, %v582
  %v608 = vpack.c.bf16 %v583, %v583
  %v609 = vpack.c.bf16 %v584, %v584
  %v610 = vpack.c.bf16 %v585, %v585
  %v611 = vpack.c.bf16 %v586, %v586
  %612 = vst.msk [vmem:[#allocation2 + $0x8] sm:$0xf] %vm110, %v587
  %613 = vst.msk [vmem:[#allocation2 + $0x1c] sm:$0xf] %vm110, %v588
  %614 = vst.msk [vmem:[#allocation2 + $0x30] sm:$0xf] %vm110, %v589
  %615 = vst.msk [vmem:[#allocation2 + $0x44] sm:$0xf] %vm110, %v590
  %616 = vst.msk [vmem:[#allocation2 + $0x58] sm:$0xf] %vm110, %v591
  %617 = vst.msk [vmem:[#allocation2 + $0x6c] sm:$0xf] %vm110, %v592
  %618 = vst.msk [vmem:[#allocation2 + $0x80] sm:$0xf] %vm110, %v593
  %619 = vst.msk [vmem:[#allocation2 + $0x94] sm:$0xf] %vm110, %v594
  %620 = vst.msk [vmem:[#allocation2 + $0xa8] sm:$0xf] %vm110, %v595
  %621 = vst.msk [vmem:[#allocation2 + $0xbc] sm:$0xf] %vm110, %v596
  %622 = vst.msk [vmem:[#allocation2 + $0xd0] sm:$0xf] %vm110, %v597
  %623 = vst.msk [vmem:[#allocation2 + $0xe4] sm:$0xf] %vm110, %v598
  %624 = vst.msk [vmem:[#allocation2 + $0xf8] sm:$0xf] %vm110, %v599
  %625 = vst.msk [vmem:[#allocation2 + $0x10c] sm:$0xf] %vm110, %v600
  %626 = vst.msk [vmem:[#allocation2 + $0x120] sm:$0xf] %vm110, %v601
  %627 = vst.msk [vmem:[#allocation2 + $0x134] sm:$0xf] %vm110, %v602
  %628 = vst.msk [vmem:[#allocation2 + $0x148] sm:$0xf] %vm110, %v603
  %629 = vst.msk [vmem:[#allocation2 + $0x15c] sm:$0xf] %vm110, %v604
  %630 = vst.msk [vmem:[#allocation2 + $0x170] sm:$0xf] %vm110, %v605
  %631 = vst.msk [vmem:[#allocation2 + $0x184] sm:$0xf] %vm110, %v606
  %632 = vst.msk [vmem:[#allocation2 + $0x198] sm:$0xf] %vm110, %v607
  %633 = vst.msk [vmem:[#allocation2 + $0x1ac] sm:$0xf] %vm110, %v608
  %634 = vst.msk [vmem:[#allocation2 + $0x1c0] sm:$0xf] %vm110, %v609
  %635 = vst.msk [vmem:[#allocation2 + $0x1d4] sm:$0xf] %vm110, %v610
  %636 = vst.msk [vmem:[#allocation2 + $0x1e8] sm:$0xf] %vm110, %v611
  %v637 = vld [vmem:[%s0 + $0x11] sm:$0xff]
  %v638 = vld [vmem:[%s0 + $0x19] sm:$0xff]
  %v639 = vld [vmem:[%s0 + $0x21] sm:$0xff]
  %v640 = vld [vmem:[%s0 + $0x29] sm:$0xff]
  %v641 = vld [vmem:[%s0 + $0x31] sm:$0xff]
  %v642 = vld [vmem:[%s0 + $0x39] sm:$0xff]
  %v643 = vld [vmem:[%s0 + $0x41] sm:$0xff]
  %v644 = vld [vmem:[%s0 + $0x49] sm:$0xff]
  %v645 = vld [vmem:[%s0 + $0x51] sm:$0xff]
  %v646 = vld [vmem:[%s0 + $0x59] sm:$0xff]
  %v647 = vld [vmem:[%s0 + $0x61] sm:$0xff]
  %v648 = vld [vmem:[%s0 + $0x69] sm:$0xff]
  %v649 = vld [vmem:[%s0 + $0x71] sm:$0xff]
  %v650 = vld [vmem:[%s0 + $0x79] sm:$0xff]
  %v651 = vld [vmem:[%s0 + $0x81] sm:$0xff]
  %v652 = vld [vmem:[%s0 + $0x89] sm:$0xff]
  %v653 = vld [vmem:[%s0 + $0x91] sm:$0xff]
  %v654 = vld [vmem:[%s0 + $0x99] sm:$0xff]
  %v655 = vld [vmem:[%s0 + $0xa1] sm:$0xff]
  %v656 = vld [vmem:[%s0 + $0xa9] sm:$0xff]
  %v657 = vld [vmem:[%s0 + $0xb1] sm:$0xff]
  %v658 = vld [vmem:[%s0 + $0xb9] sm:$0xff]
  %v659 = vld [vmem:[%s0 + $0xc1] sm:$0xff]
  %v660 = vld [vmem:[%s0 + $0xc9] sm:$0xff]
  %v661 = vld [vmem:[%s0 + $0xd1] sm:$0xff]
  %v662 = vpack.c.bf16 %v637, %v637
  %v663 = vpack.c.bf16 %v638, %v638
  %v664 = vpack.c.bf16 %v639, %v639
  %v665 = vpack.c.bf16 %v640, %v640
  %v666 = vpack.c.bf16 %v641, %v641
  %v667 = vpack.c.bf16 %v642, %v642
  %v668 = vpack.c.bf16 %v643, %v643
  %v669 = vpack.c.bf16 %v644, %v644
  %v670 = vpack.c.bf16 %v645, %v645
  %v671 = vpack.c.bf16 %v646, %v646
  %v672 = vpack.c.bf16 %v647, %v647
  %v673 = vpack.c.bf16 %v648, %v648
  %v674 = vpack.c.bf16 %v649, %v649
  %v675 = vpack.c.bf16 %v650, %v650
  %v676 = vpack.c.bf16 %v651, %v651
  %v677 = vpack.c.bf16 %v652, %v652
  %v678 = vpack.c.bf16 %v653, %v653
  %v679 = vpack.c.bf16 %v654, %v654
  %v680 = vpack.c.bf16 %v655, %v655
  %v681 = vpack.c.bf16 %v656, %v656
  %v682 = vpack.c.bf16 %v657, %v657
  %v683 = vpack.c.bf16 %v658, %v658
  %v684 = vpack.c.bf16 %v659, %v659
  %v685 = vpack.c.bf16 %v660, %v660
  %v686 = vpack.c.bf16 %v661, %v661
  %712 = vrot.lane.b32.xlu0 %v662, 64
  %v713 = vpop.permute.xlu0 %712
  %714 = vrot.lane.b32.xlu0 %v663, 64
  %v715 = vpop.permute.xlu0 %714
  %716 = vrot.lane.b32.xlu0 %v664, 64
  %v717 = vpop.permute.xlu0 %716
  %718 = vrot.lane.b32.xlu0 %v665, 64
  %v719 = vpop.permute.xlu0 %718
  %720 = vrot.lane.b32.xlu0 %v666, 64
  %v721 = vpop.permute.xlu0 %720
  %722 = vrot.lane.b32.xlu0 %v667, 64
  %v723 = vpop.permute.xlu0 %722
  %724 = vrot.lane.b32.xlu0 %v668, 64
  %v725 = vpop.permute.xlu0 %724
  %726 = vrot.lane.b32.xlu0 %v669, 64
  %v727 = vpop.permute.xlu0 %726
  %728 = vrot.lane.b32.xlu0 %v670, 64
  %v729 = vpop.permute.xlu0 %728
  %730 = vrot.lane.b32.xlu0 %v671, 64
  %v731 = vpop.permute.xlu0 %730
  %732 = vrot.lane.b32.xlu0 %v672, 64
  %v733 = vpop.permute.xlu0 %732
  %734 = vrot.lane.b32.xlu0 %v673, 64
  %v735 = vpop.permute.xlu0 %734
  %736 = vrot.lane.b32.xlu0 %v674, 64
  %v737 = vpop.permute.xlu0 %736
  %738 = vrot.lane.b32.xlu0 %v675, 64
  %v739 = vpop.permute.xlu0 %738
  %740 = vrot.lane.b32.xlu0 %v676, 64
  %v741 = vpop.permute.xlu0 %740
  %742 = vrot.lane.b32.xlu0 %v677, 64
  %v743 = vpop.permute.xlu0 %742
  %744 = vrot.lane.b32.xlu0 %v678, 64
  %v745 = vpop.permute.xlu0 %744
  %746 = vrot.lane.b32.xlu0 %v679, 64
  %v747 = vpop.permute.xlu0 %746
  %748 = vrot.lane.b32.xlu0 %v680, 64
  %v749 = vpop.permute.xlu0 %748
  %750 = vrot.lane.b32.xlu0 %v681, 64
  %v751 = vpop.permute.xlu0 %750
  %752 = vrot.lane.b32.xlu0 %v682, 64
  %v753 = vpop.permute.xlu0 %752
  %754 = vrot.lane.b32.xlu0 %v683, 64
  %v755 = vpop.permute.xlu0 %754
  %756 = vrot.lane.b32.xlu0 %v684, 64
  %v757 = vpop.permute.xlu0 %756
  %758 = vrot.lane.b32.xlu0 %v685, 64
  %v759 = vpop.permute.xlu0 %758
  %760 = vrot.lane.b32.xlu0 %v686, 64
  %v761 = vpop.permute.xlu0 %760
  %787 = vst.msk [vmem:[#allocation2 + $0x8] sm:$0xf] %vm286, %v713
  %788 = vst.msk [vmem:[#allocation2 + $0x1c] sm:$0xf] %vm286, %v715
  %789 = vst.msk [vmem:[#allocation2 + $0x30] sm:$0xf] %vm286, %v717
  %790 = vst.msk [vmem:[#allocation2 + $0x44] sm:$0xf] %vm286, %v719
  %791 = vst.msk [vmem:[#allocation2 + $0x58] sm:$0xf] %vm286, %v721
  %792 = vst.msk [vmem:[#allocation2 + $0x6c] sm:$0xf] %vm286, %v723
  %793 = vst.msk [vmem:[#allocation2 + $0x80] sm:$0xf] %vm286, %v725
  %794 = vst.msk [vmem:[#allocation2 + $0x94] sm:$0xf] %vm286, %v727
  %795 = vst.msk [vmem:[#allocation2 + $0xa8] sm:$0xf] %vm286, %v729
  %796 = vst.msk [vmem:[#allocation2 + $0xbc] sm:$0xf] %vm286, %v731
  %797 = vst.msk [vmem:[#allocation2 + $0xd0] sm:$0xf] %vm286, %v733
  %798 = vst.msk [vmem:[#allocation2 + $0xe4] sm:$0xf] %vm286, %v735
  %799 = vst.msk [vmem:[#allocation2 + $0xf8] sm:$0xf] %vm286, %v737
  %800 = vst.msk [vmem:[#allocation2 + $0x10c] sm:$0xf] %vm286, %v739
  %801 = vst.msk [vmem:[#allocation2 + $0x120] sm:$0xf] %vm286, %v741
  %802 = vst.msk [vmem:[#allocation2 + $0x134] sm:$0xf] %vm286, %v743
  %803 = vst.msk [vmem:[#allocation2 + $0x148] sm:$0xf] %vm286, %v745
  %804 = vst.msk [vmem:[#allocation2 + $0x15c] sm:$0xf] %vm286, %v747
  %805 = vst.msk [vmem:[#allocation2 + $0x170] sm:$0xf] %vm286, %v749
  %806 = vst.msk [vmem:[#allocation2 + $0x184] sm:$0xf] %vm286, %v751
  %807 = vst.msk [vmem:[#allocation2 + $0x198] sm:$0xf] %vm286, %v753
  %808 = vst.msk [vmem:[#allocation2 + $0x1ac] sm:$0xf] %vm286, %v755
  %809 = vst.msk [vmem:[#allocation2 + $0x1c0] sm:$0xf] %vm286, %v757
  %810 = vst.msk [vmem:[#allocation2 + $0x1d4] sm:$0xf] %vm286, %v759
  %811 = vst.msk [vmem:[#allocation2 + $0x1e8] sm:$0xf] %vm286, %v761
  %v812 = vld [vmem:[%s0 + $0x19] sm:$0xff]
  %v813 = vld [vmem:[%s0 + $0x21] sm:$0xff]
  %v814 = vld [vmem:[%s0 + $0x29] sm:$0xff]
  %v815 = vld [vmem:[%s0 + $0x31] sm:$0xff]
  %v816 = vld [vmem:[%s0 + $0x39] sm:$0xff]
  %v817 = vld [vmem:[%s0 + $0x41] sm:$0xff]
  %v818 = vld [vmem:[%s0 + $0x49] sm:$0xff]
  %v819 = vld [vmem:[%s0 + $0x51] sm:$0xff]
  %v820 = vld [vmem:[%s0 + $0x59] sm:$0xff]
  %v821 = vld [vmem:[%s0 + $0x61] sm:$0xff]
  %v822 = vld [vmem:[%s0 + $0x69] sm:$0xff]
  %v823 = vld [vmem:[%s0 + $0x71] sm:$0xff]
  %v824 = vld [vmem:[%s0 + $0x79] sm:$0xff]
  %v825 = vld [vmem:[%s0 + $0x81] sm:$0xff]
  %v826 = vld [vmem:[%s0 + $0x89] sm:$0xff]
  %v827 = vld [vmem:[%s0 + $0x91] sm:$0xff]
  %v828 = vld [vmem:[%s0 + $0x99] sm:$0xff]
  %v829 = vld [vmem:[%s0 + $0xa1] sm:$0xff]
  %v830 = vld [vmem:[%s0 + $0xa9] sm:$0xff]
  %v831 = vld [vmem:[%s0 + $0xb1] sm:$0xff]
  %v832 = vld [vmem:[%s0 + $0xb9] sm:$0xff]
  %v833 = vld [vmem:[%s0 + $0xc1] sm:$0xff]
  %v834 = vld [vmem:[%s0 + $0xc9] sm:$0xff]
  %v835 = vld [vmem:[%s0 + $0xd1] sm:$0xff]
  %v836 = vld [vmem:[%s0 + $0xd9] sm:$0xff]
  %v837 = vpack.c.bf16 %v812, %v812
  %v838 = vpack.c.bf16 %v813, %v813
  %v839 = vpack.c.bf16 %v814, %v814
  %v840 = vpack.c.bf16 %v815, %v815
  %v841 = vpack.c.bf16 %v816, %v816
  %v842 = vpack.c.bf16 %v817, %v817
  %v843 = vpack.c.bf16 %v818, %v818
  %v844 = vpack.c.bf16 %v819, %v819
  %v845 = vpack.c.bf16 %v820, %v820
  %v846 = vpack.c.bf16 %v821, %v821
  %v847 = vpack.c.bf16 %v822, %v822
  %v848 = vpack.c.bf16 %v823, %v823
  %v849 = vpack.c.bf16 %v824, %v824
  %v850 = vpack.c.bf16 %v825, %v825
  %v851 = vpack.c.bf16 %v826, %v826
  %v852 = vpack.c.bf16 %v827, %v827
  %v853 = vpack.c.bf16 %v828, %v828
  %v854 = vpack.c.bf16 %v829, %v829
  %v855 = vpack.c.bf16 %v830, %v830
  %v856 = vpack.c.bf16 %v831, %v831
  %v857 = vpack.c.bf16 %v832, %v832
  %v858 = vpack.c.bf16 %v833, %v833
  %v859 = vpack.c.bf16 %v834, %v834
  %v860 = vpack.c.bf16 %v835, %v835
  %v861 = vpack.c.bf16 %v836, %v836
  %862 = vst.msk [vmem:[#allocation2 + $0xc] sm:$0xf] %vm110, %v837
  %863 = vst.msk [vmem:[#allocation2 + $0x20] sm:$0xf] %vm110, %v838
  %864 = vst.msk [vmem:[#allocation2 + $0x34] sm:$0xf] %vm110, %v839
  %865 = vst.msk [vmem:[#allocation2 + $0x48] sm:$0xf] %vm110, %v840
  %866 = vst.msk [vmem:[#allocation2 + $0x5c] sm:$0xf] %vm110, %v841
  %867 = vst.msk [vmem:[#allocation2 + $0x70] sm:$0xf] %vm110, %v842
  %868 = vst.msk [vmem:[#allocation2 + $0x84] sm:$0xf] %vm110, %v843
  %869 = vst.msk [vmem:[#allocation2 + $0x98] sm:$0xf] %vm110, %v844
  %870 = vst.msk [vmem:[#allocation2 + $0xac] sm:$0xf] %vm110, %v845
  %871 = vst.msk [vmem:[#allocation2 + $0xc0] sm:$0xf] %vm110, %v846
  %872 = vst.msk [vmem:[#allocation2 + $0xd4] sm:$0xf] %vm110, %v847
  %873 = vst.msk [vmem:[#allocation2 + $0xe8] sm:$0xf] %vm110, %v848
  %874 = vst.msk [vmem:[#allocation2 + $0xfc] sm:$0xf] %vm110, %v849
  %875 = vst.msk [vmem:[#allocation2 + $0x110] sm:$0xf] %vm110, %v850
  %876 = vst.msk [vmem:[#allocation2 + $0x124] sm:$0xf] %vm110, %v851
  %877 = vst.msk [vmem:[#allocation2 + $0x138] sm:$0xf] %vm110, %v852
  %878 = vst.msk [vmem:[#allocation2 + $0x14c] sm:$0xf] %vm110, %v853
  %879 = vst.msk [vmem:[#allocation2 + $0x160] sm:$0xf] %vm110, %v854
  %880 = vst.msk [vmem:[#allocation2 + $0x174] sm:$0xf] %vm110, %v855
  %881 = vst.msk [vmem:[#allocation2 + $0x188] sm:$0xf] %vm110, %v856
  %882 = vst.msk [vmem:[#allocation2 + $0x19c] sm:$0xf] %vm110, %v857
  %883 = vst.msk [vmem:[#allocation2 + $0x1b0] sm:$0xf] %vm110, %v858
  %884 = vst.msk [vmem:[#allocation2 + $0x1c4] sm:$0xf] %vm110, %v859
  %885 = vst.msk [vmem:[#allocation2 + $0x1d8] sm:$0xf] %vm110, %v860
  %886 = vst.msk [vmem:[#allocation2 + $0x1ec] sm:$0xf] %vm110, %v861
  %v887 = vld [vmem:[%s0 + $0x1a] sm:$0xff]
  %v888 = vld [vmem:[%s0 + $0x22] sm:$0xff]
  %v889 = vld [vmem:[%s0 + $0x2a] sm:$0xff]
  %v890 = vld [vmem:[%s0 + $0x32] sm:$0xff]
  %v891 = vld [vmem:[%s0 + $0x3a] sm:$0xff]
  %v892 = vld [vmem:[%s0 + $0x42] sm:$0xff]
  %v893 = vld [vmem:[%s0 + $0x4a] sm:$0xff]
  %v894 = vld [vmem:[%s0 + $0x52] sm:$0xff]
  %v895 = vld [vmem:[%s0 + $0x5a] sm:$0xff]
  %v896 = vld [vmem:[%s0 + $0x62] sm:$0xff]
  %v897 = vld [vmem:[%s0 + $0x6a] sm:$0xff]
  %v898 = vld [vmem:[%s0 + $0x72] sm:$0xff]
  %v899 = vld [vmem:[%s0 + $0x7a] sm:$0xff]
  %v900 = vld [vmem:[%s0 + $0x82] sm:$0xff]
  %v901 = vld [vmem:[%s0 + $0x8a] sm:$0xff]
  %v902 = vld [vmem:[%s0 + $0x92] sm:$0xff]
  %v903 = vld [vmem:[%s0 + $0x9a] sm:$0xff]
  %v904 = vld [vmem:[%s0 + $0xa2] sm:$0xff]
  %v905 = vld [vmem:[%s0 + $0xaa] sm:$0xff]
  %v906 = vld [vmem:[%s0 + $0xb2] sm:$0xff]
  %v907 = vld [vmem:[%s0 + $0xba] sm:$0xff]
  %v908 = vld [vmem:[%s0 + $0xc2] sm:$0xff]
  %v909 = vld [vmem:[%s0 + $0xca] sm:$0xff]
  %v910 = vld [vmem:[%s0 + $0xd2] sm:$0xff]
  %v911 = vld [vmem:[%s0 + $0xda] sm:$0xff]
  %v912 = vpack.c.bf16 %v887, %v887
  %v913 = vpack.c.bf16 %v888, %v888
  %v914 = vpack.c.bf16 %v889, %v889
  %v915 = vpack.c.bf16 %v890, %v890
  %v916 = vpack.c.bf16 %v891, %v891
  %v917 = vpack.c.bf16 %v892, %v892
  %v918 = vpack.c.bf16 %v893, %v893
  %v919 = vpack.c.bf16 %v894, %v894
  %v920 = vpack.c.bf16 %v895, %v895
  %v921 = vpack.c.bf16 %v896, %v896
  %v922 = vpack.c.bf16 %v897, %v897
  %v923 = vpack.c.bf16 %v898, %v898
  %v924 = vpack.c.bf16 %v899, %v899
  %v925 = vpack.c.bf16 %v900, %v900
  %v926 = vpack.c.bf16 %v901, %v901
  %v927 = vpack.c.bf16 %v902, %v902
  %v928 = vpack.c.bf16 %v903, %v903
  %v929 = vpack.c.bf16 %v904, %v904
  %v930 = vpack.c.bf16 %v905, %v905
  %v931 = vpack.c.bf16 %v906, %v906
  %v932 = vpack.c.bf16 %v907, %v907
  %v933 = vpack.c.bf16 %v908, %v908
  %v934 = vpack.c.bf16 %v909, %v909
  %v935 = vpack.c.bf16 %v910, %v910
  %v936 = vpack.c.bf16 %v911, %v911
  %962 = vrot.lane.b32.xlu0 %v912, 64
  %v963 = vpop.permute.xlu0 %962
  %964 = vrot.lane.b32.xlu0 %v913, 64
  %v965 = vpop.permute.xlu0 %964
  %966 = vrot.lane.b32.xlu0 %v914, 64
  %v967 = vpop.permute.xlu0 %966
  %968 = vrot.lane.b32.xlu0 %v915, 64
  %v969 = vpop.permute.xlu0 %968
  %970 = vrot.lane.b32.xlu0 %v916, 64
  %v971 = vpop.permute.xlu0 %970
  %972 = vrot.lane.b32.xlu0 %v917, 64
  %v973 = vpop.permute.xlu0 %972
  %974 = vrot.lane.b32.xlu0 %v918, 64
  %v975 = vpop.permute.xlu0 %974
  %976 = vrot.lane.b32.xlu0 %v919, 64
  %v977 = vpop.permute.xlu0 %976
  %978 = vrot.lane.b32.xlu0 %v920, 64
  %v979 = vpop.permute.xlu0 %978
  %980 = vrot.lane.b32.xlu0 %v921, 64
  %v981 = vpop.permute.xlu0 %980
  %982 = vrot.lane.b32.xlu0 %v922, 64
  %v983 = vpop.permute.xlu0 %982
  %984 = vrot.lane.b32.xlu0 %v923, 64
  %v985 = vpop.permute.xlu0 %984
  %986 = vrot.lane.b32.xlu0 %v924, 64
  %v987 = vpop.permute.xlu0 %986
  %988 = vrot.lane.b32.xlu0 %v925, 64
  %v989 = vpop.permute.xlu0 %988
  %990 = vrot.lane.b32.xlu0 %v926, 64
  %v991 = vpop.permute.xlu0 %990
  %992 = vrot.lane.b32.xlu0 %v927, 64
  %v993 = vpop.permute.xlu0 %992
  %994 = vrot.lane.b32.xlu0 %v928, 64
  %v995 = vpop.permute.xlu0 %994
  %996 = vrot.lane.b32.xlu0 %v929, 64
  %v997 = vpop.permute.xlu0 %996
  %998 = vrot.lane.b32.xlu0 %v930, 64
  %v999 = vpop.permute.xlu0 %998
  %1000 = vrot.lane.b32.xlu0 %v931, 64
  %v1001 = vpop.permute.xlu0 %1000
  %1002 = vrot.lane.b32.xlu0 %v932, 64
  %v1003 = vpop.permute.xlu0 %1002
  %1004 = vrot.lane.b32.xlu0 %v933, 64
  %v1005 = vpop.permute.xlu0 %1004
  %1006 = vrot.lane.b32.xlu0 %v934, 64
  %v1007 = vpop.permute.xlu0 %1006
  %1008 = vrot.lane.b32.xlu0 %v935, 64
  %v1009 = vpop.permute.xlu0 %1008
  %1010 = vrot.lane.b32.xlu0 %v936, 64
  %v1011 = vpop.permute.xlu0 %1010
  %1037 = vst.msk [vmem:[#allocation2 + $0xc] sm:$0xf] %vm286, %v963
  %1038 = vst.msk [vmem:[#allocation2 + $0x20] sm:$0xf] %vm286, %v965
  %1039 = vst.msk [vmem:[#allocation2 + $0x34] sm:$0xf] %vm286, %v967
  %1040 = vst.msk [vmem:[#allocation2 + $0x48] sm:$0xf] %vm286, %v969
  %1041 = vst.msk [vmem:[#allocation2 + $0x5c] sm:$0xf] %vm286, %v971
  %1042 = vst.msk [vmem:[#allocation2 + $0x70] sm:$0xf] %vm286, %v973
  %1043 = vst.msk [vmem:[#allocation2 + $0x84] sm:$0xf] %vm286, %v975
  %1044 = vst.msk [vmem:[#allocation2 + $0x98] sm:$0xf] %vm286, %v977
  %1045 = vst.msk [vmem:[#allocation2 + $0xac] sm:$0xf] %vm286, %v979
  %1046 = vst.msk [vmem:[#allocation2 + $0xc0] sm:$0xf] %vm286, %v981
  %1047 = vst.msk [vmem:[#allocation2 + $0xd4] sm:$0xf] %vm286, %v983
  %1048 = vst.msk [vmem:[#allocation2 + $0xe8] sm:$0xf] %vm286, %v985
  %1049 = vst.msk [vmem:[#allocation2 + $0xfc] sm:$0xf] %vm286, %v987
  %1050 = vst.msk [vmem:[#allocation2 + $0x110] sm:$0xf] %vm286, %v989
  %1051 = vst.msk [vmem:[#allocation2 + $0x124] sm:$0xf] %vm286, %v991
  %1052 = vst.msk [vmem:[#allocation2 + $0x138] sm:$0xf] %vm286, %v993
  %1053 = vst.msk [vmem:[#allocation2 + $0x14c] sm:$0xf] %vm286, %v995
  %1054 = vst.msk [vmem:[#allocation2 + $0x160] sm:$0xf] %vm286, %v997
  %1055 = vst.msk [vmem:[#allocation2 + $0x174] sm:$0xf] %vm286, %v999
  %1056 = vst.msk [vmem:[#allocation2 + $0x188] sm:$0xf] %vm286, %v1001
  %1057 = vst.msk [vmem:[#allocation2 + $0x19c] sm:$0xf] %vm286, %v1003
  %1058 = vst.msk [vmem:[#allocation2 + $0x1b0] sm:$0xf] %vm286, %v1005
  %1059 = vst.msk [vmem:[#allocation2 + $0x1c4] sm:$0xf] %vm286, %v1007
  %1060 = vst.msk [vmem:[#allocation2 + $0x1d8] sm:$0xf] %vm286, %v1009
  %1061 = vst.msk [vmem:[#allocation2 + $0x1ec] sm:$0xf] %vm286, %v1011
  %v1062 = vld [vmem:[%s0 + $0x1b] sm:$0xff]
  %v1063 = vld [vmem:[%s0 + $0x23] sm:$0xff]
  %v1064 = vld [vmem:[%s0 + $0x2b] sm:$0xff]
  %v1065 = vld [vmem:[%s0 + $0x33] sm:$0xff]
  %v1066 = vld [vmem:[%s0 + $0x3b] sm:$0xff]
  %v1067 = vld [vmem:[%s0 + $0x43] sm:$0xff]
  %v1068 = vld [vmem:[%s0 + $0x4b] sm:$0xff]
  %v1069 = vld [vmem:[%s0 + $0x53] sm:$0xff]
  %v1070 = vld [vmem:[%s0 + $0x5b] sm:$0xff]
  %v1071 = vld [vmem:[%s0 + $0x63] sm:$0xff]
  %v1072 = vld [vmem:[%s0 + $0x6b] sm:$0xff]
  %v1073 = vld [vmem:[%s0 + $0x73] sm:$0xff]
  %v1074 = vld [vmem:[%s0 + $0x7b] sm:$0xff]
  %v1075 = vld [vmem:[%s0 + $0x83] sm:$0xff]
  %v1076 = vld [vmem:[%s0 + $0x8b] sm:$0xff]
  %v1077 = vld [vmem:[%s0 + $0x93] sm:$0xff]
  %v1078 = vld [vmem:[%s0 + $0x9b] sm:$0xff]
  %v1079 = vld [vmem:[%s0 + $0xa3] sm:$0xff]
  %v1080 = vld [vmem:[%s0 + $0xab] sm:$0xff]
  %v1081 = vld [vmem:[%s0 + $0xb3] sm:$0xff]
  %v1082 = vld [vmem:[%s0 + $0xbb] sm:$0xff]
  %v1083 = vld [vmem:[%s0 + $0xc3] sm:$0xff]
  %v1084 = vld [vmem:[%s0 + $0xcb] sm:$0xff]
  %v1085 = vld [vmem:[%s0 + $0xd3] sm:$0xff]
  %v1086 = vld [vmem:[%s0 + $0xdb] sm:$0xff]
  %v1087 = vpack.c.bf16 %v1062, %v1062
  %v1088 = vpack.c.bf16 %v1063, %v1063
  %v1089 = vpack.c.bf16 %v1064, %v1064
  %v1090 = vpack.c.bf16 %v1065, %v1065
  %v1091 = vpack.c.bf16 %v1066, %v1066
  %v1092 = vpack.c.bf16 %v1067, %v1067
  %v1093 = vpack.c.bf16 %v1068, %v1068
  %v1094 = vpack.c.bf16 %v1069, %v1069
  %v1095 = vpack.c.bf16 %v1070, %v1070
  %v1096 = vpack.c.bf16 %v1071, %v1071
  %v1097 = vpack.c.bf16 %v1072, %v1072
  %v1098 = vpack.c.bf16 %v1073, %v1073
  %v1099 = vpack.c.bf16 %v1074, %v1074
  %v1100 = vpack.c.bf16 %v1075, %v1075
  %v1101 = vpack.c.bf16 %v1076, %v1076
  %v1102 = vpack.c.bf16 %v1077, %v1077
  %v1103 = vpack.c.bf16 %v1078, %v1078
  %v1104 = vpack.c.bf16 %v1079, %v1079
  %v1105 = vpack.c.bf16 %v1080, %v1080
  %v1106 = vpack.c.bf16 %v1081, %v1081
  %v1107 = vpack.c.bf16 %v1082, %v1082
  %v1108 = vpack.c.bf16 %v1083, %v1083
  %v1109 = vpack.c.bf16 %v1084, %v1084
  %v1110 = vpack.c.bf16 %v1085, %v1085
  %v1111 = vpack.c.bf16 %v1086, %v1086
  %1112 = vst.msk [vmem:[#allocation2 + $0x10] sm:$0xf] %vm110, %v1087
  %1113 = vst.msk [vmem:[#allocation2 + $0x24] sm:$0xf] %vm110, %v1088
  %1114 = vst.msk [vmem:[#allocation2 + $0x38] sm:$0xf] %vm110, %v1089
  %1115 = vst.msk [vmem:[#allocation2 + $0x4c] sm:$0xf] %vm110, %v1090
  %1116 = vst.msk [vmem:[#allocation2 + $0x60] sm:$0xf] %vm110, %v1091
  %1117 = vst.msk [vmem:[#allocation2 + $0x74] sm:$0xf] %vm110, %v1092
  %1118 = vst.msk [vmem:[#allocation2 + $0x88] sm:$0xf] %vm110, %v1093
  %1119 = vst.msk [vmem:[#allocation2 + $0x9c] sm:$0xf] %vm110, %v1094
  %1120 = vst.msk [vmem:[#allocation2 + $0xb0] sm:$0xf] %vm110, %v1095
  %1121 = vst.msk [vmem:[#allocation2 + $0xc4] sm:$0xf] %vm110, %v1096
  %1122 = vst.msk [vmem:[#allocation2 + $0xd8] sm:$0xf] %vm110, %v1097
  %1123 = vst.msk [vmem:[#allocation2 + $0xec] sm:$0xf] %vm110, %v1098
  %1124 = vst.msk [vmem:[#allocation2 + $0x100] sm:$0xf] %vm110, %v1099
  %1125 = vst.msk [vmem:[#allocation2 + $0x114] sm:$0xf] %vm110, %v1100
  %1126 = vst.msk [vmem:[#allocation2 + $0x128] sm:$0xf] %vm110, %v1101
  %1127 = vst.msk [vmem:[#allocation2 + $0x13c] sm:$0xf] %vm110, %v1102
  %1128 = vst.msk [vmem:[#allocation2 + $0x150] sm:$0xf] %vm110, %v1103
  %1129 = vst.msk [vmem:[#allocation2 + $0x164] sm:$0xf] %vm110, %v1104
  %1130 = vst.msk [vmem:[#allocation2 + $0x178] sm:$0xf] %vm110, %v1105
  %1131 = vst.msk [vmem:[#allocation2 + $0x18c] sm:$0xf] %vm110, %v1106
  %1132 = vst.msk [vmem:[#allocation2 + $0x1a0] sm:$0xf] %vm110, %v1107
  %1133 = vst.msk [vmem:[#allocation2 + $0x1b4] sm:$0xf] %vm110, %v1108
  %1134 = vst.msk [vmem:[#allocation2 + $0x1c8] sm:$0xf] %vm110, %v1109
  %1135 = vst.msk [vmem:[#allocation2 + $0x1dc] sm:$0xf] %vm110, %v1110
  %1136 = vst.msk [vmem:[#allocation2 + $0x1f0] sm:$0xf] %vm110, %v1111
  %v1137 = vld [vmem:[#allocation2] sm:$0xff]
  %v1138 = vld [vmem:[#allocation2 + $0x8] sm:$0xff]
  %v1139 = vld [vmem:[#allocation2 + $0x10] sm:$0xf]
  %v1140 = vld [vmem:[#allocation2 + $0x14] sm:$0xff]
  %v1141 = vld [vmem:[#allocation2 + $0x1c] sm:$0xff]
  %v1142 = vld [vmem:[#allocation2 + $0x24] sm:$0xf]
  %v1143 = vld [vmem:[#allocation2 + $0x28] sm:$0xff]
  %v1144 = vld [vmem:[#allocation2 + $0x30] sm:$0xff]
  %v1145 = vld [vmem:[#allocation2 + $0x38] sm:$0xf]
  %v1146 = vld [vmem:[#allocation2 + $0x3c] sm:$0xff]
  %v1147 = vld [vmem:[#allocation2 + $0x44] sm:$0xff]
  %v1148 = vld [vmem:[#allocation2 + $0x4c] sm:$0xf]
  %v1149 = vld [vmem:[#allocation2 + $0x50] sm:$0xff]
  %v1150 = vld [vmem:[#allocation2 + $0x58] sm:$0xff]
  %v1151 = vld [vmem:[#allocation2 + $0x60] sm:$0xf]
  %v1152 = vld [vmem:[#allocation2 + $0x64] sm:$0xff]
  %v1153 = vld [vmem:[#allocation2 + $0x6c] sm:$0xff]
  %v1154 = vld [vmem:[#allocation2 + $0x74] sm:$0xf]
  %v1155 = vld [vmem:[#allocation2 + $0x78] sm:$0xff]
  %v1156 = vld [vmem:[#allocation2 + $0x80] sm:$0xff]
  %v1157 = vld [vmem:[#allocation2 + $0x88] sm:$0xf]
  %v1158 = vld [vmem:[#allocation2 + $0x8c] sm:$0xff]
  %v1159 = vld [vmem:[#allocation2 + $0x94] sm:$0xff]
  %v1160 = vld [vmem:[#allocation2 + $0x9c] sm:$0xf]
  %v1161 = vld [vmem:[#allocation2 + $0xa0] sm:$0xff]
  %v1162 = vld [vmem:[#allocation2 + $0xa8] sm:$0xff]
  %v1163 = vld [vmem:[#allocation2 + $0xb0] sm:$0xf]
  %v1164 = vld [vmem:[#allocation2 + $0xb4] sm:$0xff]
  %v1165 = vld [vmem:[#allocation2 + $0xbc] sm:$0xff]
  %v1166 = vld [vmem:[#allocation2 + $0xc4] sm:$0xf]
  %v1167 = vld [vmem:[#allocation2 + $0xc8] sm:$0xff]
  %v1168 = vld [vmem:[#allocation2 + $0xd0] sm:$0xff]
  %v1169 = vld [vmem:[#allocation2 + $0xd8] sm:$0xf]
  %v1170 = vld [vmem:[#allocation2 + $0xdc] sm:$0xff]
  %v1171 = vld [vmem:[#allocation2 + $0xe4] sm:$0xff]
  %v1172 = vld [vmem:[#allocation2 + $0xec] sm:$0xf]
  %v1173 = vld [vmem:[#allocation2 + $0xf0] sm:$0xff]
  %v1174 = vld [vmem:[#allocation2 + $0xf8] sm:$0xff]
  %v1175 = vld [vmem:[#allocation2 + $0x100] sm:$0xf]
  %v1176 = vld [vmem:[#allocation2 + $0x104] sm:$0xff]
  %v1177 = vld [vmem:[#allocation2 + $0x10c] sm:$0xff]
  %v1178 = vld [vmem:[#allocation2 + $0x114] sm:$0xf]
  %v1179 = vld [vmem:[#allocation2 + $0x118] sm:$0xff]
  %v1180 = vld [vmem:[#allocation2 + $0x120] sm:$0xff]
  %v1181 = vld [vmem:[#allocation2 + $0x128] sm:$0xf]
  %v1182 = vld [vmem:[#allocation2 + $0x12c] sm:$0xff]
  %v1183 = vld [vmem:[#allocation2 + $0x134] sm:$0xff]
  %v1184 = vld [vmem:[#allocation2 + $0x13c] sm:$0xf]
  %v1185 = vld [vmem:[#allocation2 + $0x140] sm:$0xff]
  %v1186 = vld [vmem:[#allocation2 + $0x148] sm:$0xff]
  %v1187 = vld [vmem:[#allocation2 + $0x150] sm:$0xf]
  %v1188 = vld [vmem:[#allocation2 + $0x154] sm:$0xff]
  %v1189 = vld [vmem:[#allocation2 + $0x15c] sm:$0xff]
  %v1190 = vld [vmem:[#allocation2 + $0x164] sm:$0xf]
  %v1191 = vld [vmem:[#allocation2 + $0x168] sm:$0xff]
  %v1192 = vld [vmem:[#allocation2 + $0x170] sm:$0xff]
  %v1193 = vld [vmem:[#allocation2 + $0x178] sm:$0xf]
  %v1194 = vld [vmem:[#allocation2 + $0x17c] sm:$0xff]
  %v1195 = vld [vmem:[#allocation2 + $0x184] sm:$0xff]
  %v1196 = vld [vmem:[#allocation2 + $0x18c] sm:$0xf]
  %v1197 = vld [vmem:[#allocation2 + $0x190] sm:$0xff]
  %v1198 = vld [vmem:[#allocation2 + $0x198] sm:$0xff]
  %v1199 = vld [vmem:[#allocation2 + $0x1a0] sm:$0xf]
  %v1200 = vld [vmem:[#allocation2 + $0x1a4] sm:$0xff]
  %v1201 = vld [vmem:[#allocation2 + $0x1ac] sm:$0xff]
  %v1202 = vld [vmem:[#allocation2 + $0x1b4] sm:$0xf]
  %v1203 = vld [vmem:[#allocation2 + $0x1b8] sm:$0xff]
  %v1204 = vld [vmem:[#allocation2 + $0x1c0] sm:$0xff]
  %v1205 = vld [vmem:[#allocation2 + $0x1c8] sm:$0xf]
  %v1206 = vld [vmem:[#allocation2 + $0x1cc] sm:$0xff]
  %v1207 = vld [vmem:[#allocation2 + $0x1d4] sm:$0xff]
  %v1208 = vld [vmem:[#allocation2 + $0x1dc] sm:$0xf]
  %v1209 = vld [vmem:[#allocation2 + $0x1e0] sm:$0xff]
  %v1210 = vld [vmem:[#allocation2 + $0x1e8] sm:$0xff]
  %v1211 = vld [vmem:[#allocation2 + $0x1f0] sm:$0xf]
  %v1212 = vld [vmem:[%s2] sm:$0xf]
  %v1213 = vld [vmem:[%s2 + $0x4] sm:$0xf]
  %v1214 = vld [vmem:[%s2 + $0x8] sm:$0xf]
  %v1215 = vld [vmem:[%s2 + $0xc] sm:$0xf]
  %v1216 = vld [vmem:[%s2 + $0x10] sm:$0xf]
  %v1217 = vld [vmem:[%s2 + $0x14] sm:$0xf]
  %v1218 = vld [vmem:[%s2 + $0x18] sm:$0xf]
  %v1219 = vld [vmem:[%s2 + $0x1c] sm:$0xf]
  %v1220 = vld [vmem:[%s2 + $0x20] sm:$0xf]
  %v1221 = vld [vmem:[%s2 + $0x24] sm:$0xf]
  %v1222 = vld [vmem:[%s2 + $0x28] sm:$0xf]
  %v1223 = vld [vmem:[%s2 + $0x2c] sm:$0xf]
  %v1224 = vld [vmem:[%s2 + $0x30] sm:$0xf]
  %v1225 = vld [vmem:[%s2 + $0x34] sm:$0xf]
  %v1226 = vld [vmem:[%s2 + $0x38] sm:$0xf]
  %v1227 = vld [vmem:[%s2 + $0x3c] sm:$0xf]
  %v1228 = vld [vmem:[%s2 + $0x40] sm:$0xf]
  %v1229 = vld [vmem:[%s2 + $0x44] sm:$0xf]
  %v1230 = vld [vmem:[%s2 + $0x48] sm:$0xf]
  %v1231 = vld [vmem:[%s2 + $0x4c] sm:$0xf]
  %v1232 = vld [vmem:[%s2 + $0x50] sm:$0xf]
  %v1233 = vld [vmem:[%s2 + $0x54] sm:$0xf]
  %v1234 = vld [vmem:[%s2 + $0x58] sm:$0xf]
  %v1235 = vld [vmem:[%s2 + $0x5c] sm:$0xf]
  %v1236 = vld [vmem:[%s2 + $0x60] sm:$0xf]
  %v1237 = vld [vmem:[%s2 + $0x64] sm:$0xf]
  %v1238 = vld [vmem:[%s2 + $0x68] sm:$0xf]
  %v1239 = vld [vmem:[%s2 + $0x6c] sm:$0xf]
  %v1240 = vld [vmem:[%s2 + $0x70] sm:$0xf]
  %v1241 = vld [vmem:[%s2 + $0x74] sm:$0xf]
  %v1242 = vld [vmem:[%s2 + $0x78] sm:$0xf]
  %v1243 = vld [vmem:[%s2 + $0x7c] sm:$0xf]
  %v1244 = vld [vmem:[%s2 + $0x80] sm:$0xf]
  %v1245 = vld [vmem:[%s2 + $0x84] sm:$0xf]
  %v1246 = vld [vmem:[%s2 + $0x88] sm:$0xf]
  %v1247 = vld [vmem:[%s2 + $0x8c] sm:$0xf]
  %v1248 = vld [vmem:[%s2 + $0x90] sm:$0xf]
  %v1249 = vld [vmem:[%s2 + $0x94] sm:$0xf]
  %v1250 = vld [vmem:[%s2 + $0x98] sm:$0xf]
  %v1251 = vld [vmem:[%s2 + $0x9c] sm:$0xf]
  %v1252 = vld [vmem:[%s2 + $0xa0] sm:$0xf]
  %v1253 = vld [vmem:[%s2 + $0xa4] sm:$0xf]
  %v1254 = vld [vmem:[%s2 + $0xa8] sm:$0xf]
  %v1255 = vld [vmem:[%s2 + $0xac] sm:$0xf]
  %v1256 = vld [vmem:[%s2 + $0xb0] sm:$0xf]
  %v1257 = vld [vmem:[%s2 + $0xb4] sm:$0xf]
  %v1258 = vld [vmem:[%s2 + $0xb8] sm:$0xf]
  %v1259 = vld [vmem:[%s2 + $0xbc] sm:$0xf]
  %v1260 = vld [vmem:[%s2 + $0xc0] sm:$0xf]
  %v1261 = vld [vmem:[%s2 + $0xc4] sm:$0xf]
  %v1262 = vld [vmem:[%s2 + $0xc8] sm:$0xf]
  %v1263 = vld [vmem:[%s2 + $0xcc] sm:$0xf]
  %v1264 = vld [vmem:[%s2 + $0xd0] sm:$0xf]
  %v1265 = vld [vmem:[%s2 + $0xd4] sm:$0xf]
  %v1266 = vld [vmem:[%s2 + $0xd8] sm:$0xf]
  %v1267 = vld [vmem:[%s2 + $0xdc] sm:$0xf]
  %v1268 = vld [vmem:[%s2 + $0xe0] sm:$0xf]
  %v1269 = vld [vmem:[%s2 + $0xe4] sm:$0xf]
  %v1270 = vld [vmem:[%s2 + $0xe8] sm:$0xf]
  %v1271 = vld [vmem:[%s2 + $0xec] sm:$0xf]
  %v1272 = vld [vmem:[%s2 + $0xf0] sm:$0xf]
  %v1273 = vld [vmem:[%s2 + $0xf4] sm:$0xf]
  %v1274 = vld [vmem:[%s2 + $0xf8] sm:$0xf]
  %v1275 = vld [vmem:[%s2 + $0xfc] sm:$0xf]
  %v1276 = vld [vmem:[%s2 + $0x100] sm:$0xf]
  %v1277 = vld [vmem:[%s2 + $0x104] sm:$0xf]
  %v1278 = vld [vmem:[%s2 + $0x108] sm:$0xf]
  %v1279 = vld [vmem:[%s2 + $0x10c] sm:$0xf]
  %v1280 = vld [vmem:[%s2 + $0x110] sm:$0xf]
  %v1281 = vld [vmem:[%s2 + $0x114] sm:$0xf]
  %v1282 = vld [vmem:[%s2 + $0x118] sm:$0xf]
  %v1283 = vld [vmem:[%s2 + $0x11c] sm:$0xf]
  %v1359 = vunpack.c.l.b16 %v1137
  %v1360 = vunpack.c.h.b16 %v1137
  %v1361 = vunpack.c.l.b16 %v1138
  %v1362 = vunpack.c.h.b16 %v1138
  %v1363 = vunpack.c.l.b16 %v1139
  %v1364 = vunpack.c.l.b16 %v1140
  %v1365 = vunpack.c.h.b16 %v1140
  %v1366 = vunpack.c.l.b16 %v1141
  %v1367 = vunpack.c.h.b16 %v1141
  %v1368 = vunpack.c.l.b16 %v1142
  %v1369 = vunpack.c.l.b16 %v1143
  %v1370 = vunpack.c.h.b16 %v1143
  %v1371 = vunpack.c.l.b16 %v1144
  %v1372 = vunpack.c.h.b16 %v1144
  %v1373 = vunpack.c.l.b16 %v1145
  %v1374 = vunpack.c.l.b16 %v1146
  %v1375 = vunpack.c.h.b16 %v1146
  %v1376 = vunpack.c.l.b16 %v1147
  %v1377 = vunpack.c.h.b16 %v1147
  %v1378 = vunpack.c.l.b16 %v1148
  %v1379 = vunpack.c.l.b16 %v1149
  %v1380 = vunpack.c.h.b16 %v1149
  %v1381 = vunpack.c.l.b16 %v1150
  %v1382 = vunpack.c.h.b16 %v1150
  %v1383 = vunpack.c.l.b16 %v1151
  %v1384 = vunpack.c.l.b16 %v1152
  %v1385 = vunpack.c.h.b16 %v1152
  %v1386 = vunpack.c.l.b16 %v1153
  %v1387 = vunpack.c.h.b16 %v1153
  %v1388 = vunpack.c.l.b16 %v1154
  %v1389 = vunpack.c.l.b16 %v1155
  %v1390 = vunpack.c.h.b16 %v1155
  %v1391 = vunpack.c.l.b16 %v1156
  %v1392 = vunpack.c.h.b16 %v1156
  %v1393 = vunpack.c.l.b16 %v1157
  %v1394 = vunpack.c.l.b16 %v1158
  %v1395 = vunpack.c.h.b16 %v1158
  %v1396 = vunpack.c.l.b16 %v1159
  %v1397 = vunpack.c.h.b16 %v1159
  %v1398 = vunpack.c.l.b16 %v1160
  %v1399 = vunpack.c.l.b16 %v1161
  %v1400 = vunpack.c.h.b16 %v1161
  %v1401 = vunpack.c.l.b16 %v1162
  %v1402 = vunpack.c.h.b16 %v1162
  %v1403 = vunpack.c.l.b16 %v1163
  %v1404 = vunpack.c.l.b16 %v1164
  %v1405 = vunpack.c.h.b16 %v1164
  %v1406 = vunpack.c.l.b16 %v1165
  %v1407 = vunpack.c.h.b16 %v1165
  %v1408 = vunpack.c.l.b16 %v1166
  %v1409 = vunpack.c.l.b16 %v1167
  %v1410 = vunpack.c.h.b16 %v1167
  %v1411 = vunpack.c.l.b16 %v1168
  %v1412 = vunpack.c.h.b16 %v1168
  %v1413 = vunpack.c.l.b16 %v1169
  %v1414 = vunpack.c.l.b16 %v1170
  %v1415 = vunpack.c.h.b16 %v1170
  %v1416 = vunpack.c.l.b16 %v1171
  %v1417 = vunpack.c.h.b16 %v1171
  %v1418 = vunpack.c.l.b16 %v1172
  %v1419 = vunpack.c.l.b16 %v1173
  %v1420 = vunpack.c.h.b16 %v1173
  %v1421 = vunpack.c.l.b16 %v1174
  %v1422 = vunpack.c.h.b16 %v1174
  %v1423 = vunpack.c.l.b16 %v1175
  %v1424 = vunpack.c.l.b16 %v1176
  %v1425 = vunpack.c.h.b16 %v1176
  %v1426 = vunpack.c.l.b16 %v1177
  %v1427 = vunpack.c.h.b16 %v1177
  %v1428 = vunpack.c.l.b16 %v1178
  %v1429 = vunpack.c.l.b16 %v1179
  %v1430 = vunpack.c.h.b16 %v1179
  %v1431 = vunpack.c.l.b16 %v1180
  %v1432 = vunpack.c.h.b16 %v1180
  %v1433 = vunpack.c.l.b16 %v1181
  %v1434 = vunpack.c.l.b16 %v1182
  %v1435 = vunpack.c.h.b16 %v1182
  %v1436 = vunpack.c.l.b16 %v1183
  %v1437 = vunpack.c.h.b16 %v1183
  %v1438 = vunpack.c.l.b16 %v1184
  %v1439 = vunpack.c.l.b16 %v1185
  %v1440 = vunpack.c.h.b16 %v1185
  %v1441 = vunpack.c.l.b16 %v1186
  %v1442 = vunpack.c.h.b16 %v1186
  %v1443 = vunpack.c.l.b16 %v1187
  %v1444 = vunpack.c.l.b16 %v1188
  %v1445 = vunpack.c.h.b16 %v1188
  %v1446 = vunpack.c.l.b16 %v1189
  %v1447 = vunpack.c.h.b16 %v1189
  %v1448 = vunpack.c.l.b16 %v1190
  %v1449 = vunpack.c.l.b16 %v1191
  %v1450 = vunpack.c.h.b16 %v1191
  %v1451 = vunpack.c.l.b16 %v1192
  %v1452 = vunpack.c.h.b16 %v1192
  %v1453 = vunpack.c.l.b16 %v1193
  %v1454 = vunpack.c.l.b16 %v1194
  %v1455 = vunpack.c.h.b16 %v1194
  %v1456 = vunpack.c.l.b16 %v1195
  %v1457 = vunpack.c.h.b16 %v1195
  %v1458 = vunpack.c.l.b16 %v1196
  %v1459 = vunpack.c.l.b16 %v1197
  %v1460 = vunpack.c.h.b16 %v1197
  %v1461 = vunpack.c.l.b16 %v1198
  %v1462 = vunpack.c.h.b16 %v1198
  %v1463 = vunpack.c.l.b16 %v1199
  %v1464 = vunpack.c.l.b16 %v1200
  %v1465 = vunpack.c.h.b16 %v1200
  %v1466 = vunpack.c.l.b16 %v1201
  %v1467 = vunpack.c.h.b16 %v1201
  %v1468 = vunpack.c.l.b16 %v1202
  %v1469 = vunpack.c.l.b16 %v1203
  %v1470 = vunpack.c.h.b16 %v1203
  %v1471 = vunpack.c.l.b16 %v1204
  %v1472 = vunpack.c.h.b16 %v1204
  %v1473 = vunpack.c.l.b16 %v1205
  %v1474 = vunpack.c.l.b16 %v1206
  %v1475 = vunpack.c.h.b16 %v1206
  %v1476 = vunpack.c.l.b16 %v1207
  %v1477 = vunpack.c.h.b16 %v1207
  %v1478 = vunpack.c.l.b16 %v1208
  %v1479 = vunpack.c.l.b16 %v1209
  %v1480 = vunpack.c.h.b16 %v1209
  %v1481 = vunpack.c.l.b16 %v1210
  %v1482 = vunpack.c.h.b16 %v1210
  %v1483 = vunpack.c.l.b16 %v1211
  %v1484 = vpack.c.b16 %v1364, %v1359
  %v1485 = vpack.c.b16 %v1365, %v1360
  %v1486 = vpack.c.b16 %v1366, %v1361
  %v1487 = vpack.c.b16 %v1367, %v1362
  %v1488 = vpack.c.b16 %v1368, %v1363
  %v1489 = vpack.c.b16 %v1374, %v1369
  %v1490 = vpack.c.b16 %v1375, %v1370
  %v1491 = vpack.c.b16 %v1376, %v1371
  %v1492 = vpack.c.b16 %v1377, %v1372
  %v1493 = vpack.c.b16 %v1378, %v1373
  %v1494 = vpack.c.b16 %v1384, %v1379
  %v1495 = vpack.c.b16 %v1385, %v1380
  %v1496 = vpack.c.b16 %v1386, %v1381
  %v1497 = vpack.c.b16 %v1387, %v1382
  %v1498 = vpack.c.b16 %v1388, %v1383
  %v1499 = vpack.c.b16 %v1394, %v1389
  %v1500 = vpack.c.b16 %v1395, %v1390
  %v1501 = vpack.c.b16 %v1396, %v1391
  %v1502 = vpack.c.b16 %v1397, %v1392
  %v1503 = vpack.c.b16 %v1398, %v1393
  %v1504 = vpack.c.b16 %v1404, %v1399
  %v1505 = vpack.c.b16 %v1405, %v1400
  %v1506 = vpack.c.b16 %v1406, %v1401
  %v1507 = vpack.c.b16 %v1407, %v1402
  %v1508 = vpack.c.b16 %v1408, %v1403
  %v1509 = vpack.c.b16 %v1414, %v1409
  %v1510 = vpack.c.b16 %v1415, %v1410
  %v1511 = vpack.c.b16 %v1416, %v1411
  %v1512 = vpack.c.b16 %v1417, %v1412
  %v1513 = vpack.c.b16 %v1418, %v1413
  %v1514 = vpack.c.b16 %v1424, %v1419
  %v1515 = vpack.c.b16 %v1425, %v1420
  %v1516 = vpack.c.b16 %v1426, %v1421
  %v1517 = vpack.c.b16 %v1427, %v1422
  %v1518 = vpack.c.b16 %v1428, %v1423
  %v1519 = vpack.c.b16 %v1434, %v1429
  %v1520 = vpack.c.b16 %v1435, %v1430
  %v1521 = vpack.c.b16 %v1436, %v1431
  %v1522 = vpack.c.b16 %v1437, %v1432
  %v1523 = vpack.c.b16 %v1438, %v1433
  %v1524 = vpack.c.b16 %v1444, %v1439
  %v1525 = vpack.c.b16 %v1445, %v1440
  %v1526 = vpack.c.b16 %v1446, %v1441
  %v1527 = vpack.c.b16 %v1447, %v1442
  %v1528 = vpack.c.b16 %v1448, %v1443
  %v1529 = vpack.c.b16 %v1454, %v1449
  %v1530 = vpack.c.b16 %v1455, %v1450
  %v1531 = vpack.c.b16 %v1456, %v1451
  %v1532 = vpack.c.b16 %v1457, %v1452
  %v1533 = vpack.c.b16 %v1458, %v1453
  %v1534 = vpack.c.b16 %v1464, %v1459
  %v1535 = vpack.c.b16 %v1465, %v1460
  %v1536 = vpack.c.b16 %v1466, %v1461
  %v1537 = vpack.c.b16 %v1467, %v1462
  %v1538 = vpack.c.b16 %v1468, %v1463
  %v1539 = vpack.c.b16 %v1474, %v1469
  %v1540 = vpack.c.b16 %v1475, %v1470
  %v1541 = vpack.c.b16 %v1476, %v1471
  %v1542 = vpack.c.b16 %v1477, %v1472
  %v1543 = vpack.c.b16 %v1478, %v1473
  %v1544 = vpack.c.b16 %v1479, %v1479
  %v1545 = vpack.c.b16 %v1480, %v1480
  %v1546 = vpack.c.b16 %v1481, %v1481
  %v1547 = vpack.c.b16 %v1482, %v1482
  %v1548 = vpack.c.b16 %v1483, %v1483
  %v1673 = vunpack.c.l.b16 %v1212
  %v1674 = vunpack.c.l.b16 %v1213
  %v1675 = vunpack.c.l.b16 %v1214
  %v1676 = vunpack.c.l.b16 %v1215
  %v1677 = vunpack.c.l.b16 %v1216
  %v1678 = vunpack.c.l.b16 %v1217
  %v1679 = vunpack.c.l.b16 %v1218
  %v1680 = vunpack.c.l.b16 %v1219
  %v1681 = vunpack.c.l.b16 %v1220
  %v1682 = vunpack.c.l.b16 %v1221
  %v1683 = vunpack.c.l.b16 %v1222
  %v1684 = vunpack.c.l.b16 %v1223
  %v1685 = vunpack.c.l.b16 %v1224
  %v1686 = vunpack.c.l.b16 %v1225
  %v1687 = vunpack.c.l.b16 %v1226
  %v1688 = vunpack.c.l.b16 %v1227
  %v1689 = vunpack.c.l.b16 %v1228
  %v1690 = vunpack.c.l.b16 %v1229
  %v1691 = vunpack.c.l.b16 %v1230
  %v1692 = vunpack.c.l.b16 %v1231
  %v1693 = vunpack.c.l.b16 %v1232
  %v1694 = vunpack.c.l.b16 %v1233
  %v1695 = vunpack.c.l.b16 %v1234
  %v1696 = vunpack.c.l.b16 %v1235
  %v1697 = vunpack.c.l.b16 %v1236
  %v1698 = vunpack.c.l.b16 %v1237
  %v1699 = vunpack.c.l.b16 %v1238
  %v1700 = vunpack.c.l.b16 %v1239
  %v1701 = vunpack.c.l.b16 %v1240
  %v1702 = vunpack.c.l.b16 %v1241
  %v1703 = vunpack.c.l.b16 %v1242
  %v1704 = vunpack.c.l.b16 %v1243
  %v1705 = vunpack.c.l.b16 %v1244
  %v1706 = vunpack.c.l.b16 %v1245
  %v1707 = vunpack.c.l.b16 %v1246
  %v1708 = vunpack.c.l.b16 %v1247
  %v1709 = vunpack.c.l.b16 %v1248
  %v1710 = vunpack.c.l.b16 %v1249
  %v1711 = vunpack.c.l.b16 %v1250
  %v1712 = vunpack.c.l.b16 %v1251
  %v1713 = vunpack.c.l.b16 %v1252
  %v1714 = vunpack.c.l.b16 %v1253
  %v1715 = vunpack.c.l.b16 %v1254
  %v1716 = vunpack.c.l.b16 %v1255
  %v1717 = vunpack.c.l.b16 %v1256
  %v1718 = vunpack.c.l.b16 %v1257
  %v1719 = vunpack.c.l.b16 %v1258
  %v1720 = vunpack.c.l.b16 %v1259
  %v1721 = vunpack.c.l.b16 %v1260
  %v1722 = vunpack.c.l.b16 %v1261
  %v1723 = vunpack.c.l.b16 %v1262
  %v1724 = vunpack.c.l.b16 %v1263
  %v1725 = vunpack.c.l.b16 %v1264
  %v1726 = vunpack.c.l.b16 %v1265
  %v1727 = vunpack.c.l.b16 %v1266
  %v1728 = vunpack.c.l.b16 %v1267
  %v1729 = vunpack.c.l.b16 %v1268
  %v1730 = vunpack.c.l.b16 %v1269
  %v1731 = vunpack.c.l.b16 %v1270
  %v1732 = vunpack.c.l.b16 %v1271
  %v1733 = vunpack.c.l.b16 %v1272
  %v1734 = vunpack.c.l.b16 %v1273
  %v1735 = vunpack.c.l.b16 %v1274
  %v1736 = vunpack.c.l.b16 %v1275
  %v1737 = vunpack.c.l.b16 %v1276
  %v1738 = vunpack.c.l.b16 %v1277
  %v1739 = vunpack.c.l.b16 %v1278
  %v1740 = vunpack.c.l.b16 %v1279
  %v1741 = vunpack.c.l.b16 %v1280
  %v1742 = vunpack.c.l.b16 %v1281
  %v1743 = vunpack.c.l.b16 %v1282
  %v1744 = vunpack.c.l.b16 %v1283
  %v1745 = vpack.c.b16 %v1674, %v1673
  %v1746 = vpack.c.b16 %v1676, %v1675
  %v1747 = vpack.c.b16 %v1678, %v1677
  %v1748 = vpack.c.b16 %v1680, %v1679
  %v1749 = vpack.c.b16 %v1682, %v1681
  %v1750 = vpack.c.b16 %v1684, %v1683
  %v1751 = vpack.c.b16 %v1686, %v1685
  %v1752 = vpack.c.b16 %v1688, %v1687
  %v1753 = vpack.c.b16 %v1690, %v1689
  %v1754 = vpack.c.b16 %v1692, %v1691
  %v1755 = vpack.c.b16 %v1694, %v1693
  %v1756 = vpack.c.b16 %v1696, %v1695
  %v1757 = vpack.c.b16 %v1698, %v1697
  %v1758 = vpack.c.b16 %v1700, %v1699
  %v1759 = vpack.c.b16 %v1702, %v1701
  %v1760 = vpack.c.b16 %v1704, %v1703
  %v1761 = vpack.c.b16 %v1706, %v1705
  %v1762 = vpack.c.b16 %v1708, %v1707
  %v1763 = vpack.c.b16 %v1710, %v1709
  %v1764 = vpack.c.b16 %v1712, %v1711
  %v1765 = vpack.c.b16 %v1714, %v1713
  %v1766 = vpack.c.b16 %v1716, %v1715
  %v1767 = vpack.c.b16 %v1718, %v1717
  %v1768 = vpack.c.b16 %v1720, %v1719
  %v1769 = vpack.c.b16 %v1722, %v1721
  %v1770 = vpack.c.b16 %v1724, %v1723
  %v1771 = vpack.c.b16 %v1726, %v1725
  %v1772 = vpack.c.b16 %v1728, %v1727
  %v1773 = vpack.c.b16 %v1730, %v1729
  %v1774 = vpack.c.b16 %v1732, %v1731
  %v1775 = vpack.c.b16 %v1734, %v1733
  %v1776 = vpack.c.b16 %v1736, %v1735
  %v1777 = vpack.c.b16 %v1738, %v1737
  %v1778 = vpack.c.b16 %v1740, %v1739
  %v1779 = vpack.c.b16 %v1742, %v1741
  %v1780 = vpack.c.b16 %v1744, %v1743
  %vm1817 = vcmask 523264
  %v1819 = vsel %vm1817, %v1488, 0
  %v1822 = vsel %vm1817, %v1493, 0
  %v1825 = vsel %vm1817, %v1498, 0
  %v1828 = vsel %vm1817, %v1503, 0
  %v1831 = vsel %vm1817, %v1508, 0
  %v1834 = vsel %vm1817, %v1513, 0
  %v1837 = vsel %vm1817, %v1518, 0
  %v1840 = vsel %vm1817, %v1523, 0
  %v1843 = vsel %vm1817, %v1528, 0
  %v1846 = vsel %vm1817, %v1533, 0
  %v1849 = vsel %vm1817, %v1538, 0
  %v1852 = vsel %vm1817, %v1543, 0
  %v1855 = vsel %vm1817, %v1548, 0
  %1857 = vmatpush.bf16.msra.mxu0 %v1752
  %1858 = vmatpush.bf16.msra.mxu0 %v1751
  %1859 = vmatpush.bf16.msra.mxu0 %v1750
  %1860 = vmatpush.bf16.msra.mxu0 %v1749
  %1861 = vmatpush.bf16.msra.mxu0 %v1748
  %1862 = vmatpush.bf16.msra.mxu0 %v1747
  %1863 = vmatpush.bf16.msra.mxu0 %v1746
  %1864 = vmatpush.bf16.msra.mxu0 %v1745
  %1865 = vmatmul.bf16.gmra.mxu0 %v1484
  %v1866 = vpop.f32.mrf.mxu0
  %v1867 = vadd.f32 0.0, %v1866
  %v1868 = vpop.f32.mrf.mxu0
  %v1869 = vadd.f32 0.0, %v1868
  %1870 = vmatmul.bf16.gmra.mxu0 %v1489
  %v1871 = vpop.f32.mrf.mxu0
  %v1872 = vadd.f32 0.0, %v1871
  %v1873 = vpop.f32.mrf.mxu0
  %v1874 = vadd.f32 0.0, %v1873
  %1875 = vmatmul.bf16.gmra.mxu0 %v1494
  %v1876 = vpop.f32.mrf.mxu0
  %v1877 = vadd.f32 0.0, %v1876
  %v1878 = vpop.f32.mrf.mxu0
  %v1879 = vadd.f32 0.0, %v1878
  %1880 = vmatmul.bf16.gmra.mxu0 %v1499
  %v1881 = vpop.f32.mrf.mxu0
  %v1882 = vadd.f32 0.0, %v1881
  %v1883 = vpop.f32.mrf.mxu0
  %v1884 = vadd.f32 0.0, %v1883
  %1885 = vmatmul.bf16.gmra.mxu0 %v1504
  %v1886 = vpop.f32.mrf.mxu0
  %v1887 = vadd.f32 0.0, %v1886
  %v1888 = vpop.f32.mrf.mxu0
  %v1889 = vadd.f32 0.0, %v1888
  %1890 = vmatmul.bf16.gmra.mxu0 %v1509
  %v1891 = vpop.f32.mrf.mxu0
  %v1892 = vadd.f32 0.0, %v1891
  %v1893 = vpop.f32.mrf.mxu0
  %v1894 = vadd.f32 0.0, %v1893
  %1895 = vmatmul.bf16.gmra.mxu0 %v1514
  %v1896 = vpop.f32.mrf.mxu0
  %v1897 = vadd.f32 0.0, %v1896
  %v1898 = vpop.f32.mrf.mxu0
  %v1899 = vadd.f32 0.0, %v1898
  %1900 = vmatmul.bf16.gmra.mxu0 %v1519
  %v1901 = vpop.f32.mrf.mxu0
  %v1902 = vadd.f32 0.0, %v1901
  %v1903 = vpop.f32.mrf.mxu0
  %v1904 = vadd.f32 0.0, %v1903
  %1905 = vmatmul.bf16.gmra.mxu0 %v1524
  %v1906 = vpop.f32.mrf.mxu0
  %v1907 = vadd.f32 0.0, %v1906
  %v1908 = vpop.f32.mrf.mxu0
  %v1909 = vadd.f32 0.0, %v1908
  %1910 = vmatmul.bf16.gmra.mxu0 %v1529
  %v1911 = vpop.f32.mrf.mxu0
  %v1912 = vadd.f32 0.0, %v1911
  %v1913 = vpop.f32.mrf.mxu0
  %v1914 = vadd.f32 0.0, %v1913
  %1915 = vmatmul.bf16.gmra.mxu0 %v1534
  %v1916 = vpop.f32.mrf.mxu0
  %v1917 = vadd.f32 0.0, %v1916
  %v1918 = vpop.f32.mrf.mxu0
  %v1919 = vadd.f32 0.0, %v1918
  %1920 = vmatmul.bf16.gmra.mxu0 %v1539
  %v1921 = vpop.f32.mrf.mxu0
  %v1922 = vadd.f32 0.0, %v1921
  %v1923 = vpop.f32.mrf.mxu0
  %v1924 = vadd.f32 0.0, %v1923
  %1925 = vmatmul.bf16.gmra.mxu0 %v1544
  %v1926 = vpop.f32.mrf.mxu0
  %v1927 = vadd.f32 0.0, %v1926
  %v1928 = vpop.f32.mrf.mxu0
  %1929 = vdwg.mxu0
  %1930 = vmatpush.bf16.msra.mxu0 %v1760
  %1931 = vmatpush.bf16.msra.mxu0 %v1759
  %1932 = vmatpush.bf16.msra.mxu0 %v1758
  %1933 = vmatpush.bf16.msra.mxu0 %v1757
  %1934 = vmatpush.bf16.msra.mxu0 %v1756
  %1935 = vmatpush.bf16.msra.mxu0 %v1755
  %1936 = vmatpush.bf16.msra.mxu0 %v1754
  %1937 = vmatpush.bf16.msra.mxu0 %v1753
  %1938 = vmatmul.bf16.gmra.mxu0 %v1485
  %v1939 = vpop.f32.mrf.mxu0
  %v1940 = vadd.f32 %v1867, %v1939
  %v1941 = vpop.f32.mrf.mxu0
  %v1942 = vadd.f32 %v1869, %v1941
  %1943 = vmatmul.bf16.gmra.mxu0 %v1490
  %v1944 = vpop.f32.mrf.mxu0
  %v1945 = vadd.f32 %v1872, %v1944
  %v1946 = vpop.f32.mrf.mxu0
  %v1947 = vadd.f32 %v1874, %v1946
  %1948 = vmatmul.bf16.gmra.mxu0 %v1495
  %v1949 = vpop.f32.mrf.mxu0
  %v1950 = vadd.f32 %v1877, %v1949
  %v1951 = vpop.f32.mrf.mxu0
  %v1952 = vadd.f32 %v1879, %v1951
  %1953 = vmatmul.bf16.gmra.mxu0 %v1500
  %v1954 = vpop.f32.mrf.mxu0
  %v1955 = vadd.f32 %v1882, %v1954
  %v1956 = vpop.f32.mrf.mxu0
  %v1957 = vadd.f32 %v1884, %v1956
  %1958 = vmatmul.bf16.gmra.mxu0 %v1505
  %v1959 = vpop.f32.mrf.mxu0
  %v1960 = vadd.f32 %v1887, %v1959
  %v1961 = vpop.f32.mrf.mxu0
  %v1962 = vadd.f32 %v1889, %v1961
  %1963 = vmatmul.bf16.gmra.mxu0 %v1510
  %v1964 = vpop.f32.mrf.mxu0
  %v1965 = vadd.f32 %v1892, %v1964
  %v1966 = vpop.f32.mrf.mxu0
  %v1967 = vadd.f32 %v1894, %v1966
  %1968 = vmatmul.bf16.gmra.mxu0 %v1515
  %v1969 = vpop.f32.mrf.mxu0
  %v1970 = vadd.f32 %v1897, %v1969
  %v1971 = vpop.f32.mrf.mxu0
  %v1972 = vadd.f32 %v1899, %v1971
  %1973 = vmatmul.bf16.gmra.mxu0 %v1520
  %v1974 = vpop.f32.mrf.mxu0
  %v1975 = vadd.f32 %v1902, %v1974
  %v1976 = vpop.f32.mrf.mxu0
  %v1977 = vadd.f32 %v1904, %v1976
  %1978 = vmatmul.bf16.gmra.mxu0 %v1525
  %v1979 = vpop.f32.mrf.mxu0
  %v1980 = vadd.f32 %v1907, %v1979
  %v1981 = vpop.f32.mrf.mxu0
  %v1982 = vadd.f32 %v1909, %v1981
  %1983 = vmatmul.bf16.gmra.mxu0 %v1530
  %v1984 = vpop.f32.mrf.mxu0
  %v1985 = vadd.f32 %v1912, %v1984
  %v1986 = vpop.f32.mrf.mxu0
  %v1987 = vadd.f32 %v1914, %v1986
  %1988 = vmatmul.bf16.gmra.mxu0 %v1535
  %v1989 = vpop.f32.mrf.mxu0
  %v1990 = vadd.f32 %v1917, %v1989
  %v1991 = vpop.f32.mrf.mxu0
  %v1992 = vadd.f32 %v1919, %v1991
  %1993 = vmatmul.bf16.gmra.mxu0 %v1540
  %v1994 = vpop.f32.mrf.mxu0
  %v1995 = vadd.f32 %v1922, %v1994
  %v1996 = vpop.f32.mrf.mxu0
  %v1997 = vadd.f32 %v1924, %v1996
  %1998 = vmatmul.bf16.gmra.mxu0 %v1545
  %v1999 = vpop.f32.mrf.mxu0
  %v2000 = vadd.f32 %v1927, %v1999
  %v2001 = vpop.f32.mrf.mxu0
  %2002 = vdwg.mxu0
  %2003 = vmatpush.bf16.msra.mxu0 %v1768
  %2004 = vmatpush.bf16.msra.mxu0 %v1767
  %2005 = vmatpush.bf16.msra.mxu0 %v1766
  %2006 = vmatpush.bf16.msra.mxu0 %v1765
  %2007 = vmatpush.bf16.msra.mxu0 %v1764
  %2008 = vmatpush.bf16.msra.mxu0 %v1763
  %2009 = vmatpush.bf16.msra.mxu0 %v1762
  %2010 = vmatpush.bf16.msra.mxu0 %v1761
  %2011 = vmatmul.bf16.gmra.mxu0 %v1486
  %v2012 = vpop.f32.mrf.mxu0
  %v2013 = vadd.f32 %v1940, %v2012
  %v2014 = vpop.f32.mrf.mxu0
  %v2015 = vadd.f32 %v1942, %v2014
  %2016 = vmatmul.bf16.gmra.mxu0 %v1491
  %v2017 = vpop.f32.mrf.mxu0
  %v2018 = vadd.f32 %v1945, %v2017
  %v2019 = vpop.f32.mrf.mxu0
  %v2020 = vadd.f32 %v1947, %v2019
  %2021 = vmatmul.bf16.gmra.mxu0 %v1496
  %v2022 = vpop.f32.mrf.mxu0
  %v2023 = vadd.f32 %v1950, %v2022
  %v2024 = vpop.f32.mrf.mxu0
  %v2025 = vadd.f32 %v1952, %v2024
  %2026 = vmatmul.bf16.gmra.mxu0 %v1501
  %v2027 = vpop.f32.mrf.mxu0
  %v2028 = vadd.f32 %v1955, %v2027
  %v2029 = vpop.f32.mrf.mxu0
  %v2030 = vadd.f32 %v1957, %v2029
  %2031 = vmatmul.bf16.gmra.mxu0 %v1506
  %v2032 = vpop.f32.mrf.mxu0
  %v2033 = vadd.f32 %v1960, %v2032
  %v2034 = vpop.f32.mrf.mxu0
  %v2035 = vadd.f32 %v1962, %v2034
  %2036 = vmatmul.bf16.gmra.mxu0 %v1511
  %v2037 = vpop.f32.mrf.mxu0
  %v2038 = vadd.f32 %v1965, %v2037
  %v2039 = vpop.f32.mrf.mxu0
  %v2040 = vadd.f32 %v1967, %v2039
  %2041 = vmatmul.bf16.gmra.mxu0 %v1516
  %v2042 = vpop.f32.mrf.mxu0
  %v2043 = vadd.f32 %v1970, %v2042
  %v2044 = vpop.f32.mrf.mxu0
  %v2045 = vadd.f32 %v1972, %v2044
  %2046 = vmatmul.bf16.gmra.mxu0 %v1521
  %v2047 = vpop.f32.mrf.mxu0
  %v2048 = vadd.f32 %v1975, %v2047
  %v2049 = vpop.f32.mrf.mxu0
  %v2050 = vadd.f32 %v1977, %v2049
  %2051 = vmatmul.bf16.gmra.mxu0 %v1526
  %v2052 = vpop.f32.mrf.mxu0
  %v2053 = vadd.f32 %v1980, %v2052
  %v2054 = vpop.f32.mrf.mxu0
  %v2055 = vadd.f32 %v1982, %v2054
  %2056 = vmatmul.bf16.gmra.mxu0 %v1531
  %v2057 = vpop.f32.mrf.mxu0
  %v2058 = vadd.f32 %v1985, %v2057
  %v2059 = vpop.f32.mrf.mxu0
  %v2060 = vadd.f32 %v1987, %v2059
  %2061 = vmatmul.bf16.gmra.mxu0 %v1536
  %v2062 = vpop.f32.mrf.mxu0
  %v2063 = vadd.f32 %v1990, %v2062
  %v2064 = vpop.f32.mrf.mxu0
  %v2065 = vadd.f32 %v1992, %v2064
  %2066 = vmatmul.bf16.gmra.mxu0 %v1541
  %v2067 = vpop.f32.mrf.mxu0
  %v2068 = vadd.f32 %v1995, %v2067
  %v2069 = vpop.f32.mrf.mxu0
  %v2070 = vadd.f32 %v1997, %v2069
  %2071 = vmatmul.bf16.gmra.mxu0 %v1546
  %v2072 = vpop.f32.mrf.mxu0
  %v2073 = vadd.f32 %v2000, %v2072
  %v2074 = vpop.f32.mrf.mxu0
  %2075 = vdwg.mxu0
  %2076 = vmatpush.bf16.msra.mxu0 %v1776
  %2077 = vmatpush.bf16.msra.mxu0 %v1775
  %2078 = vmatpush.bf16.msra.mxu0 %v1774
  %2079 = vmatpush.bf16.msra.mxu0 %v1773
  %2080 = vmatpush.bf16.msra.mxu0 %v1772
  %2081 = vmatpush.bf16.msra.mxu0 %v1771
  %2082 = vmatpush.bf16.msra.mxu0 %v1770
  %2083 = vmatpush.bf16.msra.mxu0 %v1769
  %2084 = vmatmul.bf16.gmra.mxu0 %v1487
  %v2085 = vpop.f32.mrf.mxu0
  %v2086 = vadd.f32 %v2013, %v2085
  %v2087 = vpop.f32.mrf.mxu0
  %v2088 = vadd.f32 %v2015, %v2087
  %2089 = vmatmul.bf16.gmra.mxu0 %v1492
  %v2090 = vpop.f32.mrf.mxu0
  %v2091 = vadd.f32 %v2018, %v2090
  %v2092 = vpop.f32.mrf.mxu0
  %v2093 = vadd.f32 %v2020, %v2092
  %2094 = vmatmul.bf16.gmra.mxu0 %v1497
  %v2095 = vpop.f32.mrf.mxu0
  %v2096 = vadd.f32 %v2023, %v2095
  %v2097 = vpop.f32.mrf.mxu0
  %v2098 = vadd.f32 %v2025, %v2097
  %2099 = vmatmul.bf16.gmra.mxu0 %v1502
  %v2100 = vpop.f32.mrf.mxu0
  %v2101 = vadd.f32 %v2028, %v2100
  %v2102 = vpop.f32.mrf.mxu0
  %v2103 = vadd.f32 %v2030, %v2102
  %2104 = vmatmul.bf16.gmra.mxu0 %v1507
  %v2105 = vpop.f32.mrf.mxu0
  %v2106 = vadd.f32 %v2033, %v2105
  %v2107 = vpop.f32.mrf.mxu0
  %v2108 = vadd.f32 %v2035, %v2107
  %2109 = vmatmul.bf16.gmra.mxu0 %v1512
  %v2110 = vpop.f32.mrf.mxu0
  %v2111 = vadd.f32 %v2038, %v2110
  %v2112 = vpop.f32.mrf.mxu0
  %v2113 = vadd.f32 %v2040, %v2112
  %2114 = vmatmul.bf16.gmra.mxu0 %v1517
  %v2115 = vpop.f32.mrf.mxu0
  %v2116 = vadd.f32 %v2043, %v2115
  %v2117 = vpop.f32.mrf.mxu0
  %v2118 = vadd.f32 %v2045, %v2117
  %2119 = vmatmul.bf16.gmra.mxu0 %v1522
  %v2120 = vpop.f32.mrf.mxu0
  %v2121 = vadd.f32 %v2048, %v2120
  %v2122 = vpop.f32.mrf.mxu0
  %v2123 = vadd.f32 %v2050, %v2122
  %2124 = vmatmul.bf16.gmra.mxu0 %v1527
  %v2125 = vpop.f32.mrf.mxu0
  %v2126 = vadd.f32 %v2053, %v2125
  %v2127 = vpop.f32.mrf.mxu0
  %v2128 = vadd.f32 %v2055, %v2127
  %2129 = vmatmul.bf16.gmra.mxu0 %v1532
  %v2130 = vpop.f32.mrf.mxu0
  %v2131 = vadd.f32 %v2058, %v2130
  %v2132 = vpop.f32.mrf.mxu0
  %v2133 = vadd.f32 %v2060, %v2132
  %2134 = vmatmul.bf16.gmra.mxu0 %v1537
  %v2135 = vpop.f32.mrf.mxu0
  %v2136 = vadd.f32 %v2063, %v2135
  %v2137 = vpop.f32.mrf.mxu0
  %v2138 = vadd.f32 %v2065, %v2137
  %2139 = vmatmul.bf16.gmra.mxu0 %v1542
  %v2140 = vpop.f32.mrf.mxu0
  %v2141 = vadd.f32 %v2068, %v2140
  %v2142 = vpop.f32.mrf.mxu0
  %v2143 = vadd.f32 %v2070, %v2142
  %2144 = vmatmul.bf16.gmra.mxu0 %v1547
  %v2145 = vpop.f32.mrf.mxu0
  %v2146 = vadd.f32 %v2073, %v2145
  %v2147 = vpop.f32.mrf.mxu0
  %2148 = vdwg.mxu0
  %2149 = vmatpush.bf16.msra.mxu0 0
  %2150 = vmatpush.bf16.msra.mxu0 0
  %2151 = vmatpush.bf16.msra.mxu0 0
  %2152 = vmatpush.bf16.msra.mxu0 0
  %2153 = vmatpush.bf16.msra.mxu0 %v1780
  %2154 = vmatpush.bf16.msra.mxu0 %v1779
  %2155 = vmatpush.bf16.msra.mxu0 %v1778
  %2156 = vmatpush.bf16.msra.mxu0 %v1777
  %2157 = vmatmul.bf16.gmra.mxu0 %v1819
  %v2158 = vpop.f32.mrf.mxu0
  %v2159 = vadd.f32 %v2086, %v2158
  %v2160 = vpop.f32.mrf.mxu0
  %v2161 = vadd.f32 %v2088, %v2160
  %2162 = vmatmul.bf16.gmra.mxu0 %v1822
  %v2163 = vpop.f32.mrf.mxu0
  %v2164 = vadd.f32 %v2091, %v2163
  %v2165 = vpop.f32.mrf.mxu0
  %v2166 = vadd.f32 %v2093, %v2165
  %2167 = vmatmul.bf16.gmra.mxu0 %v1825
  %v2168 = vpop.f32.mrf.mxu0
  %v2169 = vadd.f32 %v2096, %v2168
  %v2170 = vpop.f32.mrf.mxu0
  %v2171 = vadd.f32 %v2098, %v2170
  %2172 = vmatmul.bf16.gmra.mxu0 %v1828
  %v2173 = vpop.f32.mrf.mxu0
  %v2174 = vadd.f32 %v2101, %v2173
  %v2175 = vpop.f32.mrf.mxu0
  %v2176 = vadd.f32 %v2103, %v2175
  %2177 = vmatmul.bf16.gmra.mxu0 %v1831
  %v2178 = vpop.f32.mrf.mxu0
  %v2179 = vadd.f32 %v2106, %v2178
  %v2180 = vpop.f32.mrf.mxu0
  %v2181 = vadd.f32 %v2108, %v2180
  %2182 = vmatmul.bf16.gmra.mxu0 %v1834
  %v2183 = vpop.f32.mrf.mxu0
  %v2184 = vadd.f32 %v2111, %v2183
  %v2185 = vpop.f32.mrf.mxu0
  %v2186 = vadd.f32 %v2113, %v2185
  %2187 = vmatmul.bf16.gmra.mxu0 %v1837
  %v2188 = vpop.f32.mrf.mxu0
  %v2189 = vadd.f32 %v2116, %v2188
  %v2190 = vpop.f32.mrf.mxu0
  %v2191 = vadd.f32 %v2118, %v2190
  %2192 = vmatmul.bf16.gmra.mxu0 %v1840
  %v2193 = vpop.f32.mrf.mxu0
  %v2194 = vadd.f32 %v2121, %v2193
  %v2195 = vpop.f32.mrf.mxu0
  %v2196 = vadd.f32 %v2123, %v2195
  %2197 = vmatmul.bf16.gmra.mxu0 %v1843
  %v2198 = vpop.f32.mrf.mxu0
  %v2199 = vadd.f32 %v2126, %v2198
  %v2200 = vpop.f32.mrf.mxu0
  %v2201 = vadd.f32 %v2128, %v2200
  %2202 = vmatmul.bf16.gmra.mxu0 %v1846
  %v2203 = vpop.f32.mrf.mxu0
  %v2204 = vadd.f32 %v2131, %v2203
  %v2205 = vpop.f32.mrf.mxu0
  %v2206 = vadd.f32 %v2133, %v2205
  %2207 = vmatmul.bf16.gmra.mxu0 %v1849
  %v2208 = vpop.f32.mrf.mxu0
  %v2209 = vadd.f32 %v2136, %v2208
  %v2210 = vpop.f32.mrf.mxu0
  %v2211 = vadd.f32 %v2138, %v2210
  %2212 = vmatmul.bf16.gmra.mxu0 %v1852
  %v2213 = vpop.f32.mrf.mxu0
  %v2214 = vadd.f32 %v2141, %v2213
  %v2215 = vpop.f32.mrf.mxu0
  %v2216 = vadd.f32 %v2143, %v2215
  %2217 = vmatmul.bf16.gmra.mxu0 %v1855
  %v2218 = vpop.f32.mrf.mxu0
  %v2219 = vadd.f32 %v2146, %v2218
  %v2220 = vpop.f32.mrf.mxu0
  %2221 = vdwg.mxu0
  %2223 = vset.pattern.permute.xlu0 0
  %2224 = vperm.xlu0 %2223, %v34
  %v2225 = vpop.permute.xlu0 %2224
  %2228 = vset.pattern.permute.xlu0 0
  %2229 = vperm.xlu0 %2228, %v35
  %v2230 = vpop.permute.xlu0 %2229
  %2233 = vset.pattern.permute.xlu0 0
  %2234 = vperm.xlu0 %2233, %v36
  %v2235 = vpop.permute.xlu0 %2234
  %2238 = vset.pattern.permute.xlu0 0
  %2239 = vperm.xlu0 %2238, %v37
  %v2240 = vpop.permute.xlu0 %2239
  %2243 = vset.pattern.permute.xlu0 0
  %2244 = vperm.xlu0 %2243, %v38
  %v2245 = vpop.permute.xlu0 %2244
  %2248 = vset.pattern.permute.xlu0 0
  %2249 = vperm.xlu0 %2248, %v39
  %v2250 = vpop.permute.xlu0 %2249
  %2253 = vset.pattern.permute.xlu0 0
  %2254 = vperm.xlu0 %2253, %v40
  %v2255 = vpop.permute.xlu0 %2254
  %2258 = vset.pattern.permute.xlu0 0
  %2259 = vperm.xlu0 %2258, %v41
  %v2260 = vpop.permute.xlu0 %2259
  %2263 = vset.pattern.permute.xlu0 0
  %2264 = vperm.xlu0 %2263, %v42
  %v2265 = vpop.permute.xlu0 %2264
  %2268 = vset.pattern.permute.xlu0 0
  %2269 = vperm.xlu0 %2268, %v43
  %v2270 = vpop.permute.xlu0 %2269
  %2273 = vset.pattern.permute.xlu0 0
  %2274 = vperm.xlu0 %2273, %v44
  %v2275 = vpop.permute.xlu0 %2274
  %2278 = vset.pattern.permute.xlu0 0
  %2279 = vperm.xlu0 %2278, %v45
  %v2280 = vpop.permute.xlu0 %2279
  %2283 = vset.pattern.permute.xlu0 0
  %2284 = vperm.xlu0 %2283, %v46
  %v2285 = vpop.permute.xlu0 %2284
  %2288 = vset.pattern.permute.xlu0 0
  %2289 = vperm.xlu0 %2288, %v47
  %v2290 = vpop.permute.xlu0 %2289
  %2293 = vset.pattern.permute.xlu0 0
  %2294 = vperm.xlu0 %2293, %v48
  %v2295 = vpop.permute.xlu0 %2294
  %2298 = vset.pattern.permute.xlu0 0
  %2299 = vperm.xlu0 %2298, %v49
  %v2300 = vpop.permute.xlu0 %2299
  %2303 = vset.pattern.permute.xlu0 0
  %2304 = vperm.xlu0 %2303, %v50
  %v2305 = vpop.permute.xlu0 %2304
  %2308 = vset.pattern.permute.xlu0 0
  %2309 = vperm.xlu0 %2308, %v51
  %v2310 = vpop.permute.xlu0 %2309
  %2313 = vset.pattern.permute.xlu0 0
  %2314 = vperm.xlu0 %2313, %v52
  %v2315 = vpop.permute.xlu0 %2314
  %2318 = vset.pattern.permute.xlu0 0
  %2319 = vperm.xlu0 %2318, %v53
  %v2320 = vpop.permute.xlu0 %2319
  %2323 = vset.pattern.permute.xlu0 0
  %2324 = vperm.xlu0 %2323, %v54
  %v2325 = vpop.permute.xlu0 %2324
  %2328 = vset.pattern.permute.xlu0 0
  %2329 = vperm.xlu0 %2328, %v55
  %v2330 = vpop.permute.xlu0 %2329
  %2333 = vset.pattern.permute.xlu0 0
  %2334 = vperm.xlu0 %2333, %v56
  %v2335 = vpop.permute.xlu0 %2334
  %2338 = vset.pattern.permute.xlu0 0
  %2339 = vperm.xlu0 %2338, %v57
  %v2340 = vpop.permute.xlu0 %2339
  %2343 = vset.pattern.permute.xlu0 0
  %2344 = vperm.xlu0 %2343, %v58
  %v2345 = vpop.permute.xlu0 %2344
  %v2347 = vmul.f32 %v2159, %v2225
  %v2348 = vmul.f32 %v2161, %v2230
  %v2349 = vmul.f32 %v2164, %v2235
  %v2350 = vmul.f32 %v2166, %v2240
  %v2351 = vmul.f32 %v2169, %v2245
  %v2352 = vmul.f32 %v2171, %v2250
  %v2353 = vmul.f32 %v2174, %v2255
  %v2354 = vmul.f32 %v2176, %v2260
  %v2355 = vmul.f32 %v2179, %v2265
  %v2356 = vmul.f32 %v2181, %v2270
  %v2357 = vmul.f32 %v2184, %v2275
  %v2358 = vmul.f32 %v2186, %v2280
  %v2359 = vmul.f32 %v2189, %v2285
  %v2360 = vmul.f32 %v2191, %v2290
  %v2361 = vmul.f32 %v2194, %v2295
  %v2362 = vmul.f32 %v2196, %v2300
  %v2363 = vmul.f32 %v2199, %v2305
  %v2364 = vmul.f32 %v2201, %v2310
  %v2365 = vmul.f32 %v2204, %v2315
  %v2366 = vmul.f32 %v2206, %v2320
  %v2367 = vmul.f32 %v2209, %v2325
  %v2368 = vmul.f32 %v2211, %v2330
  %v2369 = vmul.f32 %v2214, %v2335
  %v2370 = vmul.f32 %v2216, %v2340
  %v2371 = vmul.f32 %v2219, %v2345
  %v2372 = vsel %vm1817, %v2347, 0.0
  %v2373 = vsel %vm1817, %v2348, 0.0
  %v2374 = vadd.f32 %v2372, %v2373
  %v2375 = vsel %vm1817, %v2349, 0.0
  %v2376 = vadd.f32 %v2374, %v2375
  %v2377 = vsel %vm1817, %v2350, 0.0
  %v2378 = vadd.f32 %v2376, %v2377
  %v2379 = vsel %vm1817, %v2351, 0.0
  %v2380 = vadd.f32 %v2378, %v2379
  %v2381 = vsel %vm1817, %v2352, 0.0
  %v2382 = vadd.f32 %v2380, %v2381
  %v2383 = vsel %vm1817, %v2353, 0.0
  %v2384 = vadd.f32 %v2382, %v2383
  %v2385 = vsel %vm1817, %v2354, 0.0
  %v2386 = vadd.f32 %v2384, %v2385
  %v2387 = vsel %vm1817, %v2355, 0.0
  %v2388 = vadd.f32 %v2386, %v2387
  %v2389 = vsel %vm1817, %v2356, 0.0
  %v2390 = vadd.f32 %v2388, %v2389
  %v2391 = vsel %vm1817, %v2357, 0.0
  %v2392 = vadd.f32 %v2390, %v2391
  %v2393 = vsel %vm1817, %v2358, 0.0
  %v2394 = vadd.f32 %v2392, %v2393
  %v2395 = vsel %vm1817, %v2359, 0.0
  %v2396 = vadd.f32 %v2394, %v2395
  %v2397 = vsel %vm1817, %v2360, 0.0
  %v2398 = vadd.f32 %v2396, %v2397
  %v2399 = vsel %vm1817, %v2361, 0.0
  %v2400 = vadd.f32 %v2398, %v2399
  %v2401 = vsel %vm1817, %v2362, 0.0
  %v2402 = vadd.f32 %v2400, %v2401
  %v2403 = vsel %vm1817, %v2363, 0.0
  %v2404 = vadd.f32 %v2402, %v2403
  %v2405 = vsel %vm1817, %v2364, 0.0
  %v2406 = vadd.f32 %v2404, %v2405
  %v2407 = vsel %vm1817, %v2365, 0.0
  %v2408 = vadd.f32 %v2406, %v2407
  %v2409 = vsel %vm1817, %v2366, 0.0
  %v2410 = vadd.f32 %v2408, %v2409
  %v2411 = vsel %vm1817, %v2367, 0.0
  %v2412 = vadd.f32 %v2410, %v2411
  %v2413 = vsel %vm1817, %v2368, 0.0
  %v2414 = vadd.f32 %v2412, %v2413
  %v2415 = vsel %vm1817, %v2369, 0.0
  %v2416 = vadd.f32 %v2414, %v2415
  %v2417 = vsel %vm1817, %v2370, 0.0
  %v2418 = vadd.f32 %v2416, %v2417
  %v2419 = vsel %vm1817, %v2371, 0.0
  %v2420 = vadd.f32 %v2418, %v2419
  %v2421 = vrot.slane %v2420, 4
  %v2422 = vadd.f32 %v2420, %v2421
  %v2423 = vrot.slane %v2422, 2
  %v2424 = vadd.f32 %v2422, %v2423
  %v2425 = vrot.slane %v2424, 1
  %v2426 = vadd.f32 %v2424, %v2425
  %v2427 = vmul.f32 %v2347, %v2159
  %v2428 = vmul.f32 %v2348, %v2161
  %v2429 = vmul.f32 %v2349, %v2164
  %v2430 = vmul.f32 %v2350, %v2166
  %v2431 = vmul.f32 %v2351, %v2169
  %v2432 = vmul.f32 %v2352, %v2171
  %v2433 = vmul.f32 %v2353, %v2174
  %v2434 = vmul.f32 %v2354, %v2176
  %v2435 = vmul.f32 %v2355, %v2179
  %v2436 = vmul.f32 %v2356, %v2181
  %v2437 = vmul.f32 %v2357, %v2184
  %v2438 = vmul.f32 %v2358, %v2186
  %v2439 = vmul.f32 %v2359, %v2189
  %v2440 = vmul.f32 %v2360, %v2191
  %v2441 = vmul.f32 %v2361, %v2194
  %v2442 = vmul.f32 %v2362, %v2196
  %v2443 = vmul.f32 %v2363, %v2199
  %v2444 = vmul.f32 %v2364, %v2201
  %v2445 = vmul.f32 %v2365, %v2204
  %v2446 = vmul.f32 %v2366, %v2206
  %v2447 = vmul.f32 %v2367, %v2209
  %v2448 = vmul.f32 %v2368, %v2211
  %v2449 = vmul.f32 %v2369, %v2214
  %v2450 = vmul.f32 %v2370, %v2216
  %v2451 = vmul.f32 %v2371, %v2219
  %v2452 = vsel %vm1817, %v2427, 0.0
  %v2453 = vsel %vm1817, %v2428, 0.0
  %v2454 = vadd.f32 %v2452, %v2453
  %v2455 = vsel %vm1817, %v2429, 0.0
  %v2456 = vadd.f32 %v2454, %v2455
  %v2457 = vsel %vm1817, %v2430, 0.0
  %v2458 = vadd.f32 %v2456, %v2457
  %v2459 = vsel %vm1817, %v2431, 0.0
  %v2460 = vadd.f32 %v2458, %v2459
  %v2461 = vsel %vm1817, %v2432, 0.0
  %v2462 = vadd.f32 %v2460, %v2461
  %v2463 = vsel %vm1817, %v2433, 0.0
  %v2464 = vadd.f32 %v2462, %v2463
  %v2465 = vsel %vm1817, %v2434, 0.0
  %v2466 = vadd.f32 %v2464, %v2465
  %v2467 = vsel %vm1817, %v2435, 0.0
  %v2468 = vadd.f32 %v2466, %v2467
  %v2469 = vsel %vm1817, %v2436, 0.0
  %v2470 = vadd.f32 %v2468, %v2469
  %v2471 = vsel %vm1817, %v2437, 0.0
  %v2472 = vadd.f32 %v2470, %v2471
  %v2473 = vsel %vm1817, %v2438, 0.0
  %v2474 = vadd.f32 %v2472, %v2473
  %v2475 = vsel %vm1817, %v2439, 0.0
  %v2476 = vadd.f32 %v2474, %v2475
  %v2477 = vsel %vm1817, %v2440, 0.0
  %v2478 = vadd.f32 %v2476, %v2477
  %v2479 = vsel %vm1817, %v2441, 0.0
  %v2480 = vadd.f32 %v2478, %v2479
  %v2481 = vsel %vm1817, %v2442, 0.0
  %v2482 = vadd.f32 %v2480, %v2481
  %v2483 = vsel %vm1817, %v2443, 0.0
  %v2484 = vadd.f32 %v2482, %v2483
  %v2485 = vsel %vm1817, %v2444, 0.0
  %v2486 = vadd.f32 %v2484, %v2485
  %v2487 = vsel %vm1817, %v2445, 0.0
  %v2488 = vadd.f32 %v2486, %v2487
  %v2489 = vsel %vm1817, %v2446, 0.0
  %v2490 = vadd.f32 %v2488, %v2489
  %v2491 = vsel %vm1817, %v2447, 0.0
  %v2492 = vadd.f32 %v2490, %v2491
  %v2493 = vsel %vm1817, %v2448, 0.0
  %v2494 = vadd.f32 %v2492, %v2493
  %v2495 = vsel %vm1817, %v2449, 0.0
  %v2496 = vadd.f32 %v2494, %v2495
  %v2497 = vsel %vm1817, %v2450, 0.0
  %v2498 = vadd.f32 %v2496, %v2497
  %v2499 = vsel %vm1817, %v2451, 0.0
  %v2500 = vadd.f32 %v2498, %v2499
  %v2501 = vrot.slane %v2500, 4
  %v2502 = vadd.f32 %v2500, %v2501
  %v2503 = vrot.slane %v2502, 2
  %v2504 = vadd.f32 %v2502, %v2503
  %v2505 = vrot.slane %v2504, 1
  %v2506 = vadd.f32 %v2504, %v2505
  %v2507 = vmul.f32 %v2426, 0.0078125
  %v2508 = vmul.f32 %v2506, 0.0078125
  %v2509 = vmul.f32 %v2507, %v2507
  %v2510 = vsub.f32 %v2508, %v2509
  %v2511 = vld [vmem:[%s3] sm:$0x1]
  %v2512 = vadd.f32 %v2510, 1e-05
  %v2513 = vrsqrt.pop %v2512
  %v2514 = vmul.f32 %v2513, %v2512
  %v2515 = vmul.f32 %v2514, %v2513
  %v2516 = vmul.f32 0.5, %v2515
  %v2517 = vsub.f32 1.5, %v2516
  %v2518 = vmul.f32 %v2513, %v2517
  %vm2519 = vweird.f32 %v2512
  %vm2520 = vweird.f32 %v2513
  %vm2521 = vmor %vm2519, %vm2520
  %v2522 = vsel %vm2521, %v2513, %v2518
  %v2523 = vmul.f32 %v2511, %v2522
  %v2524 = vld [vmem:[%s4] sm:$0x1]
  %v2525 = vmul.f32 %v2507, %v2523
  %v2526 = vsub.f32 %v2524, %v2525
  %v2528 = vperm.slane %v2523, 0
  %v2530 = vmul.f32 %v2159, %v2528
  %v2531 = vmul.f32 %v2161, %v2528
  %v2532 = vmul.f32 %v2164, %v2528
  %v2533 = vmul.f32 %v2166, %v2528
  %v2534 = vmul.f32 %v2169, %v2528
  %v2535 = vmul.f32 %v2171, %v2528
  %v2536 = vmul.f32 %v2174, %v2528
  %v2537 = vmul.f32 %v2176, %v2528
  %v2538 = vmul.f32 %v2179, %v2528
  %v2539 = vmul.f32 %v2181, %v2528
  %v2540 = vmul.f32 %v2184, %v2528
  %v2541 = vmul.f32 %v2186, %v2528
  %v2542 = vmul.f32 %v2189, %v2528
  %v2543 = vmul.f32 %v2191, %v2528
  %v2544 = vmul.f32 %v2194, %v2528
  %v2545 = vmul.f32 %v2196, %v2528
  %v2546 = vmul.f32 %v2199, %v2528
  %v2547 = vmul.f32 %v2201, %v2528
  %v2548 = vmul.f32 %v2204, %v2528
  %v2549 = vmul.f32 %v2206, %v2528
  %v2550 = vmul.f32 %v2209, %v2528
  %v2551 = vmul.f32 %v2211, %v2528
  %v2552 = vmul.f32 %v2214, %v2528
  %v2553 = vmul.f32 %v2216, %v2528
  %v2554 = vmul.f32 %v2219, %v2528
  %v2556 = vperm.slane %v2526, 0
  %v2558 = vadd.f32 %v2530, %v2556
  %v2559 = vadd.f32 %v2531, %v2556
  %v2560 = vadd.f32 %v2532, %v2556
  %v2561 = vadd.f32 %v2533, %v2556
  %v2562 = vadd.f32 %v2534, %v2556
  %v2563 = vadd.f32 %v2535, %v2556
  %v2564 = vadd.f32 %v2536, %v2556
  %v2565 = vadd.f32 %v2537, %v2556
  %v2566 = vadd.f32 %v2538, %v2556
  %v2567 = vadd.f32 %v2539, %v2556
  %v2568 = vadd.f32 %v2540, %v2556
  %v2569 = vadd.f32 %v2541, %v2556
  %v2570 = vadd.f32 %v2542, %v2556
  %v2571 = vadd.f32 %v2543, %v2556
  %v2572 = vadd.f32 %v2544, %v2556
  %v2573 = vadd.f32 %v2545, %v2556
  %v2574 = vadd.f32 %v2546, %v2556
  %v2575 = vadd.f32 %v2547, %v2556
  %v2576 = vadd.f32 %v2548, %v2556
  %v2577 = vadd.f32 %v2549, %v2556
  %v2578 = vadd.f32 %v2550, %v2556
  %v2579 = vadd.f32 %v2551, %v2556
  %v2580 = vadd.f32 %v2552, %v2556
  %v2581 = vadd.f32 %v2553, %v2556
  %v2582 = vadd.f32 %v2554, %v2556
  %vm2583 = vcmp.ge.f32.partialorder %v2558, 0.0
  %vm2584 = vcmp.ge.f32.partialorder %v2559, 0.0
  %vm2585 = vcmp.ge.f32.partialorder %v2560, 0.0
  %vm2586 = vcmp.ge.f32.partialorder %v2561, 0.0
  %vm2587 = vcmp.ge.f32.partialorder %v2562, 0.0
  %vm2588 = vcmp.ge.f32.partialorder %v2563, 0.0
  %vm2589 = vcmp.ge.f32.partialorder %v2564, 0.0
  %vm2590 = vcmp.ge.f32.partialorder %v2565, 0.0
  %vm2591 = vcmp.ge.f32.partialorder %v2566, 0.0
  %vm2592 = vcmp.ge.f32.partialorder %v2567, 0.0
  %vm2593 = vcmp.ge.f32.partialorder %v2568, 0.0
  %vm2594 = vcmp.ge.f32.partialorder %v2569, 0.0
  %vm2595 = vcmp.ge.f32.partialorder %v2570, 0.0
  %vm2596 = vcmp.ge.f32.partialorder %v2571, 0.0
  %vm2597 = vcmp.ge.f32.partialorder %v2572, 0.0
  %vm2598 = vcmp.ge.f32.partialorder %v2573, 0.0
  %vm2599 = vcmp.ge.f32.partialorder %v2574, 0.0
  %vm2600 = vcmp.ge.f32.partialorder %v2575, 0.0
  %vm2601 = vcmp.ge.f32.partialorder %v2576, 0.0
  %vm2602 = vcmp.ge.f32.partialorder %v2577, 0.0
  %vm2603 = vcmp.ge.f32.partialorder %v2578, 0.0
  %vm2604 = vcmp.ge.f32.partialorder %v2579, 0.0
  %vm2605 = vcmp.ge.f32.partialorder %v2580, 0.0
  %vm2606 = vcmp.ge.f32.partialorder %v2581, 0.0
  %vm2607 = vcmp.ge.f32.partialorder %v2582, 0.0
  %v2608 = vstv %s59
  %v2609 = vmul.f32 %v2608, %v2558
  %v2610 = vmul.f32 %v2608, %v2559
  %v2611 = vmul.f32 %v2608, %v2560
  %v2612 = vmul.f32 %v2608, %v2561
  %v2613 = vmul.f32 %v2608, %v2562
  %v2614 = vmul.f32 %v2608, %v2563
  %v2615 = vmul.f32 %v2608, %v2564
  %v2616 = vmul.f32 %v2608, %v2565
  %v2617 = vmul.f32 %v2608, %v2566
  %v2618 = vmul.f32 %v2608, %v2567
  %v2619 = vmul.f32 %v2608, %v2568
  %v2620 = vmul.f32 %v2608, %v2569
  %v2621 = vmul.f32 %v2608, %v2570
  %v2622 = vmul.f32 %v2608, %v2571
  %v2623 = vmul.f32 %v2608, %v2572
  %v2624 = vmul.f32 %v2608, %v2573
  %v2625 = vmul.f32 %v2608, %v2574
  %v2626 = vmul.f32 %v2608, %v2575
  %v2627 = vmul.f32 %v2608, %v2576
  %v2628 = vmul.f32 %v2608, %v2577
  %v2629 = vmul.f32 %v2608, %v2578
  %v2630 = vmul.f32 %v2608, %v2579
  %v2631 = vmul.f32 %v2608, %v2580
  %v2632 = vmul.f32 %v2608, %v2581
  %v2633 = vmul.f32 %v2608, %v2582
  %v2634 = vsel %vm2583, %v2558, %v2609
  %v2635 = vsel %vm2584, %v2559, %v2610
  %v2636 = vsel %vm2585, %v2560, %v2611
  %v2637 = vsel %vm2586, %v2561, %v2612
  %v2638 = vsel %vm2587, %v2562, %v2613
  %v2639 = vsel %vm2588, %v2563, %v2614
  %v2640 = vsel %vm2589, %v2564, %v2615
  %v2641 = vsel %vm2590, %v2565, %v2616
  %v2642 = vsel %vm2591, %v2566, %v2617
  %v2643 = vsel %vm2592, %v2567, %v2618
  %v2644 = vsel %vm2593, %v2568, %v2619
  %v2645 = vsel %vm2594, %v2569, %v2620
  %v2646 = vsel %vm2595, %v2570, %v2621
  %v2647 = vsel %vm2596, %v2571, %v2622
  %v2648 = vsel %vm2597, %v2572, %v2623
  %v2649 = vsel %vm2598, %v2573, %v2624
  %v2650 = vsel %vm2599, %v2574, %v2625
  %v2651 = vsel %vm2600, %v2575, %v2626
  %v2652 = vsel %vm2601, %v2576, %v2627
  %v2653 = vsel %vm2602, %v2577, %v2628
  %v2654 = vsel %vm2603, %v2578, %v2629
  %v2655 = vsel %vm2604, %v2579, %v2630
  %v2656 = vsel %vm2605, %v2580, %v2631
  %v2657 = vsel %vm2606, %v2581, %v2632
  %v2658 = vsel %vm2607, %v2582, %v2633
  %2659 = vst.msk [vmem:[#allocation3] sm:$0xff] %vm1817, 0.0
  %2660 = vst.msk [vmem:[#allocation3 + $0x8] sm:$0xff] %vm1817, 0.0
  %2661 = vst.msk [vmem:[#allocation3 + $0xd8] sm:$0xff] %vm1817, 0.0
  %2662 = vst.msk [vmem:[#allocation3 + $0xe0] sm:$0xff] %vm1817, 0.0
  %v2663 = vmul.f32 %v2634, %v2225
  %v2664 = vmul.f32 %v2635, %v2230
  %v2665 = vmul.f32 %v2636, %v2235
  %v2666 = vmul.f32 %v2637, %v2240
  %v2667 = vmul.f32 %v2638, %v2245
  %v2668 = vmul.f32 %v2639, %v2250
  %v2669 = vmul.f32 %v2640, %v2255
  %v2670 = vmul.f32 %v2641, %v2260
  %v2671 = vmul.f32 %v2642, %v2265
  %v2672 = vmul.f32 %v2643, %v2270
  %v2673 = vmul.f32 %v2644, %v2275
  %v2674 = vmul.f32 %v2645, %v2280
  %v2675 = vmul.f32 %v2646, %v2285
  %v2676 = vmul.f32 %v2647, %v2290
  %v2677 = vmul.f32 %v2648, %v2295
  %v2678 = vmul.f32 %v2649, %v2300
  %v2679 = vmul.f32 %v2650, %v2305
  %v2680 = vmul.f32 %v2651, %v2310
  %v2681 = vmul.f32 %v2652, %v2315
  %v2682 = vmul.f32 %v2653, %v2320
  %v2683 = vmul.f32 %v2654, %v2325
  %v2684 = vmul.f32 %v2655, %v2330
  %v2685 = vmul.f32 %v2656, %v2335
  %v2686 = vmul.f32 %v2657, %v2340
  %v2687 = vmul.f32 %v2658, %v2345
  %2688 = vst.msk [vmem:[#allocation3 + $0x10] sm:$0xff] %vm1817, %v2663
  %2689 = vst.msk [vmem:[#allocation3 + $0x18] sm:$0xff] %vm1817, %v2664
  %2690 = vst.msk [vmem:[#allocation3 + $0x20] sm:$0xff] %vm1817, %v2665
  %2691 = vst.msk [vmem:[#allocation3 + $0x28] sm:$0xff] %vm1817, %v2666
  %2692 = vst.msk [vmem:[#allocation3 + $0x30] sm:$0xff] %vm1817, %v2667
  %2693 = vst.msk [vmem:[#allocation3 + $0x38] sm:$0xff] %vm1817, %v2668
  %2694 = vst.msk [vmem:[#allocation3 + $0x40] sm:$0xff] %vm1817, %v2669
  %2695 = vst.msk [vmem:[#allocation3 + $0x48] sm:$0xff] %vm1817, %v2670
  %2696 = vst.msk [vmem:[#allocation3 + $0x50] sm:$0xff] %vm1817, %v2671
  %2697 = vst.msk [vmem:[#allocation3 + $0x58] sm:$0xff] %vm1817, %v2672
  %2698 = vst.msk [vmem:[#allocation3 + $0x60] sm:$0xff] %vm1817, %v2673
  %2699 = vst.msk [vmem:[#allocation3 + $0x68] sm:$0xff] %vm1817, %v2674
  %2700 = vst.msk [vmem:[#allocation3 + $0x70] sm:$0xff] %vm1817, %v2675
  %2701 = vst.msk [vmem:[#allocation3 + $0x78] sm:$0xff] %vm1817, %v2676
  %2702 = vst.msk [vmem:[#allocation3 + $0x80] sm:$0xff] %vm1817, %v2677
  %2703 = vst.msk [vmem:[#allocation3 + $0x88] sm:$0xff] %vm1817, %v2678
  %2704 = vst.msk [vmem:[#allocation3 + $0x90] sm:$0xff] %vm1817, %v2679
  %2705 = vst.msk [vmem:[#allocation3 + $0x98] sm:$0xff] %vm1817, %v2680
  %2706 = vst.msk [vmem:[#allocation3 + $0xa0] sm:$0xff] %vm1817, %v2681
  %2707 = vst.msk [vmem:[#allocation3 + $0xa8] sm:$0xff] %vm1817, %v2682
  %2708 = vst.msk [vmem:[#allocation3 + $0xb0] sm:$0xff] %vm1817, %v2683
  %2709 = vst.msk [vmem:[#allocation3 + $0xb8] sm:$0xff] %vm1817, %v2684
  %2710 = vst.msk [vmem:[#allocation3 + $0xc0] sm:$0xff] %vm1817, %v2685
  %2711 = vst.msk [vmem:[#allocation3 + $0xc8] sm:$0xff] %vm1817, %v2686
  %2712 = vst.msk [vmem:[#allocation3 + $0xd0] sm:$0xff] %vm1817, %v2687
  %v2713 = vld [vmem:[#allocation3 + $0x5] sm:$0xff]
  %v2714 = vld [vmem:[#allocation3 + $0xd] sm:$0xff]
  %v2715 = vld [vmem:[#allocation3 + $0x15] sm:$0xff]
  %v2716 = vld [vmem:[#allocation3 + $0x1d] sm:$0xff]
  %v2717 = vld [vmem:[#allocation3 + $0x25] sm:$0xff]
  %v2718 = vld [vmem:[#allocation3 + $0x2d] sm:$0xff]
  %v2719 = vld [vmem:[#allocation3 + $0x35] sm:$0xff]
  %v2720 = vld [vmem:[#allocation3 + $0x3d] sm:$0xff]
  %v2721 = vld [vmem:[#allocation3 + $0x45] sm:$0xff]
  %v2722 = vld [vmem:[#allocation3 + $0x4d] sm:$0xff]
  %v2723 = vld [vmem:[#allocation3 + $0x55] sm:$0xff]
  %v2724 = vld [vmem:[#allocation3 + $0x5d] sm:$0xff]
  %v2725 = vld [vmem:[#allocation3 + $0x65] sm:$0xff]
  %v2726 = vld [vmem:[#allocation3 + $0x6d] sm:$0xff]
  %v2727 = vld [vmem:[#allocation3 + $0x75] sm:$0xff]
  %v2728 = vld [vmem:[#allocation3 + $0x7d] sm:$0xff]
  %v2729 = vld [vmem:[#allocation3 + $0x85] sm:$0xff]
  %v2730 = vld [vmem:[#allocation3 + $0x8d] sm:$0xff]
  %v2731 = vld [vmem:[#allocation3 + $0x95] sm:$0xff]
  %v2732 = vld [vmem:[#allocation3 + $0x9d] sm:$0xff]
  %v2733 = vld [vmem:[#allocation3 + $0xa5] sm:$0xff]
  %v2734 = vld [vmem:[#allocation3 + $0xad] sm:$0xff]
  %v2735 = vld [vmem:[#allocation3 + $0xb5] sm:$0xff]
  %v2736 = vld [vmem:[#allocation3 + $0xbd] sm:$0xff]
  %v2737 = vld [vmem:[#allocation3 + $0xc5] sm:$0xff]
  %v2738 = vpack.c.bf16 %v2713, %v2713
  %v2739 = vpack.c.bf16 %v2714, %v2714
  %v2740 = vpack.c.bf16 %v2715, %v2715
  %v2741 = vpack.c.bf16 %v2716, %v2716
  %v2742 = vpack.c.bf16 %v2717, %v2717
  %v2743 = vpack.c.bf16 %v2718, %v2718
  %v2744 = vpack.c.bf16 %v2719, %v2719
  %v2745 = vpack.c.bf16 %v2720, %v2720
  %v2746 = vpack.c.bf16 %v2721, %v2721
  %v2747 = vpack.c.bf16 %v2722, %v2722
  %v2748 = vpack.c.bf16 %v2723, %v2723
  %v2749 = vpack.c.bf16 %v2724, %v2724
  %v2750 = vpack.c.bf16 %v2725, %v2725
  %v2751 = vpack.c.bf16 %v2726, %v2726
  %v2752 = vpack.c.bf16 %v2727, %v2727
  %v2753 = vpack.c.bf16 %v2728, %v2728
  %v2754 = vpack.c.bf16 %v2729, %v2729
  %v2755 = vpack.c.bf16 %v2730, %v2730
  %v2756 = vpack.c.bf16 %v2731, %v2731
  %v2757 = vpack.c.bf16 %v2732, %v2732
  %v2758 = vpack.c.bf16 %v2733, %v2733
  %v2759 = vpack.c.bf16 %v2734, %v2734
  %v2760 = vpack.c.bf16 %v2735, %v2735
  %v2761 = vpack.c.bf16 %v2736, %v2736
  %v2762 = vpack.c.bf16 %v2737, %v2737
  %2763 = vst.msk [vmem:[#allocation2] sm:$0xf] %vm110, %v2738
  %2764 = vst.msk [vmem:[#allocation2 + $0x14] sm:$0xf] %vm110, %v2739
  %2765 = vst.msk [vmem:[#allocation2 + $0x28] sm:$0xf] %vm110, %v2740
  %2766 = vst.msk [vmem:[#allocation2 + $0x3c] sm:$0xf] %vm110, %v2741
  %2767 = vst.msk [vmem:[#allocation2 + $0x50] sm:$0xf] %vm110, %v2742
  %2768 = vst.msk [vmem:[#allocation2 + $0x64] sm:$0xf] %vm110, %v2743
  %2769 = vst.msk [vmem:[#allocation2 + $0x78] sm:$0xf] %vm110, %v2744
  %2770 = vst.msk [vmem:[#allocation2 + $0x8c] sm:$0xf] %vm110, %v2745
  %2771 = vst.msk [vmem:[#allocation2 + $0xa0] sm:$0xf] %vm110, %v2746
  %2772 = vst.msk [vmem:[#allocation2 + $0xb4] sm:$0xf] %vm110, %v2747
  %2773 = vst.msk [vmem:[#allocation2 + $0xc8] sm:$0xf] %vm110, %v2748
  %2774 = vst.msk [vmem:[#allocation2 + $0xdc] sm:$0xf] %vm110, %v2749
  %2775 = vst.msk [vmem:[#allocation2 + $0xf0] sm:$0xf] %vm110, %v2750
  %2776 = vst.msk [vmem:[#allocation2 + $0x104] sm:$0xf] %vm110, %v2751
  %2777 = vst.msk [vmem:[#allocation2 + $0x118] sm:$0xf] %vm110, %v2752
  %2778 = vst.msk [vmem:[#allocation2 + $0x12c] sm:$0xf] %vm110, %v2753
  %2779 = vst.msk [vmem:[#allocation2 + $0x140] sm:$0xf] %vm110, %v2754
  %2780 = vst.msk [vmem:[#allocation2 + $0x154] sm:$0xf] %vm110, %v2755
  %2781 = vst.msk [vmem:[#allocation2 + $0x168] sm:$0xf] %vm110, %v2756
  %2782 = vst.msk [vmem:[#allocation2 + $0x17c] sm:$0xf] %vm110, %v2757
  %2783 = vst.msk [vmem:[#allocation2 + $0x190] sm:$0xf] %vm110, %v2758
  %2784 = vst.msk [vmem:[#allocation2 + $0x1a4] sm:$0xf] %vm110, %v2759
  %2785 = vst.msk [vmem:[#allocation2 + $0x1b8] sm:$0xf] %vm110, %v2760
  %2786 = vst.msk [vmem:[#allocation2 + $0x1cc] sm:$0xf] %vm110, %v2761
  %2787 = vst.msk [vmem:[#allocation2 + $0x1e0] sm:$0xf] %vm110, %v2762
  %v2788 = vld [vmem:[#allocation3 + $0x6] sm:$0xff]
  %v2789 = vld [vmem:[#allocation3 + $0xe] sm:$0xff]
  %v2790 = vld [vmem:[#allocation3 + $0x16] sm:$0xff]
  %v2791 = vld [vmem:[#allocation3 + $0x1e] sm:$0xff]
  %v2792 = vld [vmem:[#allocation3 + $0x26] sm:$0xff]
  %v2793 = vld [vmem:[#allocation3 + $0x2e] sm:$0xff]
  %v2794 = vld [vmem:[#allocation3 + $0x36] sm:$0xff]
  %v2795 = vld [vmem:[#allocation3 + $0x3e] sm:$0xff]
  %v2796 = vld [vmem:[#allocation3 + $0x46] sm:$0xff]
  %v2797 = vld [vmem:[#allocation3 + $0x4e] sm:$0xff]
  %v2798 = vld [vmem:[#allocation3 + $0x56] sm:$0xff]
  %v2799 = vld [vmem:[#allocation3 + $0x5e] sm:$0xff]
  %v2800 = vld [vmem:[#allocation3 + $0x66] sm:$0xff]
  %v2801 = vld [vmem:[#allocation3 + $0x6e] sm:$0xff]
  %v2802 = vld [vmem:[#allocation3 + $0x76] sm:$0xff]
  %v2803 = vld [vmem:[#allocation3 + $0x7e] sm:$0xff]
  %v2804 = vld [vmem:[#allocation3 + $0x86] sm:$0xff]
  %v2805 = vld [vmem:[#allocation3 + $0x8e] sm:$0xff]
  %v2806 = vld [vmem:[#allocation3 + $0x96] sm:$0xff]
  %v2807 = vld [vmem:[#allocation3 + $0x9e] sm:$0xff]
  %v2808 = vld [vmem:[#allocation3 + $0xa6] sm:$0xff]
  %v2809 = vld [vmem:[#allocation3 + $0xae] sm:$0xff]
  %v2810 = vld [vmem:[#allocation3 + $0xb6] sm:$0xff]
  %v2811 = vld [vmem:[#allocation3 + $0xbe] sm:$0xff]
  %v2812 = vld [vmem:[#allocation3 + $0xc6] sm:$0xff]
  %v2813 = vpack.c.bf16 %v2788, %v2788
  %v2814 = vpack.c.bf16 %v2789, %v2789
  %v2815 = vpack.c.bf16 %v2790, %v2790
  %v2816 = vpack.c.bf16 %v2791, %v2791
  %v2817 = vpack.c.bf16 %v2792, %v2792
  %v2818 = vpack.c.bf16 %v2793, %v2793
  %v2819 = vpack.c.bf16 %v2794, %v2794
  %v2820 = vpack.c.bf16 %v2795, %v2795
  %v2821 = vpack.c.bf16 %v2796, %v2796
  %v2822 = vpack.c.bf16 %v2797, %v2797
  %v2823 = vpack.c.bf16 %v2798, %v2798
  %v2824 = vpack.c.bf16 %v2799, %v2799
  %v2825 = vpack.c.bf16 %v2800, %v2800
  %v2826 = vpack.c.bf16 %v2801, %v2801
  %v2827 = vpack.c.bf16 %v2802, %v2802
  %v2828 = vpack.c.bf16 %v2803, %v2803
  %v2829 = vpack.c.bf16 %v2804, %v2804
  %v2830 = vpack.c.bf16 %v2805, %v2805
  %v2831 = vpack.c.bf16 %v2806, %v2806
  %v2832 = vpack.c.bf16 %v2807, %v2807
  %v2833 = vpack.c.bf16 %v2808, %v2808
  %v2834 = vpack.c.bf16 %v2809, %v2809
  %v2835 = vpack.c.bf16 %v2810, %v2810
  %v2836 = vpack.c.bf16 %v2811, %v2811
  %v2837 = vpack.c.bf16 %v2812, %v2812
  %2863 = vrot.lane.b32.xlu0 %v2813, 64
  %v2864 = vpop.permute.xlu0 %2863
  %2865 = vrot.lane.b32.xlu0 %v2814, 64
  %v2866 = vpop.permute.xlu0 %2865
  %2867 = vrot.lane.b32.xlu0 %v2815, 64
  %v2868 = vpop.permute.xlu0 %2867
  %2869 = vrot.lane.b32.xlu0 %v2816, 64
  %v2870 = vpop.permute.xlu0 %2869
  %2871 = vrot.lane.b32.xlu0 %v2817, 64
  %v2872 = vpop.permute.xlu0 %2871
  %2873 = vrot.lane.b32.xlu0 %v2818, 64
  %v2874 = vpop.permute.xlu0 %2873
  %2875 = vrot.lane.b32.xlu0 %v2819, 64
  %v2876 = vpop.permute.xlu0 %2875
  %2877 = vrot.lane.b32.xlu0 %v2820, 64
  %v2878 = vpop.permute.xlu0 %2877
  %2879 = vrot.lane.b32.xlu0 %v2821, 64
  %v2880 = vpop.permute.xlu0 %2879
  %2881 = vrot.lane.b32.xlu0 %v2822, 64
  %v2882 = vpop.permute.xlu0 %2881
  %2883 = vrot.lane.b32.xlu0 %v2823, 64
  %v2884 = vpop.permute.xlu0 %2883
  %2885 = vrot.lane.b32.xlu0 %v2824, 64
  %v2886 = vpop.permute.xlu0 %2885
  %2887 = vrot.lane.b32.xlu0 %v2825, 64
  %v2888 = vpop.permute.xlu0 %2887
  %2889 = vrot.lane.b32.xlu0 %v2826, 64
  %v2890 = vpop.permute.xlu0 %2889
  %2891 = vrot.lane.b32.xlu0 %v2827, 64
  %v2892 = vpop.permute.xlu0 %2891
  %2893 = vrot.lane.b32.xlu0 %v2828, 64
  %v2894 = vpop.permute.xlu0 %2893
  %2895 = vrot.lane.b32.xlu0 %v2829, 64
  %v2896 = vpop.permute.xlu0 %2895
  %2897 = vrot.lane.b32.xlu0 %v2830, 64
  %v2898 = vpop.permute.xlu0 %2897
  %2899 = vrot.lane.b32.xlu0 %v2831, 64
  %v2900 = vpop.permute.xlu0 %2899
  %2901 = vrot.lane.b32.xlu0 %v2832, 64
  %v2902 = vpop.permute.xlu0 %2901
  %2903 = vrot.lane.b32.xlu0 %v2833, 64
  %v2904 = vpop.permute.xlu0 %2903
  %2905 = vrot.lane.b32.xlu0 %v2834, 64
  %v2906 = vpop.permute.xlu0 %2905
  %2907 = vrot.lane.b32.xlu0 %v2835, 64
  %v2908 = vpop.permute.xlu0 %2907
  %2909 = vrot.lane.b32.xlu0 %v2836, 64
  %v2910 = vpop.permute.xlu0 %2909
  %2911 = vrot.lane.b32.xlu0 %v2837, 64
  %v2912 = vpop.permute.xlu0 %2911
  %2938 = vst.msk [vmem:[#allocation2] sm:$0xf] %vm286, %v2864
  %2939 = vst.msk [vmem:[#allocation2 + $0x14] sm:$0xf] %vm286, %v2866
  %2940 = vst.msk [vmem:[#allocation2 + $0x28] sm:$0xf] %vm286, %v2868
  %2941 = vst.msk [vmem:[#allocation2 + $0x3c] sm:$0xf] %vm286, %v2870
  %2942 = vst.msk [vmem:[#allocation2 + $0x50] sm:$0xf] %vm286, %v2872
  %2943 = vst.msk [vmem:[#allocation2 + $0x64] sm:$0xf] %vm286, %v2874
  %2944 = vst.msk [vmem:[#allocation2 + $0x78] sm:$0xf] %vm286, %v2876
  %2945 = vst.msk [vmem:[#allocation2 + $0x8c] sm:$0xf] %vm286, %v2878
  %2946 = vst.msk [vmem:[#allocation2 + $0xa0] sm:$0xf] %vm286, %v2880
  %2947 = vst.msk [vmem:[#allocation2 + $0xb4] sm:$0xf] %vm286, %v2882
  %2948 = vst.msk [vmem:[#allocation2 + $0xc8] sm:$0xf] %vm286, %v2884
  %2949 = vst.msk [vmem:[#allocation2 + $0xdc] sm:$0xf] %vm286, %v2886
  %2950 = vst.msk [vmem:[#allocation2 + $0xf0] sm:$0xf] %vm286, %v2888
  %2951 = vst.msk [vmem:[#allocation2 + $0x104] sm:$0xf] %vm286, %v2890
  %2952 = vst.msk [vmem:[#allocation2 + $0x118] sm:$0xf] %vm286, %v2892
  %2953 = vst.msk [vmem:[#allocation2 + $0x12c] sm:$0xf] %vm286, %v2894
  %2954 = vst.msk [vmem:[#allocation2 + $0x140] sm:$0xf] %vm286, %v2896
  %2955 = vst.msk [vmem:[#allocation2 + $0x154] sm:$0xf] %vm286, %v2898
  %2956 = vst.msk [vmem:[#allocation2 + $0x168] sm:$0xf] %vm286, %v2900
  %2957 = vst.msk [vmem:[#allocation2 + $0x17c] sm:$0xf] %vm286, %v2902
  %2958 = vst.msk [vmem:[#allocation2 + $0x190] sm:$0xf] %vm286, %v2904
  %2959 = vst.msk [vmem:[#allocation2 + $0x1a4] sm:$0xf] %vm286, %v2906
  %2960 = vst.msk [vmem:[#allocation2 + $0x1b8] sm:$0xf] %vm286, %v2908
  %2961 = vst.msk [vmem:[#allocation2 + $0x1cc] sm:$0xf] %vm286, %v2910
  %2962 = vst.msk [vmem:[#allocation2 + $0x1e0] sm:$0xf] %vm286, %v2912
  %v2963 = vld [vmem:[#allocation3 + $0x7] sm:$0xff]
  %v2964 = vld [vmem:[#allocation3 + $0xf] sm:$0xff]
  %v2965 = vld [vmem:[#allocation3 + $0x17] sm:$0xff]
  %v2966 = vld [vmem:[#allocation3 + $0x1f] sm:$0xff]
  %v2967 = vld [vmem:[#allocation3 + $0x27] sm:$0xff]
  %v2968 = vld [vmem:[#allocation3 + $0x2f] sm:$0xff]
  %v2969 = vld [vmem:[#allocation3 + $0x37] sm:$0xff]
  %v2970 = vld [vmem:[#allocation3 + $0x3f] sm:$0xff]
  %v2971 = vld [vmem:[#allocation3 + $0x47] sm:$0xff]
  %v2972 = vld [vmem:[#allocation3 + $0x4f] sm:$0xff]
  %v2973 = vld [vmem:[#allocation3 + $0x57] sm:$0xff]
  %v2974 = vld [vmem:[#allocation3 + $0x5f] sm:$0xff]
  %v2975 = vld [vmem:[#allocation3 + $0x67] sm:$0xff]
  %v2976 = vld [vmem:[#allocation3 + $0x6f] sm:$0xff]
  %v2977 = vld [vmem:[#allocation3 + $0x77] sm:$0xff]
  %v2978 = vld [vmem:[#allocation3 + $0x7f] sm:$0xff]
  %v2979 = vld [vmem:[#allocation3 + $0x87] sm:$0xff]
  %v2980 = vld [vmem:[#allocation3 + $0x8f] sm:$0xff]
  %v2981 = vld [vmem:[#allocation3 + $0x97] sm:$0xff]
  %v2982 = vld [vmem:[#allocation3 + $0x9f] sm:$0xff]
  %v2983 = vld [vmem:[#allocation3 + $0xa7] sm:$0xff]
  %v2984 = vld [vmem:[#allocation3 + $0xaf] sm:$0xff]
  %v2985 = vld [vmem:[#allocation3 + $0xb7] sm:$0xff]
  %v2986 = vld [vmem:[#allocation3 + $0xbf] sm:$0xff]
  %v2987 = vld [vmem:[#allocation3 + $0xc7] sm:$0xff]
  %v2988 = vpack.c.bf16 %v2963, %v2963
  %v2989 = vpack.c.bf16 %v2964, %v2964
  %v2990 = vpack.c.bf16 %v2965, %v2965
  %v2991 = vpack.c.bf16 %v2966, %v2966
  %v2992 = vpack.c.bf16 %v2967, %v2967
  %v2993 = vpack.c.bf16 %v2968, %v2968
  %v2994 = vpack.c.bf16 %v2969, %v2969
  %v2995 = vpack.c.bf16 %v2970, %v2970
  %v2996 = vpack.c.bf16 %v2971, %v2971
  %v2997 = vpack.c.bf16 %v2972, %v2972
  %v2998 = vpack.c.bf16 %v2973, %v2973
  %v2999 = vpack.c.bf16 %v2974, %v2974
  %v3000 = vpack.c.bf16 %v2975, %v2975
  %v3001 = vpack.c.bf16 %v2976, %v2976
  %v3002 = vpack.c.bf16 %v2977, %v2977
  %v3003 = vpack.c.bf16 %v2978, %v2978
  %v3004 = vpack.c.bf16 %v2979, %v2979
  %v3005 = vpack.c.bf16 %v2980, %v2980
  %v3006 = vpack.c.bf16 %v2981, %v2981
  %v3007 = vpack.c.bf16 %v2982, %v2982
  %v3008 = vpack.c.bf16 %v2983, %v2983
  %v3009 = vpack.c.bf16 %v2984, %v2984
  %v3010 = vpack.c.bf16 %v2985, %v2985
  %v3011 = vpack.c.bf16 %v2986, %v2986
  %v3012 = vpack.c.bf16 %v2987, %v2987
  %3013 = vst.msk [vmem:[#allocation2 + $0x4] sm:$0xf] %vm110, %v2988
  %3014 = vst.msk [vmem:[#allocation2 + $0x18] sm:$0xf] %vm110, %v2989
  %3015 = vst.msk [vmem:[#allocation2 + $0x2c] sm:$0xf] %vm110, %v2990
  %3016 = vst.msk [vmem:[#allocation2 + $0x40] sm:$0xf] %vm110, %v2991
  %3017 = vst.msk [vmem:[#allocation2 + $0x54] sm:$0xf] %vm110, %v2992
  %3018 = vst.msk [vmem:[#allocation2 + $0x68] sm:$0xf] %vm110, %v2993
  %3019 = vst.msk [vmem:[#allocation2 + $0x7c] sm:$0xf] %vm110, %v2994
  %3020 = vst.msk [vmem:[#allocation2 + $0x90] sm:$0xf] %vm110, %v2995
  %3021 = vst.msk [vmem:[#allocation2 + $0xa4] sm:$0xf] %vm110, %v2996
  %3022 = vst.msk [vmem:[#allocation2 + $0xb8] sm:$0xf] %vm110, %v2997
  %3023 = vst.msk [vmem:[#allocation2 + $0xcc] sm:$0xf] %vm110, %v2998
  %3024 = vst.msk [vmem:[#allocation2 + $0xe0] sm:$0xf] %vm110, %v2999
  %3025 = vst.msk [vmem:[#allocation2 + $0xf4] sm:$0xf] %vm110, %v3000
  %3026 = vst.msk [vmem:[#allocation2 + $0x108] sm:$0xf] %vm110, %v3001
  %3027 = vst.msk [vmem:[#allocation2 + $0x11c] sm:$0xf] %vm110, %v3002
  %3028 = vst.msk [vmem:[#allocation2 + $0x130] sm:$0xf] %vm110, %v3003
  %3029 = vst.msk [vmem:[#allocation2 + $0x144] sm:$0xf] %vm110, %v3004
  %3030 = vst.msk [vmem:[#allocation2 + $0x158] sm:$0xf] %vm110, %v3005
  %3031 = vst.msk [vmem:[#allocation2 + $0x16c] sm:$0xf] %vm110, %v3006
  %3032 = vst.msk [vmem:[#allocation2 + $0x180] sm:$0xf] %vm110, %v3007
  %3033 = vst.msk [vmem:[#allocation2 + $0x194] sm:$0xf] %vm110, %v3008
  %3034 = vst.msk [vmem:[#allocation2 + $0x1a8] sm:$0xf] %vm110, %v3009
  %3035 = vst.msk [vmem:[#allocation2 + $0x1bc] sm:$0xf] %vm110, %v3010
  %3036 = vst.msk [vmem:[#allocation2 + $0x1d0] sm:$0xf] %vm110, %v3011
  %3037 = vst.msk [vmem:[#allocation2 + $0x1e4] sm:$0xf] %vm110, %v3012
  %v3038 = vld [vmem:[#allocation3 + $0xf] sm:$0xff]
  %v3039 = vld [vmem:[#allocation3 + $0x17] sm:$0xff]
  %v3040 = vld [vmem:[#allocation3 + $0x1f] sm:$0xff]
  %v3041 = vld [vmem:[#allocation3 + $0x27] sm:$0xff]
  %v3042 = vld [vmem:[#allocation3 + $0x2f] sm:$0xff]
  %v3043 = vld [vmem:[#allocation3 + $0x37] sm:$0xff]
  %v3044 = vld [vmem:[#allocation3 + $0x3f] sm:$0xff]
  %v3045 = vld [vmem:[#allocation3 + $0x47] sm:$0xff]
  %v3046 = vld [vmem:[#allocation3 + $0x4f] sm:$0xff]
  %v3047 = vld [vmem:[#allocation3 + $0x57] sm:$0xff]
  %v3048 = vld [vmem:[#allocation3 + $0x5f] sm:$0xff]
  %v3049 = vld [vmem:[#allocation3 + $0x67] sm:$0xff]
  %v3050 = vld [vmem:[#allocation3 + $0x6f] sm:$0xff]
  %v3051 = vld [vmem:[#allocation3 + $0x77] sm:$0xff]
  %v3052 = vld [vmem:[#allocation3 + $0x7f] sm:$0xff]
  %v3053 = vld [vmem:[#allocation3 + $0x87] sm:$0xff]
  %v3054 = vld [vmem:[#allocation3 + $0x8f] sm:$0xff]
  %v3055 = vld [vmem:[#allocation3 + $0x97] sm:$0xff]
  %v3056 = vld [vmem:[#allocation3 + $0x9f] sm:$0xff]
  %v3057 = vld [vmem:[#allocation3 + $0xa7] sm:$0xff]
  %v3058 = vld [vmem:[#allocation3 + $0xaf] sm:$0xff]
  %v3059 = vld [vmem:[#allocation3 + $0xb7] sm:$0xff]
  %v3060 = vld [vmem:[#allocation3 + $0xbf] sm:$0xff]
  %v3061 = vld [vmem:[#allocation3 + $0xc7] sm:$0xff]
  %v3062 = vld [vmem:[#allocation3 + $0xcf] sm:$0xff]
  %v3063 = vpack.c.bf16 %v3038, %v3038
  %v3064 = vpack.c.bf16 %v3039, %v3039
  %v3065 = vpack.c.bf16 %v3040, %v3040
  %v3066 = vpack.c.bf16 %v3041, %v3041
  %v3067 = vpack.c.bf16 %v3042, %v3042
  %v3068 = vpack.c.bf16 %v3043, %v3043
  %v3069 = vpack.c.bf16 %v3044, %v3044
  %v3070 = vpack.c.bf16 %v3045, %v3045
  %v3071 = vpack.c.bf16 %v3046, %v3046
  %v3072 = vpack.c.bf16 %v3047, %v3047
  %v3073 = vpack.c.bf16 %v3048, %v3048
  %v3074 = vpack.c.bf16 %v3049, %v3049
  %v3075 = vpack.c.bf16 %v3050, %v3050
  %v3076 = vpack.c.bf16 %v3051, %v3051
  %v3077 = vpack.c.bf16 %v3052, %v3052
  %v3078 = vpack.c.bf16 %v3053, %v3053
  %v3079 = vpack.c.bf16 %v3054, %v3054
  %v3080 = vpack.c.bf16 %v3055, %v3055
  %v3081 = vpack.c.bf16 %v3056, %v3056
  %v3082 = vpack.c.bf16 %v3057, %v3057
  %v3083 = vpack.c.bf16 %v3058, %v3058
  %v3084 = vpack.c.bf16 %v3059, %v3059
  %v3085 = vpack.c.bf16 %v3060, %v3060
  %v3086 = vpack.c.bf16 %v3061, %v3061
  %v3087 = vpack.c.bf16 %v3062, %v3062
  %3113 = vrot.lane.b32.xlu0 %v3063, 64
  %v3114 = vpop.permute.xlu0 %3113
  %3115 = vrot.lane.b32.xlu0 %v3064, 64
  %v3116 = vpop.permute.xlu0 %3115
  %3117 = vrot.lane.b32.xlu0 %v3065, 64
  %v3118 = vpop.permute.xlu0 %3117
  %3119 = vrot.lane.b32.xlu0 %v3066, 64
  %v3120 = vpop.permute.xlu0 %3119
  %3121 = vrot.lane.b32.xlu0 %v3067, 64
  %v3122 = vpop.permute.xlu0 %3121
  %3123 = vrot.lane.b32.xlu0 %v3068, 64
  %v3124 = vpop.permute.xlu0 %3123
  %3125 = vrot.lane.b32.xlu0 %v3069, 64
  %v3126 = vpop.permute.xlu0 %3125
  %3127 = vrot.lane.b32.xlu0 %v3070, 64
  %v3128 = vpop.permute.xlu0 %3127
  %3129 = vrot.lane.b32.xlu0 %v3071, 64
  %v3130 = vpop.permute.xlu0 %3129
  %3131 = vrot.lane.b32.xlu0 %v3072, 64
  %v3132 = vpop.permute.xlu0 %3131
  %3133 = vrot.lane.b32.xlu0 %v3073, 64
  %v3134 = vpop.permute.xlu0 %3133
  %3135 = vrot.lane.b32.xlu0 %v3074, 64
  %v3136 = vpop.permute.xlu0 %3135
  %3137 = vrot.lane.b32.xlu0 %v3075, 64
  %v3138 = vpop.permute.xlu0 %3137
  %3139 = vrot.lane.b32.xlu0 %v3076, 64
  %v3140 = vpop.permute.xlu0 %3139
  %3141 = vrot.lane.b32.xlu0 %v3077, 64
  %v3142 = vpop.permute.xlu0 %3141
  %3143 = vrot.lane.b32.xlu0 %v3078, 64
  %v3144 = vpop.permute.xlu0 %3143
  %3145 = vrot.lane.b32.xlu0 %v3079, 64
  %v3146 = vpop.permute.xlu0 %3145
  %3147 = vrot.lane.b32.xlu0 %v3080, 64
  %v3148 = vpop.permute.xlu0 %3147
  %3149 = vrot.lane.b32.xlu0 %v3081, 64
  %v3150 = vpop.permute.xlu0 %3149
  %3151 = vrot.lane.b32.xlu0 %v3082, 64
  %v3152 = vpop.permute.xlu0 %3151
  %3153 = vrot.lane.b32.xlu0 %v3083, 64
  %v3154 = vpop.permute.xlu0 %3153
  %3155 = vrot.lane.b32.xlu0 %v3084, 64
  %v3156 = vpop.permute.xlu0 %3155
  %3157 = vrot.lane.b32.xlu0 %v3085, 64
  %v3158 = vpop.permute.xlu0 %3157
  %3159 = vrot.lane.b32.xlu0 %v3086, 64
  %v3160 = vpop.permute.xlu0 %3159
  %3161 = vrot.lane.b32.xlu0 %v3087, 64
  %v3162 = vpop.permute.xlu0 %3161
  %3188 = vst.msk [vmem:[#allocation2 + $0x4] sm:$0xf] %vm286, %v3114
  %3189 = vst.msk [vmem:[#allocation2 + $0x18] sm:$0xf] %vm286, %v3116
  %3190 = vst.msk [vmem:[#allocation2 + $0x2c] sm:$0xf] %vm286, %v3118
  %3191 = vst.msk [vmem:[#allocation2 + $0x40] sm:$0xf] %vm286, %v3120
  %3192 = vst.msk [vmem:[#allocation2 + $0x54] sm:$0xf] %vm286, %v3122
  %3193 = vst.msk [vmem:[#allocation2 + $0x68] sm:$0xf] %vm286, %v3124
  %3194 = vst.msk [vmem:[#allocation2 + $0x7c] sm:$0xf] %vm286, %v3126
  %3195 = vst.msk [vmem:[#allocation2 + $0x90] sm:$0xf] %vm286, %v3128
  %3196 = vst.msk [vmem:[#allocation2 + $0xa4] sm:$0xf] %vm286, %v3130
  %3197 = vst.msk [vmem:[#allocation2 + $0xb8] sm:$0xf] %vm286, %v3132
  %3198 = vst.msk [vmem:[#allocation2 + $0xcc] sm:$0xf] %vm286, %v3134
  %3199 = vst.msk [vmem:[#allocation2 + $0xe0] sm:$0xf] %vm286, %v3136
  %3200 = vst.msk [vmem:[#allocation2 + $0xf4] sm:$0xf] %vm286, %v3138
  %3201 = vst.msk [vmem:[#allocation2 + $0x108] sm:$0xf] %vm286, %v3140
  %3202 = vst.msk [vmem:[#allocation2 + $0x11c] sm:$0xf] %vm286, %v3142
  %3203 = vst.msk [vmem:[#allocation2 + $0x130] sm:$0xf] %vm286, %v3144
  %3204 = vst.msk [vmem:[#allocation2 + $0x144] sm:$0xf] %vm286, %v3146
  %3205 = vst.msk [vmem:[#allocation2 + $0x158] sm:$0xf] %vm286, %v3148
  %3206 = vst.msk [vmem:[#allocation2 + $0x16c] sm:$0xf] %vm286, %v3150
  %3207 = vst.msk [vmem:[#allocation2 + $0x180] sm:$0xf] %vm286, %v3152
  %3208 = vst.msk [vmem:[#allocation2 + $0x194] sm:$0xf] %vm286, %v3154
  %3209 = vst.msk [vmem:[#allocation2 + $0x1a8] sm:$0xf] %vm286, %v3156
  %3210 = vst.msk [vmem:[#allocation2 + $0x1bc] sm:$0xf] %vm286, %v3158
  %3211 = vst.msk [vmem:[#allocation2 + $0x1d0] sm:$0xf] %vm286, %v3160
  %3212 = vst.msk [vmem:[#allocation2 + $0x1e4] sm:$0xf] %vm286, %v3162
  %v3213 = vld [vmem:[#allocation3 + $0x10] sm:$0xff]
  %v3214 = vld [vmem:[#allocation3 + $0x18] sm:$0xff]
  %v3215 = vld [vmem:[#allocation3 + $0x20] sm:$0xff]
  %v3216 = vld [vmem:[#allocation3 + $0x28] sm:$0xff]
  %v3217 = vld [vmem:[#allocation3 + $0x30] sm:$0xff]
  %v3218 = vld [vmem:[#allocation3 + $0x38] sm:$0xff]
  %v3219 = vld [vmem:[#allocation3 + $0x40] sm:$0xff]
  %v3220 = vld [vmem:[#allocation3 + $0x48] sm:$0xff]
  %v3221 = vld [vmem:[#allocation3 + $0x50] sm:$0xff]
  %v3222 = vld [vmem:[#allocation3 + $0x58] sm:$0xff]
  %v3223 = vld [vmem:[#allocation3 + $0x60] sm:$0xff]
  %v3224 = vld [vmem:[#allocation3 + $0x68] sm:$0xff]
  %v3225 = vld [vmem:[#allocation3 + $0x70] sm:$0xff]
  %v3226 = vld [vmem:[#allocation3 + $0x78] sm:$0xff]
  %v3227 = vld [vmem:[#allocation3 + $0x80] sm:$0xff]
  %v3228 = vld [vmem:[#allocation3 + $0x88] sm:$0xff]
  %v3229 = vld [vmem:[#allocation3 + $0x90] sm:$0xff]
  %v3230 = vld [vmem:[#allocation3 + $0x98] sm:$0xff]
  %v3231 = vld [vmem:[#allocation3 + $0xa0] sm:$0xff]
  %v3232 = vld [vmem:[#allocation3 + $0xa8] sm:$0xff]
  %v3233 = vld [vmem:[#allocation3 + $0xb0] sm:$0xff]
  %v3234 = vld [vmem:[#allocation3 + $0xb8] sm:$0xff]
  %v3235 = vld [vmem:[#allocation3 + $0xc0] sm:$0xff]
  %v3236 = vld [vmem:[#allocation3 + $0xc8] sm:$0xff]
  %v3237 = vld [vmem:[#allocation3 + $0xd0] sm:$0xff]
  %v3238 = vpack.c.bf16 %v3213, %v3213
  %v3239 = vpack.c.bf16 %v3214, %v3214
  %v3240 = vpack.c.bf16 %v3215, %v3215
  %v3241 = vpack.c.bf16 %v3216, %v3216
  %v3242 = vpack.c.bf16 %v3217, %v3217
  %v3243 = vpack.c.bf16 %v3218, %v3218
  %v3244 = vpack.c.bf16 %v3219, %v3219
  %v3245 = vpack.c.bf16 %v3220, %v3220
  %v3246 = vpack.c.bf16 %v3221, %v3221
  %v3247 = vpack.c.bf16 %v3222, %v3222
  %v3248 = vpack.c.bf16 %v3223, %v3223
  %v3249 = vpack.c.bf16 %v3224, %v3224
  %v3250 = vpack.c.bf16 %v3225, %v3225
  %v3251 = vpack.c.bf16 %v3226, %v3226
  %v3252 = vpack.c.bf16 %v3227, %v3227
  %v3253 = vpack.c.bf16 %v3228, %v3228
  %v3254 = vpack.c.bf16 %v3229, %v3229
  %v3255 = vpack.c.bf16 %v3230, %v3230
  %v3256 = vpack.c.bf16 %v3231, %v3231
  %v3257 = vpack.c.bf16 %v3232, %v3232
  %v3258 = vpack.c.bf16 %v3233, %v3233
  %v3259 = vpack.c.bf16 %v3234, %v3234
  %v3260 = vpack.c.bf16 %v3235, %v3235
  %v3261 = vpack.c.bf16 %v3236, %v3236
  %v3262 = vpack.c.bf16 %v3237, %v3237
  %3263 = vst.msk [vmem:[#allocation2 + $0x8] sm:$0xf] %vm110, %v3238
  %3264 = vst.msk [vmem:[#allocation2 + $0x1c] sm:$0xf] %vm110, %v3239
  %3265 = vst.msk [vmem:[#allocation2 + $0x30] sm:$0xf] %vm110, %v3240
  %3266 = vst.msk [vmem:[#allocation2 + $0x44] sm:$0xf] %vm110, %v3241
  %3267 = vst.msk [vmem:[#allocation2 + $0x58] sm:$0xf] %vm110, %v3242
  %3268 = vst.msk [vmem:[#allocation2 + $0x6c] sm:$0xf] %vm110, %v3243
  %3269 = vst.msk [vmem:[#allocation2 + $0x80] sm:$0xf] %vm110, %v3244
  %3270 = vst.msk [vmem:[#allocation2 + $0x94] sm:$0xf] %vm110, %v3245
  %3271 = vst.msk [vmem:[#allocation2 + $0xa8] sm:$0xf] %vm110, %v3246
  %3272 = vst.msk [vmem:[#allocation2 + $0xbc] sm:$0xf] %vm110, %v3247
  %3273 = vst.msk [vmem:[#allocation2 + $0xd0] sm:$0xf] %vm110, %v3248
  %3274 = vst.msk [vmem:[#allocation2 + $0xe4] sm:$0xf] %vm110, %v3249
  %3275 = vst.msk [vmem:[#allocation2 + $0xf8] sm:$0xf] %vm110, %v3250
  %3276 = vst.msk [vmem:[#allocation2 + $0x10c] sm:$0xf] %vm110, %v3251
  %3277 = vst.msk [vmem:[#allocation2 + $0x120] sm:$0xf] %vm110, %v3252
  %3278 = vst.msk [vmem:[#allocation2 + $0x134] sm:$0xf] %vm110, %v3253
  %3279 = vst.msk [vmem:[#allocation2 + $0x148] sm:$0xf] %vm110, %v3254
  %3280 = vst.msk [vmem:[#allocation2 + $0x15c] sm:$0xf] %vm110, %v3255
  %3281 = vst.msk [vmem:[#allocation2 + $0x170] sm:$0xf] %vm110, %v3256
  %3282 = vst.msk [vmem:[#allocation2 + $0x184] sm:$0xf] %vm110, %v3257
  %3283 = vst.msk [vmem:[#allocation2 + $0x198] sm:$0xf] %vm110, %v3258
  %3284 = vst.msk [vmem:[#allocation2 + $0x1ac] sm:$0xf] %vm110, %v3259
  %3285 = vst.msk [vmem:[#allocation2 + $0x1c0] sm:$0xf] %vm110, %v3260
  %3286 = vst.msk [vmem:[#allocation2 + $0x1d4] sm:$0xf] %vm110, %v3261
  %3287 = vst.msk [vmem:[#allocation2 + $0x1e8] sm:$0xf] %vm110, %v3262
  %v3288 = vld [vmem:[#allocation3 + $0x11] sm:$0xff]
  %v3289 = vld [vmem:[#allocation3 + $0x19] sm:$0xff]
  %v3290 = vld [vmem:[#allocation3 + $0x21] sm:$0xff]
  %v3291 = vld [vmem:[#allocation3 + $0x29] sm:$0xff]
  %v3292 = vld [vmem:[#allocation3 + $0x31] sm:$0xff]
  %v3293 = vld [vmem:[#allocation3 + $0x39] sm:$0xff]
  %v3294 = vld [vmem:[#allocation3 + $0x41] sm:$0xff]
  %v3295 = vld [vmem:[#allocation3 + $0x49] sm:$0xff]
  %v3296 = vld [vmem:[#allocation3 + $0x51] sm:$0xff]
  %v3297 = vld [vmem:[#allocation3 + $0x59] sm:$0xff]
  %v3298 = vld [vmem:[#allocation3 + $0x61] sm:$0xff]
  %v3299 = vld [vmem:[#allocation3 + $0x69] sm:$0xff]
  %v3300 = vld [vmem:[#allocation3 + $0x71] sm:$0xff]
  %v3301 = vld [vmem:[#allocation3 + $0x79] sm:$0xff]
  %v3302 = vld [vmem:[#allocation3 + $0x81] sm:$0xff]
  %v3303 = vld [vmem:[#allocation3 + $0x89] sm:$0xff]
  %v3304 = vld [vmem:[#allocation3 + $0x91] sm:$0xff]
  %v3305 = vld [vmem:[#allocation3 + $0x99] sm:$0xff]
  %v3306 = vld [vmem:[#allocation3 + $0xa1] sm:$0xff]
  %v3307 = vld [vmem:[#allocation3 + $0xa9] sm:$0xff]
  %v3308 = vld [vmem:[#allocation3 + $0xb1] sm:$0xff]
  %v3309 = vld [vmem:[#allocation3 + $0xb9] sm:$0xff]
  %v3310 = vld [vmem:[#allocation3 + $0xc1] sm:$0xff]
  %v3311 = vld [vmem:[#allocation3 + $0xc9] sm:$0xff]
  %v3312 = vld [vmem:[#allocation3 + $0xd1] sm:$0xff]
  %v3313 = vpack.c.bf16 %v3288, %v3288
  %v3314 = vpack.c.bf16 %v3289, %v3289
  %v3315 = vpack.c.bf16 %v3290, %v3290
  %v3316 = vpack.c.bf16 %v3291, %v3291
  %v3317 = vpack.c.bf16 %v3292, %v3292
  %v3318 = vpack.c.bf16 %v3293, %v3293
  %v3319 = vpack.c.bf16 %v3294, %v3294
  %v3320 = vpack.c.bf16 %v3295, %v3295
  %v3321 = vpack.c.bf16 %v3296, %v3296
  %v3322 = vpack.c.bf16 %v3297, %v3297
  %v3323 = vpack.c.bf16 %v3298, %v3298
  %v3324 = vpack.c.bf16 %v3299, %v3299
  %v3325 = vpack.c.bf16 %v3300, %v3300
  %v3326 = vpack.c.bf16 %v3301, %v3301
  %v3327 = vpack.c.bf16 %v3302, %v3302
  %v3328 = vpack.c.bf16 %v3303, %v3303
  %v3329 = vpack.c.bf16 %v3304, %v3304
  %v3330 = vpack.c.bf16 %v3305, %v3305
  %v3331 = vpack.c.bf16 %v3306, %v3306
  %v3332 = vpack.c.bf16 %v3307, %v3307
  %v3333 = vpack.c.bf16 %v3308, %v3308
  %v3334 = vpack.c.bf16 %v3309, %v3309
  %v3335 = vpack.c.bf16 %v3310, %v3310
  %v3336 = vpack.c.bf16 %v3311, %v3311
  %v3337 = vpack.c.bf16 %v3312, %v3312
  %3363 = vrot.lane.b32.xlu0 %v3313, 64
  %v3364 = vpop.permute.xlu0 %3363
  %3365 = vrot.lane.b32.xlu0 %v3314, 64
  %v3366 = vpop.permute.xlu0 %3365
  %3367 = vrot.lane.b32.xlu0 %v3315, 64
  %v3368 = vpop.permute.xlu0 %3367
  %3369 = vrot.lane.b32.xlu0 %v3316, 64
  %v3370 = vpop.permute.xlu0 %3369
  %3371 = vrot.lane.b32.xlu0 %v3317, 64
  %v3372 = vpop.permute.xlu0 %3371
  %3373 = vrot.lane.b32.xlu0 %v3318, 64
  %v3374 = vpop.permute.xlu0 %3373
  %3375 = vrot.lane.b32.xlu0 %v3319, 64
  %v3376 = vpop.permute.xlu0 %3375
  %3377 = vrot.lane.b32.xlu0 %v3320, 64
  %v3378 = vpop.permute.xlu0 %3377
  %3379 = vrot.lane.b32.xlu0 %v3321, 64
  %v3380 = vpop.permute.xlu0 %3379
  %3381 = vrot.lane.b32.xlu0 %v3322, 64
  %v3382 = vpop.permute.xlu0 %3381
  %3383 = vrot.lane.b32.xlu0 %v3323, 64
  %v3384 = vpop.permute.xlu0 %3383
  %3385 = vrot.lane.b32.xlu0 %v3324, 64
  %v3386 = vpop.permute.xlu0 %3385
  %3387 = vrot.lane.b32.xlu0 %v3325, 64
  %v3388 = vpop.permute.xlu0 %3387
  %3389 = vrot.lane.b32.xlu0 %v3326, 64
  %v3390 = vpop.permute.xlu0 %3389
  %3391 = vrot.lane.b32.xlu0 %v3327, 64
  %v3392 = vpop.permute.xlu0 %3391
  %3393 = vrot.lane.b32.xlu0 %v3328, 64
  %v3394 = vpop.permute.xlu0 %3393
  %3395 = vrot.lane.b32.xlu0 %v3329, 64
  %v3396 = vpop.permute.xlu0 %3395
  %3397 = vrot.lane.b32.xlu0 %v3330, 64
  %v3398 = vpop.permute.xlu0 %3397
  %3399 = vrot.lane.b32.xlu0 %v3331, 64
  %v3400 = vpop.permute.xlu0 %3399
  %3401 = vrot.lane.b32.xlu0 %v3332, 64
  %v3402 = vpop.permute.xlu0 %3401
  %3403 = vrot.lane.b32.xlu0 %v3333, 64
  %v3404 = vpop.permute.xlu0 %3403
  %3405 = vrot.lane.b32.xlu0 %v3334, 64
  %v3406 = vpop.permute.xlu0 %3405
  %3407 = vrot.lane.b32.xlu0 %v3335, 64
  %v3408 = vpop.permute.xlu0 %3407
  %3409 = vrot.lane.b32.xlu0 %v3336, 64
  %v3410 = vpop.permute.xlu0 %3409
  %3411 = vrot.lane.b32.xlu0 %v3337, 64
  %v3412 = vpop.permute.xlu0 %3411
  %3438 = vst.msk [vmem:[#allocation2 + $0x8] sm:$0xf] %vm286, %v3364
  %3439 = vst.msk [vmem:[#allocation2 + $0x1c] sm:$0xf] %vm286, %v3366
  %3440 = vst.msk [vmem:[#allocation2 + $0x30] sm:$0xf] %vm286, %v3368
  %3441 = vst.msk [vmem:[#allocation2 + $0x44] sm:$0xf] %vm286, %v3370
  %3442 = vst.msk [vmem:[#allocation2 + $0x58] sm:$0xf] %vm286, %v3372
  %3443 = vst.msk [vmem:[#allocation2 + $0x6c] sm:$0xf] %vm286, %v3374
  %3444 = vst.msk [vmem:[#allocation2 + $0x80] sm:$0xf] %vm286, %v3376
  %3445 = vst.msk [vmem:[#allocation2 + $0x94] sm:$0xf] %vm286, %v3378
  %3446 = vst.msk [vmem:[#allocation2 + $0xa8] sm:$0xf] %vm286, %v3380
  %3447 = vst.msk [vmem:[#allocation2 + $0xbc] sm:$0xf] %vm286, %v3382
  %3448 = vst.msk [vmem:[#allocation2 + $0xd0] sm:$0xf] %vm286, %v3384
  %3449 = vst.msk [vmem:[#allocation2 + $0xe4] sm:$0xf] %vm286, %v3386
  %3450 = vst.msk [vmem:[#allocation2 + $0xf8] sm:$0xf] %vm286, %v3388
  %3451 = vst.msk [vmem:[#allocation2 + $0x10c] sm:$0xf] %vm286, %v3390
  %3452 = vst.msk [vmem:[#allocation2 + $0x120] sm:$0xf] %vm286, %v3392
  %3453 = vst.msk [vmem:[#allocation2 + $0x134] sm:$0xf] %vm286, %v3394
  %3454 = vst.msk [vmem:[#allocation2 + $0x148] sm:$0xf] %vm286, %v3396
  %3455 = vst.msk [vmem:[#allocation2 + $0x15c] sm:$0xf] %vm286, %v3398
  %3456 = vst.msk [vmem:[#allocation2 + $0x170] sm:$0xf] %vm286, %v3400
  %3457 = vst.msk [vmem:[#allocation2 + $0x184] sm:$0xf] %vm286, %v3402
  %3458 = vst.msk [vmem:[#allocation2 + $0x198] sm:$0xf] %vm286, %v3404
  %3459 = vst.msk [vmem:[#allocation2 + $0x1ac] sm:$0xf] %vm286, %v3406
  %3460 = vst.msk [vmem:[#allocation2 + $0x1c0] sm:$0xf] %vm286, %v3408
  %3461 = vst.msk [vmem:[#allocation2 + $0x1d4] sm:$0xf] %vm286, %v3410
  %3462 = vst.msk [vmem:[#allocation2 + $0x1e8] sm:$0xf] %vm286, %v3412
  %v3463 = vld [vmem:[#allocation3 + $0x19] sm:$0xff]
  %v3464 = vld [vmem:[#allocation3 + $0x21] sm:$0xff]
  %v3465 = vld [vmem:[#allocation3 + $0x29] sm:$0xff]
  %v3466 = vld [vmem:[#allocation3 + $0x31] sm:$0xff]
  %v3467 = vld [vmem:[#allocation3 + $0x39] sm:$0xff]
  %v3468 = vld [vmem:[#allocation3 + $0x41] sm:$0xff]
  %v3469 = vld [vmem:[#allocation3 + $0x49] sm:$0xff]
  %v3470 = vld [vmem:[#allocation3 + $0x51] sm:$0xff]
  %v3471 = vld [vmem:[#allocation3 + $0x59] sm:$0xff]
  %v3472 = vld [vmem:[#allocation3 + $0x61] sm:$0xff]
  %v3473 = vld [vmem:[#allocation3 + $0x69] sm:$0xff]
  %v3474 = vld [vmem:[#allocation3 + $0x71] sm:$0xff]
  %v3475 = vld [vmem:[#allocation3 + $0x79] sm:$0xff]
  %v3476 = vld [vmem:[#allocation3 + $0x81] sm:$0xff]
  %v3477 = vld [vmem:[#allocation3 + $0x89] sm:$0xff]
  %v3478 = vld [vmem:[#allocation3 + $0x91] sm:$0xff]
  %v3479 = vld [vmem:[#allocation3 + $0x99] sm:$0xff]
  %v3480 = vld [vmem:[#allocation3 + $0xa1] sm:$0xff]
  %v3481 = vld [vmem:[#allocation3 + $0xa9] sm:$0xff]
  %v3482 = vld [vmem:[#allocation3 + $0xb1] sm:$0xff]
  %v3483 = vld [vmem:[#allocation3 + $0xb9] sm:$0xff]
  %v3484 = vld [vmem:[#allocation3 + $0xc1] sm:$0xff]
  %v3485 = vld [vmem:[#allocation3 + $0xc9] sm:$0xff]
  %v3486 = vld [vmem:[#allocation3 + $0xd1] sm:$0xff]
  %v3487 = vld [vmem:[#allocation3 + $0xd9] sm:$0xff]
  %v3488 = vpack.c.bf16 %v3463, %v3463
  %v3489 = vpack.c.bf16 %v3464, %v3464
  %v3490 = vpack.c.bf16 %v3465, %v3465
  %v3491 = vpack.c.bf16 %v3466, %v3466
  %v3492 = vpack.c.bf16 %v3467, %v3467
  %v3493 = vpack.c.bf16 %v3468, %v3468
  %v3494 = vpack.c.bf16 %v3469, %v3469
  %v3495 = vpack.c.bf16 %v3470, %v3470
  %v3496 = vpack.c.bf16 %v3471, %v3471
  %v3497 = vpack.c.bf16 %v3472, %v3472
  %v3498 = vpack.c.bf16 %v3473, %v3473
  %v3499 = vpack.c.bf16 %v3474, %v3474
  %v3500 = vpack.c.bf16 %v3475, %v3475
  %v3501 = vpack.c.bf16 %v3476, %v3476
  %v3502 = vpack.c.bf16 %v3477, %v3477
  %v3503 = vpack.c.bf16 %v3478, %v3478
  %v3504 = vpack.c.bf16 %v3479, %v3479
  %v3505 = vpack.c.bf16 %v3480, %v3480
  %v3506 = vpack.c.bf16 %v3481, %v3481
  %v3507 = vpack.c.bf16 %v3482, %v3482
  %v3508 = vpack.c.bf16 %v3483, %v3483
  %v3509 = vpack.c.bf16 %v3484, %v3484
  %v3510 = vpack.c.bf16 %v3485, %v3485
  %v3511 = vpack.c.bf16 %v3486, %v3486
  %v3512 = vpack.c.bf16 %v3487, %v3487
  %3513 = vst.msk [vmem:[#allocation2 + $0xc] sm:$0xf] %vm110, %v3488
  %3514 = vst.msk [vmem:[#allocation2 + $0x20] sm:$0xf] %vm110, %v3489
  %3515 = vst.msk [vmem:[#allocation2 + $0x34] sm:$0xf] %vm110, %v3490
  %3516 = vst.msk [vmem:[#allocation2 + $0x48] sm:$0xf] %vm110, %v3491
  %3517 = vst.msk [vmem:[#allocation2 + $0x5c] sm:$0xf] %vm110, %v3492
  %3518 = vst.msk [vmem:[#allocation2 + $0x70] sm:$0xf] %vm110, %v3493
  %3519 = vst.msk [vmem:[#allocation2 + $0x84] sm:$0xf] %vm110, %v3494
  %3520 = vst.msk [vmem:[#allocation2 + $0x98] sm:$0xf] %vm110, %v3495
  %3521 = vst.msk [vmem:[#allocation2 + $0xac] sm:$0xf] %vm110, %v3496
  %3522 = vst.msk [vmem:[#allocation2 + $0xc0] sm:$0xf] %vm110, %v3497
  %3523 = vst.msk [vmem:[#allocation2 + $0xd4] sm:$0xf] %vm110, %v3498
  %3524 = vst.msk [vmem:[#allocation2 + $0xe8] sm:$0xf] %vm110, %v3499
  %3525 = vst.msk [vmem:[#allocation2 + $0xfc] sm:$0xf] %vm110, %v3500
  %3526 = vst.msk [vmem:[#allocation2 + $0x110] sm:$0xf] %vm110, %v3501
  %3527 = vst.msk [vmem:[#allocation2 + $0x124] sm:$0xf] %vm110, %v3502
  %3528 = vst.msk [vmem:[#allocation2 + $0x138] sm:$0xf] %vm110, %v3503
  %3529 = vst.msk [vmem:[#allocation2 + $0x14c] sm:$0xf] %vm110, %v3504
  %3530 = vst.msk [vmem:[#allocation2 + $0x160] sm:$0xf] %vm110, %v3505
  %3531 = vst.msk [vmem:[#allocation2 + $0x174] sm:$0xf] %vm110, %v3506
  %3532 = vst.msk [vmem:[#allocation2 + $0x188] sm:$0xf] %vm110, %v3507
  %3533 = vst.msk [vmem:[#allocation2 + $0x19c] sm:$0xf] %vm110, %v3508
  %3534 = vst.msk [vmem:[#allocation2 + $0x1b0] sm:$0xf] %vm110, %v3509
  %3535 = vst.msk [vmem:[#allocation2 + $0x1c4] sm:$0xf] %vm110, %v3510
  %3536 = vst.msk [vmem:[#allocation2 + $0x1d8] sm:$0xf] %vm110, %v3511
  %3537 = vst.msk [vmem:[#allocation2 + $0x1ec] sm:$0xf] %vm110, %v3512
  %v3538 = vld [vmem:[#allocation3 + $0x1a] sm:$0xff]
  %v3539 = vld [vmem:[#allocation3 + $0x22] sm:$0xff]
  %v3540 = vld [vmem:[#allocation3 + $0x2a] sm:$0xff]
  %v3541 = vld [vmem:[#allocation3 + $0x32] sm:$0xff]
  %v3542 = vld [vmem:[#allocation3 + $0x3a] sm:$0xff]
  %v3543 = vld [vmem:[#allocation3 + $0x42] sm:$0xff]
  %v3544 = vld [vmem:[#allocation3 + $0x4a] sm:$0xff]
  %v3545 = vld [vmem:[#allocation3 + $0x52] sm:$0xff]
  %v3546 = vld [vmem:[#allocation3 + $0x5a] sm:$0xff]
  %v3547 = vld [vmem:[#allocation3 + $0x62] sm:$0xff]
  %v3548 = vld [vmem:[#allocation3 + $0x6a] sm:$0xff]
  %v3549 = vld [vmem:[#allocation3 + $0x72] sm:$0xff]
  %v3550 = vld [vmem:[#allocation3 + $0x7a] sm:$0xff]
  %v3551 = vld [vmem:[#allocation3 + $0x82] sm:$0xff]
  %v3552 = vld [vmem:[#allocation3 + $0x8a] sm:$0xff]
  %v3553 = vld [vmem:[#allocation3 + $0x92] sm:$0xff]
  %v3554 = vld [vmem:[#allocation3 + $0x9a] sm:$0xff]
  %v3555 = vld [vmem:[#allocation3 + $0xa2] sm:$0xff]
  %v3556 = vld [vmem:[#allocation3 + $0xaa] sm:$0xff]
  %v3557 = vld [vmem:[#allocation3 + $0xb2] sm:$0xff]
  %v3558 = vld [vmem:[#allocation3 + $0xba] sm:$0xff]
  %v3559 = vld [vmem:[#allocation3 + $0xc2] sm:$0xff]
  %v3560 = vld [vmem:[#allocation3 + $0xca] sm:$0xff]
  %v3561 = vld [vmem:[#allocation3 + $0xd2] sm:$0xff]
  %v3562 = vld [vmem:[#allocation3 + $0xda] sm:$0xff]
  %v3563 = vpack.c.bf16 %v3538, %v3538
  %v3564 = vpack.c.bf16 %v3539, %v3539
  %v3565 = vpack.c.bf16 %v3540, %v3540
  %v3566 = vpack.c.bf16 %v3541, %v3541
  %v3567 = vpack.c.bf16 %v3542, %v3542
  %v3568 = vpack.c.bf16 %v3543, %v3543
  %v3569 = vpack.c.bf16 %v3544, %v3544
  %v3570 = vpack.c.bf16 %v3545, %v3545
  %v3571 = vpack.c.bf16 %v3546, %v3546
  %v3572 = vpack.c.bf16 %v3547, %v3547
  %v3573 = vpack.c.bf16 %v3548, %v3548
  %v3574 = vpack.c.bf16 %v3549, %v3549
  %v3575 = vpack.c.bf16 %v3550, %v3550
  %v3576 = vpack.c.bf16 %v3551, %v3551
  %v3577 = vpack.c.bf16 %v3552, %v3552
  %v3578 = vpack.c.bf16 %v3553, %v3553
  %v3579 = vpack.c.bf16 %v3554, %v3554
  %v3580 = vpack.c.bf16 %v3555, %v3555
  %v3581 = vpack.c.bf16 %v3556, %v3556
  %v3582 = vpack.c.bf16 %v3557, %v3557
  %v3583 = vpack.c.bf16 %v3558, %v3558
  %v3584 = vpack.c.bf16 %v3559, %v3559
  %v3585 = vpack.c.bf16 %v3560, %v3560
  %v3586 = vpack.c.bf16 %v3561, %v3561
  %v3587 = vpack.c.bf16 %v3562, %v3562
  %3613 = vrot.lane.b32.xlu0 %v3563, 64
  %v3614 = vpop.permute.xlu0 %3613
  %3615 = vrot.lane.b32.xlu0 %v3564, 64
  %v3616 = vpop.permute.xlu0 %3615
  %3617 = vrot.lane.b32.xlu0 %v3565, 64
  %v3618 = vpop.permute.xlu0 %3617
  %3619 = vrot.lane.b32.xlu0 %v3566, 64
  %v3620 = vpop.permute.xlu0 %3619
  %3621 = vrot.lane.b32.xlu0 %v3567, 64
  %v3622 = vpop.permute.xlu0 %3621
  %3623 = vrot.lane.b32.xlu0 %v3568, 64
  %v3624 = vpop.permute.xlu0 %3623
  %3625 = vrot.lane.b32.xlu0 %v3569, 64
  %v3626 = vpop.permute.xlu0 %3625
  %3627 = vrot.lane.b32.xlu0 %v3570, 64
  %v3628 = vpop.permute.xlu0 %3627
  %3629 = vrot.lane.b32.xlu0 %v3571, 64
  %v3630 = vpop.permute.xlu0 %3629
  %3631 = vrot.lane.b32.xlu0 %v3572, 64
  %v3632 = vpop.permute.xlu0 %3631
  %3633 = vrot.lane.b32.xlu0 %v3573, 64
  %v3634 = vpop.permute.xlu0 %3633
  %3635 = vrot.lane.b32.xlu0 %v3574, 64
  %v3636 = vpop.permute.xlu0 %3635
  %3637 = vrot.lane.b32.xlu0 %v3575, 64
  %v3638 = vpop.permute.xlu0 %3637
  %3639 = vrot.lane.b32.xlu0 %v3576, 64
  %v3640 = vpop.permute.xlu0 %3639
  %3641 = vrot.lane.b32.xlu0 %v3577, 64
  %v3642 = vpop.permute.xlu0 %3641
  %3643 = vrot.lane.b32.xlu0 %v3578, 64
  %v3644 = vpop.permute.xlu0 %3643
  %3645 = vrot.lane.b32.xlu0 %v3579, 64
  %v3646 = vpop.permute.xlu0 %3645
  %3647 = vrot.lane.b32.xlu0 %v3580, 64
  %v3648 = vpop.permute.xlu0 %3647
  %3649 = vrot.lane.b32.xlu0 %v3581, 64
  %v3650 = vpop.permute.xlu0 %3649
  %3651 = vrot.lane.b32.xlu0 %v3582, 64
  %v3652 = vpop.permute.xlu0 %3651
  %3653 = vrot.lane.b32.xlu0 %v3583, 64
  %v3654 = vpop.permute.xlu0 %3653
  %3655 = vrot.lane.b32.xlu0 %v3584, 64
  %v3656 = vpop.permute.xlu0 %3655
  %3657 = vrot.lane.b32.xlu0 %v3585, 64
  %v3658 = vpop.permute.xlu0 %3657
  %3659 = vrot.lane.b32.xlu0 %v3586, 64
  %v3660 = vpop.permute.xlu0 %3659
  %3661 = vrot.lane.b32.xlu0 %v3587, 64
  %v3662 = vpop.permute.xlu0 %3661
  %3688 = vst.msk [vmem:[#allocation2 + $0xc] sm:$0xf] %vm286, %v3614
  %3689 = vst.msk [vmem:[#allocation2 + $0x20] sm:$0xf] %vm286, %v3616
  %3690 = vst.msk [vmem:[#allocation2 + $0x34] sm:$0xf] %vm286, %v3618
  %3691 = vst.msk [vmem:[#allocation2 + $0x48] sm:$0xf] %vm286, %v3620
  %3692 = vst.msk [vmem:[#allocation2 + $0x5c] sm:$0xf] %vm286, %v3622
  %3693 = vst.msk [vmem:[#allocation2 + $0x70] sm:$0xf] %vm286, %v3624
  %3694 = vst.msk [vmem:[#allocation2 + $0x84] sm:$0xf] %vm286, %v3626
  %3695 = vst.msk [vmem:[#allocation2 + $0x98] sm:$0xf] %vm286, %v3628
  %3696 = vst.msk [vmem:[#allocation2 + $0xac] sm:$0xf] %vm286, %v3630
  %3697 = vst.msk [vmem:[#allocation2 + $0xc0] sm:$0xf] %vm286, %v3632
  %3698 = vst.msk [vmem:[#allocation2 + $0xd4] sm:$0xf] %vm286, %v3634
  %3699 = vst.msk [vmem:[#allocation2 + $0xe8] sm:$0xf] %vm286, %v3636
  %3700 = vst.msk [vmem:[#allocation2 + $0xfc] sm:$0xf] %vm286, %v3638
  %3701 = vst.msk [vmem:[#allocation2 + $0x110] sm:$0xf] %vm286, %v3640
  %3702 = vst.msk [vmem:[#allocation2 + $0x124] sm:$0xf] %vm286, %v3642
  %3703 = vst.msk [vmem:[#allocation2 + $0x138] sm:$0xf] %vm286, %v3644
  %3704 = vst.msk [vmem:[#allocation2 + $0x14c] sm:$0xf] %vm286, %v3646
  %3705 = vst.msk [vmem:[#allocation2 + $0x160] sm:$0xf] %vm286, %v3648
  %3706 = vst.msk [vmem:[#allocation2 + $0x174] sm:$0xf] %vm286, %v3650
  %3707 = vst.msk [vmem:[#allocation2 + $0x188] sm:$0xf] %vm286, %v3652
  %3708 = vst.msk [vmem:[#allocation2 + $0x19c] sm:$0xf] %vm286, %v3654
  %3709 = vst.msk [vmem:[#allocation2 + $0x1b0] sm:$0xf] %vm286, %v3656
  %3710 = vst.msk [vmem:[#allocation2 + $0x1c4] sm:$0xf] %vm286, %v3658
  %3711 = vst.msk [vmem:[#allocation2 + $0x1d8] sm:$0xf] %vm286, %v3660
  %3712 = vst.msk [vmem:[#allocation2 + $0x1ec] sm:$0xf] %vm286, %v3662
  %v3713 = vld [vmem:[#allocation3 + $0x1b] sm:$0xff]
  %v3714 = vld [vmem:[#allocation3 + $0x23] sm:$0xff]
  %v3715 = vld [vmem:[#allocation3 + $0x2b] sm:$0xff]
  %v3716 = vld [vmem:[#allocation3 + $0x33] sm:$0xff]
  %v3717 = vld [vmem:[#allocation3 + $0x3b] sm:$0xff]
  %v3718 = vld [vmem:[#allocation3 + $0x43] sm:$0xff]
  %v3719 = vld [vmem:[#allocation3 + $0x4b] sm:$0xff]
  %v3720 = vld [vmem:[#allocation3 + $0x53] sm:$0xff]
  %v3721 = vld [vmem:[#allocation3 + $0x5b] sm:$0xff]
  %v3722 = vld [vmem:[#allocation3 + $0x63] sm:$0xff]
  %v3723 = vld [vmem:[#allocation3 + $0x6b] sm:$0xff]
  %v3724 = vld [vmem:[#allocation3 + $0x73] sm:$0xff]
  %v3725 = vld [vmem:[#allocation3 + $0x7b] sm:$0xff]
  %v3726 = vld [vmem:[#allocation3 + $0x83] sm:$0xff]
  %v3727 = vld [vmem:[#allocation3 + $0x8b] sm:$0xff]
  %v3728 = vld [vmem:[#allocation3 + $0x93] sm:$0xff]
  %v3729 = vld [vmem:[#allocation3 + $0x9b] sm:$0xff]
  %v3730 = vld [vmem:[#allocation3 + $0xa3] sm:$0xff]
  %v3731 = vld [vmem:[#allocation3 + $0xab] sm:$0xff]
  %v3732 = vld [vmem:[#allocation3 + $0xb3] sm:$0xff]
  %v3733 = vld [vmem:[#allocation3 + $0xbb] sm:$0xff]
  %v3734 = vld [vmem:[#allocation3 + $0xc3] sm:$0xff]
  %v3735 = vld [vmem:[#allocation3 + $0xcb] sm:$0xff]
  %v3736 = vld [vmem:[#allocation3 + $0xd3] sm:$0xff]
  %v3737 = vld [vmem:[#allocation3 + $0xdb] sm:$0xff]
  %v3738 = vpack.c.bf16 %v3713, %v3713
  %v3739 = vpack.c.bf16 %v3714, %v3714
  %v3740 = vpack.c.bf16 %v3715, %v3715
  %v3741 = vpack.c.bf16 %v3716, %v3716
  %v3742 = vpack.c.bf16 %v3717, %v3717
  %v3743 = vpack.c.bf16 %v3718, %v3718
  %v3744 = vpack.c.bf16 %v3719, %v3719
  %v3745 = vpack.c.bf16 %v3720, %v3720
  %v3746 = vpack.c.bf16 %v3721, %v3721
  %v3747 = vpack.c.bf16 %v3722, %v3722
  %v3748 = vpack.c.bf16 %v3723, %v3723
  %v3749 = vpack.c.bf16 %v3724, %v3724
  %v3750 = vpack.c.bf16 %v3725, %v3725
  %v3751 = vpack.c.bf16 %v3726, %v3726
  %v3752 = vpack.c.bf16 %v3727, %v3727
  %v3753 = vpack.c.bf16 %v3728, %v3728
  %v3754 = vpack.c.bf16 %v3729, %v3729
  %v3755 = vpack.c.bf16 %v3730, %v3730
  %v3756 = vpack.c.bf16 %v3731, %v3731
  %v3757 = vpack.c.bf16 %v3732, %v3732
  %v3758 = vpack.c.bf16 %v3733, %v3733
  %v3759 = vpack.c.bf16 %v3734, %v3734
  %v3760 = vpack.c.bf16 %v3735, %v3735
  %v3761 = vpack.c.bf16 %v3736, %v3736
  %v3762 = vpack.c.bf16 %v3737, %v3737
  %3763 = vst.msk [vmem:[#allocation2 + $0x10] sm:$0xf] %vm110, %v3738
  %3764 = vst.msk [vmem:[#allocation2 + $0x24] sm:$0xf] %vm110, %v3739
  %3765 = vst.msk [vmem:[#allocation2 + $0x38] sm:$0xf] %vm110, %v3740
  %3766 = vst.msk [vmem:[#allocation2 + $0x4c] sm:$0xf] %vm110, %v3741
  %3767 = vst.msk [vmem:[#allocation2 + $0x60] sm:$0xf] %vm110, %v3742
  %3768 = vst.msk [vmem:[#allocation2 + $0x74] sm:$0xf] %vm110, %v3743
  %3769 = vst.msk [vmem:[#allocation2 + $0x88] sm:$0xf] %vm110, %v3744
  %3770 = vst.msk [vmem:[#allocation2 + $0x9c] sm:$0xf] %vm110, %v3745
  %3771 = vst.msk [vmem:[#allocation2 + $0xb0] sm:$0xf] %vm110, %v3746
  %3772 = vst.msk [vmem:[#allocation2 + $0xc4] sm:$0xf] %vm110, %v3747
  %3773 = vst.msk [vmem:[#allocation2 + $0xd8] sm:$0xf] %vm110, %v3748
  %3774 = vst.msk [vmem:[#allocation2 + $0xec] sm:$0xf] %vm110, %v3749
  %3775 = vst.msk [vmem:[#allocation2 + $0x100] sm:$0xf] %vm110, %v3750
  %3776 = vst.msk [vmem:[#allocation2 + $0x114] sm:$0xf] %vm110, %v3751
  %3777 = vst.msk [vmem:[#allocation2 + $0x128] sm:$0xf] %vm110, %v3752
  %3778 = vst.msk [vmem:[#allocation2 + $0x13c] sm:$0xf] %vm110, %v3753
  %3779 = vst.msk [vmem:[#allocation2 + $0x150] sm:$0xf] %vm110, %v3754
  %3780 = vst.msk [vmem:[#allocation2 + $0x164] sm:$0xf] %vm110, %v3755
  %3781 = vst.msk [vmem:[#allocation2 + $0x178] sm:$0xf] %vm110, %v3756
  %3782 = vst.msk [vmem:[#allocation2 + $0x18c] sm:$0xf] %vm110, %v3757
  %3783 = vst.msk [vmem:[#allocation2 + $0x1a0] sm:$0xf] %vm110, %v3758
  %3784 = vst.msk [vmem:[#allocation2 + $0x1b4] sm:$0xf] %vm110, %v3759
  %3785 = vst.msk [vmem:[#allocation2 + $0x1c8] sm:$0xf] %vm110, %v3760
  %3786 = vst.msk [vmem:[#allocation2 + $0x1dc] sm:$0xf] %vm110, %v3761
  %3787 = vst.msk [vmem:[#allocation2 + $0x1f0] sm:$0xf] %vm110, %v3762
  %v3788 = vld [vmem:[#allocation2] sm:$0xff]
  %v3789 = vld [vmem:[#allocation2 + $0x8] sm:$0xff]
  %v3790 = vld [vmem:[#allocation2 + $0x10] sm:$0xf]
  %v3791 = vld [vmem:[#allocation2 + $0x14] sm:$0xff]
  %v3792 = vld [vmem:[#allocation2 + $0x1c] sm:$0xff]
  %v3793 = vld [vmem:[#allocation2 + $0x24] sm:$0xf]
  %v3794 = vld [vmem:[#allocation2 + $0x28] sm:$0xff]
  %v3795 = vld [vmem:[#allocation2 + $0x30] sm:$0xff]
  %v3796 = vld [vmem:[#allocation2 + $0x38] sm:$0xf]
  %v3797 = vld [vmem:[#allocation2 + $0x3c] sm:$0xff]
  %v3798 = vld [vmem:[#allocation2 + $0x44] sm:$0xff]
  %v3799 = vld [vmem:[#allocation2 + $0x4c] sm:$0xf]
  %v3800 = vld [vmem:[#allocation2 + $0x50] sm:$0xff]
  %v3801 = vld [vmem:[#allocation2 + $0x58] sm:$0xff]
  %v3802 = vld [vmem:[#allocation2 + $0x60] sm:$0xf]
  %v3803 = vld [vmem:[#allocation2 + $0x64] sm:$0xff]
  %v3804 = vld [vmem:[#allocation2 + $0x6c] sm:$0xff]
  %v3805 = vld [vmem:[#allocation2 + $0x74] sm:$0xf]
  %v3806 = vld [vmem:[#allocation2 + $0x78] sm:$0xff]
  %v3807 = vld [vmem:[#allocation2 + $0x80] sm:$0xff]
  %v3808 = vld [vmem:[#allocation2 + $0x88] sm:$0xf]
  %v3809 = vld [vmem:[#allocation2 + $0x8c] sm:$0xff]
  %v3810 = vld [vmem:[#allocation2 + $0x94] sm:$0xff]
  %v3811 = vld [vmem:[#allocation2 + $0x9c] sm:$0xf]
  %v3812 = vld [vmem:[#allocation2 + $0xa0] sm:$0xff]
  %v3813 = vld [vmem:[#allocation2 + $0xa8] sm:$0xff]
  %v3814 = vld [vmem:[#allocation2 + $0xb0] sm:$0xf]
  %v3815 = vld [vmem:[#allocation2 + $0xb4] sm:$0xff]
  %v3816 = vld [vmem:[#allocation2 + $0xbc] sm:$0xff]
  %v3817 = vld [vmem:[#allocation2 + $0xc4] sm:$0xf]
  %v3818 = vld [vmem:[#allocation2 + $0xc8] sm:$0xff]
  %v3819 = vld [vmem:[#allocation2 + $0xd0] sm:$0xff]
  %v3820 = vld [vmem:[#allocation2 + $0xd8] sm:$0xf]
  %v3821 = vld [vmem:[#allocation2 + $0xdc] sm:$0xff]
  %v3822 = vld [vmem:[#allocation2 + $0xe4] sm:$0xff]
  %v3823 = vld [vmem:[#allocation2 + $0xec] sm:$0xf]
  %v3824 = vld [vmem:[#allocation2 + $0xf0] sm:$0xff]
  %v3825 = vld [vmem:[#allocation2 + $0xf8] sm:$0xff]
  %v3826 = vld [vmem:[#allocation2 + $0x100] sm:$0xf]
  %v3827 = vld [vmem:[#allocation2 + $0x104] sm:$0xff]
  %v3828 = vld [vmem:[#allocation2 + $0x10c] sm:$0xff]
  %v3829 = vld [vmem:[#allocation2 + $0x114] sm:$0xf]
  %v3830 = vld [vmem:[#allocation2 + $0x118] sm:$0xff]
  %v3831 = vld [vmem:[#allocation2 + $0x120] sm:$0xff]
  %v3832 = vld [vmem:[#allocation2 + $0x128] sm:$0xf]
  %v3833 = vld [vmem:[#allocation2 + $0x12c] sm:$0xff]
  %v3834 = vld [vmem:[#allocation2 + $0x134] sm:$0xff]
  %v3835 = vld [vmem:[#allocation2 + $0x13c] sm:$0xf]
  %v3836 = vld [vmem:[#allocation2 + $0x140] sm:$0xff]
  %v3837 = vld [vmem:[#allocation2 + $0x148] sm:$0xff]
  %v3838 = vld [vmem:[#allocation2 + $0x150] sm:$0xf]
  %v3839 = vld [vmem:[#allocation2 + $0x154] sm:$0xff]
  %v3840 = vld [vmem:[#allocation2 + $0x15c] sm:$0xff]
  %v3841 = vld [vmem:[#allocation2 + $0x164] sm:$0xf]
  %v3842 = vld [vmem:[#allocation2 + $0x168] sm:$0xff]
  %v3843 = vld [vmem:[#allocation2 + $0x170] sm:$0xff]
  %v3844 = vld [vmem:[#allocation2 + $0x178] sm:$0xf]
  %v3845 = vld [vmem:[#allocation2 + $0x17c] sm:$0xff]
  %v3846 = vld [vmem:[#allocation2 + $0x184] sm:$0xff]
  %v3847 = vld [vmem:[#allocation2 + $0x18c] sm:$0xf]
  %v3848 = vld [vmem:[#allocation2 + $0x190] sm:$0xff]
  %v3849 = vld [vmem:[#allocation2 + $0x198] sm:$0xff]
  %v3850 = vld [vmem:[#allocation2 + $0x1a0] sm:$0xf]
  %v3851 = vld [vmem:[#allocation2 + $0x1a4] sm:$0xff]
  %v3852 = vld [vmem:[#allocation2 + $0x1ac] sm:$0xff]
  %v3853 = vld [vmem:[#allocation2 + $0x1b4] sm:$0xf]
  %v3854 = vld [vmem:[#allocation2 + $0x1b8] sm:$0xff]
  %v3855 = vld [vmem:[#allocation2 + $0x1c0] sm:$0xff]
  %v3856 = vld [vmem:[#allocation2 + $0x1c8] sm:$0xf]
  %v3857 = vld [vmem:[#allocation2 + $0x1cc] sm:$0xff]
  %v3858 = vld [vmem:[#allocation2 + $0x1d4] sm:$0xff]
  %v3859 = vld [vmem:[#allocation2 + $0x1dc] sm:$0xf]
  %v3860 = vld [vmem:[#allocation2 + $0x1e0] sm:$0xff]
  %v3861 = vld [vmem:[#allocation2 + $0x1e8] sm:$0xff]
  %v3862 = vld [vmem:[#allocation2 + $0x1f0] sm:$0xf]
  %v3863 = vld [vmem:[%s5] sm:$0xf]
  %v3864 = vld [vmem:[%s5 + $0x4] sm:$0xf]
  %v3865 = vld [vmem:[%s5 + $0x8] sm:$0xf]
  %v3866 = vld [vmem:[%s5 + $0xc] sm:$0xf]
  %v3867 = vld [vmem:[%s5 + $0x10] sm:$0xf]
  %v3868 = vld [vmem:[%s5 + $0x14] sm:$0xf]
  %v3869 = vld [vmem:[%s5 + $0x18] sm:$0xf]
  %v3870 = vld [vmem:[%s5 + $0x1c] sm:$0xf]
  %v3871 = vld [vmem:[%s5 + $0x20] sm:$0xf]
  %v3872 = vld [vmem:[%s5 + $0x24] sm:$0xf]
  %v3873 = vld [vmem:[%s5 + $0x28] sm:$0xf]
  %v3874 = vld [vmem:[%s5 + $0x2c] sm:$0xf]
  %v3875 = vld [vmem:[%s5 + $0x30] sm:$0xf]
  %v3876 = vld [vmem:[%s5 + $0x34] sm:$0xf]
  %v3877 = vld [vmem:[%s5 + $0x38] sm:$0xf]
  %v3878 = vld [vmem:[%s5 + $0x3c] sm:$0xf]
  %v3879 = vld [vmem:[%s5 + $0x40] sm:$0xf]
  %v3880 = vld [vmem:[%s5 + $0x44] sm:$0xf]
  %v3881 = vld [vmem:[%s5 + $0x48] sm:$0xf]
  %v3882 = vld [vmem:[%s5 + $0x4c] sm:$0xf]
  %v3883 = vld [vmem:[%s5 + $0x50] sm:$0xf]
  %v3884 = vld [vmem:[%s5 + $0x54] sm:$0xf]
  %v3885 = vld [vmem:[%s5 + $0x58] sm:$0xf]
  %v3886 = vld [vmem:[%s5 + $0x5c] sm:$0xf]
  %v3887 = vld [vmem:[%s5 + $0x60] sm:$0xf]
  %v3888 = vld [vmem:[%s5 + $0x64] sm:$0xf]
  %v3889 = vld [vmem:[%s5 + $0x68] sm:$0xf]
  %v3890 = vld [vmem:[%s5 + $0x6c] sm:$0xf]
  %v3891 = vld [vmem:[%s5 + $0x70] sm:$0xf]
  %v3892 = vld [vmem:[%s5 + $0x74] sm:$0xf]
  %v3893 = vld [vmem:[%s5 + $0x78] sm:$0xf]
  %v3894 = vld [vmem:[%s5 + $0x7c] sm:$0xf]
  %v3895 = vld [vmem:[%s5 + $0x80] sm:$0xf]
  %v3896 = vld [vmem:[%s5 + $0x84] sm:$0xf]
  %v3897 = vld [vmem:[%s5 + $0x88] sm:$0xf]
  %v3898 = vld [vmem:[%s5 + $0x8c] sm:$0xf]
  %v3899 = vld [vmem:[%s5 + $0x90] sm:$0xf]
  %v3900 = vld [vmem:[%s5 + $0x94] sm:$0xf]
  %v3901 = vld [vmem:[%s5 + $0x98] sm:$0xf]
  %v3902 = vld [vmem:[%s5 + $0x9c] sm:$0xf]
  %v3903 = vld [vmem:[%s5 + $0xa0] sm:$0xf]
  %v3904 = vld [vmem:[%s5 + $0xa4] sm:$0xf]
  %v3905 = vld [vmem:[%s5 + $0xa8] sm:$0xf]
  %v3906 = vld [vmem:[%s5 + $0xac] sm:$0xf]
  %v3907 = vld [vmem:[%s5 + $0xb0] sm:$0xf]
  %v3908 = vld [vmem:[%s5 + $0xb4] sm:$0xf]
  %v3909 = vld [vmem:[%s5 + $0xb8] sm:$0xf]
  %v3910 = vld [vmem:[%s5 + $0xbc] sm:$0xf]
  %v3911 = vld [vmem:[%s5 + $0xc0] sm:$0xf]
  %v3912 = vld [vmem:[%s5 + $0xc4] sm:$0xf]
  %v3913 = vld [vmem:[%s5 + $0xc8] sm:$0xf]
  %v3914 = vld [vmem:[%s5 + $0xcc] sm:$0xf]
  %v3915 = vld [vmem:[%s5 + $0xd0] sm:$0xf]
  %v3916 = vld [vmem:[%s5 + $0xd4] sm:$0xf]
  %v3917 = vld [vmem:[%s5 + $0xd8] sm:$0xf]
  %v3918 = vld [vmem:[%s5 + $0xdc] sm:$0xf]
  %v3919 = vld [vmem:[%s5 + $0xe0] sm:$0xf]
  %v3920 = vld [vmem:[%s5 + $0xe4] sm:$0xf]
  %v3921 = vld [vmem:[%s5 + $0xe8] sm:$0xf]
  %v3922 = vld [vmem:[%s5 + $0xec] sm:$0xf]
  %v3923 = vld [vmem:[%s5 + $0xf0] sm:$0xf]
  %v3924 = vld [vmem:[%s5 + $0xf4] sm:$0xf]
  %v3925 = vld [vmem:[%s5 + $0xf8] sm:$0xf]
  %v3926 = vld [vmem:[%s5 + $0xfc] sm:$0xf]
  %v3927 = vld [vmem:[%s5 + $0x100] sm:$0xf]
  %v3928 = vld [vmem:[%s5 + $0x104] sm:$0xf]
  %v3929 = vld [vmem:[%s5 + $0x108] sm:$0xf]
  %v3930 = vld [vmem:[%s5 + $0x10c] sm:$0xf]
  %v3931 = vld [vmem:[%s5 + $0x110] sm:$0xf]
  %v3932 = vld [vmem:[%s5 + $0x114] sm:$0xf]
  %v3933 = vld [vmem:[%s5 + $0x118] sm:$0xf]
  %v3934 = vld [vmem:[%s5 + $0x11c] sm:$0xf]
  %v4010 = vunpack.c.l.b16 %v3788
  %v4011 = vunpack.c.h.b16 %v3788
  %v4012 = vunpack.c.l.b16 %v3789
  %v4013 = vunpack.c.h.b16 %v3789
  %v4014 = vunpack.c.l.b16 %v3790
  %v4015 = vunpack.c.l.b16 %v3791
  %v4016 = vunpack.c.h.b16 %v3791
  %v4017 = vunpack.c.l.b16 %v3792
  %v4018 = vunpack.c.h.b16 %v3792
  %v4019 = vunpack.c.l.b16 %v3793
  %v4020 = vunpack.c.l.b16 %v3794
  %v4021 = vunpack.c.h.b16 %v3794
  %v4022 = vunpack.c.l.b16 %v3795
  %v4023 = vunpack.c.h.b16 %v3795
  %v4024 = vunpack.c.l.b16 %v3796
  %v4025 = vunpack.c.l.b16 %v3797
  %v4026 = vunpack.c.h.b16 %v3797
  %v4027 = vunpack.c.l.b16 %v3798
  %v4028 = vunpack.c.h.b16 %v3798
  %v4029 = vunpack.c.l.b16 %v3799
  %v4030 = vunpack.c.l.b16 %v3800
  %v4031 = vunpack.c.h.b16 %v3800
  %v4032 = vunpack.c.l.b16 %v3801
  %v4033 = vunpack.c.h.b16 %v3801
  %v4034 = vunpack.c.l.b16 %v3802
  %v4035 = vunpack.c.l.b16 %v3803
  %v4036 = vunpack.c.h.b16 %v3803
  %v4037 = vunpack.c.l.b16 %v3804
  %v4038 = vunpack.c.h.b16 %v3804
  %v4039 = vunpack.c.l.b16 %v3805
  %v4040 = vunpack.c.l.b16 %v3806
  %v4041 = vunpack.c.h.b16 %v3806
  %v4042 = vunpack.c.l.b16 %v3807
  %v4043 = vunpack.c.h.b16 %v3807
  %v4044 = vunpack.c.l.b16 %v3808
  %v4045 = vunpack.c.l.b16 %v3809
  %v4046 = vunpack.c.h.b16 %v3809
  %v4047 = vunpack.c.l.b16 %v3810
  %v4048 = vunpack.c.h.b16 %v3810
  %v4049 = vunpack.c.l.b16 %v3811
  %v4050 = vunpack.c.l.b16 %v3812
  %v4051 = vunpack.c.h.b16 %v3812
  %v4052 = vunpack.c.l.b16 %v3813
  %v4053 = vunpack.c.h.b16 %v3813
  %v4054 = vunpack.c.l.b16 %v3814
  %v4055 = vunpack.c.l.b16 %v3815
  %v4056 = vunpack.c.h.b16 %v3815
  %v4057 = vunpack.c.l.b16 %v3816
  %v4058 = vunpack.c.h.b16 %v3816
  %v4059 = vunpack.c.l.b16 %v3817
  %v4060 = vunpack.c.l.b16 %v3818
  %v4061 = vunpack.c.h.b16 %v3818
  %v4062 = vunpack.c.l.b16 %v3819
  %v4063 = vunpack.c.h.b16 %v3819
  %v4064 = vunpack.c.l.b16 %v3820
  %v4065 = vunpack.c.l.b16 %v3821
  %v4066 = vunpack.c.h.b16 %v3821
  %v4067 = vunpack.c.l.b16 %v3822
  %v4068 = vunpack.c.h.b16 %v3822
  %v4069 = vunpack.c.l.b16 %v3823
  %v4070 = vunpack.c.l.b16 %v3824
  %v4071 = vunpack.c.h.b16 %v3824
  %v4072 = vunpack.c.l.b16 %v3825
  %v4073 = vunpack.c.h.b16 %v3825
  %v4074 = vunpack.c.l.b16 %v3826
  %v4075 = vunpack.c.l.b16 %v3827
  %v4076 = vunpack.c.h.b16 %v3827
  %v4077 = vunpack.c.l.b16 %v3828
  %v4078 = vunpack.c.h.b16 %v3828
  %v4079 = vunpack.c.l.b16 %v3829
  %v4080 = vunpack.c.l.b16 %v3830
  %v4081 = vunpack.c.h.b16 %v3830
  %v4082 = vunpack.c.l.b16 %v3831
  %v4083 = vunpack.c.h.b16 %v3831
  %v4084 = vunpack.c.l.b16 %v3832
  %v4085 = vunpack.c.l.b16 %v3833
  %v4086 = vunpack.c.h.b16 %v3833
  %v4087 = vunpack.c.l.b16 %v3834
  %v4088 = vunpack.c.h.b16 %v3834
  %v4089 = vunpack.c.l.b16 %v3835
  %v4090 = vunpack.c.l.b16 %v3836
  %v4091 = vunpack.c.h.b16 %v3836
  %v4092 = vunpack.c.l.b16 %v3837
  %v4093 = vunpack.c.h.b16 %v3837
  %v4094 = vunpack.c.l.b16 %v3838
  %v4095 = vunpack.c.l.b16 %v3839
  %v4096 = vunpack.c.h.b16 %v3839
  %v4097 = vunpack.c.l.b16 %v3840
  %v4098 = vunpack.c.h.b16 %v3840
  %v4099 = vunpack.c.l.b16 %v3841
  %v4100 = vunpack.c.l.b16 %v3842
  %v4101 = vunpack.c.h.b16 %v3842
  %v4102 = vunpack.c.l.b16 %v3843
  %v4103 = vunpack.c.h.b16 %v3843
  %v4104 = vunpack.c.l.b16 %v3844
  %v4105 = vunpack.c.l.b16 %v3845
  %v4106 = vunpack.c.h.b16 %v3845
  %v4107 = vunpack.c.l.b16 %v3846
  %v4108 = vunpack.c.h.b16 %v3846
  %v4109 = vunpack.c.l.b16 %v3847
  %v4110 = vunpack.c.l.b16 %v3848
  %v4111 = vunpack.c.h.b16 %v3848
  %v4112 = vunpack.c.l.b16 %v3849
  %v4113 = vunpack.c.h.b16 %v3849
  %v4114 = vunpack.c.l.b16 %v3850
  %v4115 = vunpack.c.l.b16 %v3851
  %v4116 = vunpack.c.h.b16 %v3851
  %v4117 = vunpack.c.l.b16 %v3852
  %v4118 = vunpack.c.h.b16 %v3852
  %v4119 = vunpack.c.l.b16 %v3853
  %v4120 = vunpack.c.l.b16 %v3854
  %v4121 = vunpack.c.h.b16 %v3854
  %v4122 = vunpack.c.l.b16 %v3855
  %v4123 = vunpack.c.h.b16 %v3855
  %v4124 = vunpack.c.l.b16 %v3856
  %v4125 = vunpack.c.l.b16 %v3857
  %v4126 = vunpack.c.h.b16 %v3857
  %v4127 = vunpack.c.l.b16 %v3858
  %v4128 = vunpack.c.h.b16 %v3858
  %v4129 = vunpack.c.l.b16 %v3859
  %v4130 = vunpack.c.l.b16 %v3860
  %v4131 = vunpack.c.h.b16 %v3860
  %v4132 = vunpack.c.l.b16 %v3861
  %v4133 = vunpack.c.h.b16 %v3861
  %v4134 = vunpack.c.l.b16 %v3862
  %v4135 = vpack.c.b16 %v4015, %v4010
  %v4136 = vpack.c.b16 %v4016, %v4011
  %v4137 = vpack.c.b16 %v4017, %v4012
  %v4138 = vpack.c.b16 %v4018, %v4013
  %v4139 = vpack.c.b16 %v4019, %v4014
  %v4140 = vpack.c.b16 %v4025, %v4020
  %v4141 = vpack.c.b16 %v4026, %v4021
  %v4142 = vpack.c.b16 %v4027, %v4022
  %v4143 = vpack.c.b16 %v4028, %v4023
  %v4144 = vpack.c.b16 %v4029, %v4024
  %v4145 = vpack.c.b16 %v4035, %v4030
  %v4146 = vpack.c.b16 %v4036, %v4031
  %v4147 = vpack.c.b16 %v4037, %v4032
  %v4148 = vpack.c.b16 %v4038, %v4033
  %v4149 = vpack.c.b16 %v4039, %v4034
  %v4150 = vpack.c.b16 %v4045, %v4040
  %v4151 = vpack.c.b16 %v4046, %v4041
  %v4152 = vpack.c.b16 %v4047, %v4042
  %v4153 = vpack.c.b16 %v4048, %v4043
  %v4154 = vpack.c.b16 %v4049, %v4044
  %v4155 = vpack.c.b16 %v4055, %v4050
  %v4156 = vpack.c.b16 %v4056, %v4051
  %v4157 = vpack.c.b16 %v4057, %v4052
  %v4158 = vpack.c.b16 %v4058, %v4053
  %v4159 = vpack.c.b16 %v4059, %v4054
  %v4160 = vpack.c.b16 %v4065, %v4060
  %v4161 = vpack.c.b16 %v4066, %v4061
  %v4162 = vpack.c.b16 %v4067, %v4062
  %v4163 = vpack.c.b16 %v4068, %v4063
  %v4164 = vpack.c.b16 %v4069, %v4064
  %v4165 = vpack.c.b16 %v4075, %v4070
  %v4166 = vpack.c.b16 %v4076, %v4071
  %v4167 = vpack.c.b16 %v4077, %v4072
  %v4168 = vpack.c.b16 %v4078, %v4073
  %v4169 = vpack.c.b16 %v4079, %v4074
  %v4170 = vpack.c.b16 %v4085, %v4080
  %v4171 = vpack.c.b16 %v4086, %v4081
  %v4172 = vpack.c.b16 %v4087, %v4082
  %v4173 = vpack.c.b16 %v4088, %v4083
  %v4174 = vpack.c.b16 %v4089, %v4084
  %v4175 = vpack.c.b16 %v4095, %v4090
  %v4176 = vpack.c.b16 %v4096, %v4091
  %v4177 = vpack.c.b16 %v4097, %v4092
  %v4178 = vpack.c.b16 %v4098, %v4093
  %v4179 = vpack.c.b16 %v4099, %v4094
  %v4180 = vpack.c.b16 %v4105, %v4100
  %v4181 = vpack.c.b16 %v4106, %v4101
  %v4182 = vpack.c.b16 %v4107, %v4102
  %v4183 = vpack.c.b16 %v4108, %v4103
  %v4184 = vpack.c.b16 %v4109, %v4104
  %v4185 = vpack.c.b16 %v4115, %v4110
  %v4186 = vpack.c.b16 %v4116, %v4111
  %v4187 = vpack.c.b16 %v4117, %v4112
  %v4188 = vpack.c.b16 %v4118, %v4113
  %v4189 = vpack.c.b16 %v4119, %v4114
  %v4190 = vpack.c.b16 %v4125, %v4120
  %v4191 = vpack.c.b16 %v4126, %v4121
  %v4192 = vpack.c.b16 %v4127, %v4122
  %v4193 = vpack.c.b16 %v4128, %v4123
  %v4194 = vpack.c.b16 %v4129, %v4124
  %v4195 = vpack.c.b16 %v4130, %v4130
  %v4196 = vpack.c.b16 %v4131, %v4131
  %v4197 = vpack.c.b16 %v4132, %v4132
  %v4198 = vpack.c.b16 %v4133, %v4133
  %v4199 = vpack.c.b16 %v4134, %v4134
  %v4324 = vunpack.c.l.b16 %v3863
  %v4325 = vunpack.c.l.b16 %v3864
  %v4326 = vunpack.c.l.b16 %v3865
  %v4327 = vunpack.c.l.b16 %v3866
  %v4328 = vunpack.c.l.b16 %v3867
  %v4329 = vunpack.c.l.b16 %v3868
  %v4330 = vunpack.c.l.b16 %v3869
  %v4331 = vunpack.c.l.b16 %v3870
  %v4332 = vunpack.c.l.b16 %v3871
  %v4333 = vunpack.c.l.b16 %v3872
  %v4334 = vunpack.c.l.b16 %v3873
  %v4335 = vunpack.c.l.b16 %v3874
  %v4336 = vunpack.c.l.b16 %v3875
  %v4337 = vunpack.c.l.b16 %v3876
  %v4338 = vunpack.c.l.b16 %v3877
  %v4339 = vunpack.c.l.b16 %v3878
  %v4340 = vunpack.c.l.b16 %v3879
  %v4341 = vunpack.c.l.b16 %v3880
  %v4342 = vunpack.c.l.b16 %v3881
  %v4343 = vunpack.c.l.b16 %v3882
  %v4344 = vunpack.c.l.b16 %v3883
  %v4345 = vunpack.c.l.b16 %v3884
  %v4346 = vunpack.c.l.b16 %v3885
  %v4347 = vunpack.c.l.b16 %v3886
  %v4348 = vunpack.c.l.b16 %v3887
  %v4349 = vunpack.c.l.b16 %v3888
  %v4350 = vunpack.c.l.b16 %v3889
  %v4351 = vunpack.c.l.b16 %v3890
  %v4352 = vunpack.c.l.b16 %v3891
  %v4353 = vunpack.c.l.b16 %v3892
  %v4354 = vunpack.c.l.b16 %v3893
  %v4355 = vunpack.c.l.b16 %v3894
  %v4356 = vunpack.c.l.b16 %v3895
  %v4357 = vunpack.c.l.b16 %v3896
  %v4358 = vunpack.c.l.b16 %v3897
  %v4359 = vunpack.c.l.b16 %v3898
  %v4360 = vunpack.c.l.b16 %v3899
  %v4361 = vunpack.c.l.b16 %v3900
  %v4362 = vunpack.c.l.b16 %v3901
  %v4363 = vunpack.c.l.b16 %v3902
  %v4364 = vunpack.c.l.b16 %v3903
  %v4365 = vunpack.c.l.b16 %v3904
  %v4366 = vunpack.c.l.b16 %v3905
  %v4367 = vunpack.c.l.b16 %v3906
  %v4368 = vunpack.c.l.b16 %v3907
  %v4369 = vunpack.c.l.b16 %v3908
  %v4370 = vunpack.c.l.b16 %v3909
  %v4371 = vunpack.c.l.b16 %v3910
  %v4372 = vunpack.c.l.b16 %v3911
  %v4373 = vunpack.c.l.b16 %v3912
  %v4374 = vunpack.c.l.b16 %v3913
  %v4375 = vunpack.c.l.b16 %v3914
  %v4376 = vunpack.c.l.b16 %v3915
  %v4377 = vunpack.c.l.b16 %v3916
  %v4378 = vunpack.c.l.b16 %v3917
  %v4379 = vunpack.c.l.b16 %v3918
  %v4380 = vunpack.c.l.b16 %v3919
  %v4381 = vunpack.c.l.b16 %v3920
  %v4382 = vunpack.c.l.b16 %v3921
  %v4383 = vunpack.c.l.b16 %v3922
  %v4384 = vunpack.c.l.b16 %v3923
  %v4385 = vunpack.c.l.b16 %v3924
  %v4386 = vunpack.c.l.b16 %v3925
  %v4387 = vunpack.c.l.b16 %v3926
  %v4388 = vunpack.c.l.b16 %v3927
  %v4389 = vunpack.c.l.b16 %v3928
  %v4390 = vunpack.c.l.b16 %v3929
  %v4391 = vunpack.c.l.b16 %v3930
  %v4392 = vunpack.c.l.b16 %v3931
  %v4393 = vunpack.c.l.b16 %v3932
  %v4394 = vunpack.c.l.b16 %v3933
  %v4395 = vunpack.c.l.b16 %v3934
  %v4396 = vpack.c.b16 %v4325, %v4324
  %v4397 = vpack.c.b16 %v4327, %v4326
  %v4398 = vpack.c.b16 %v4329, %v4328
  %v4399 = vpack.c.b16 %v4331, %v4330
  %v4400 = vpack.c.b16 %v4333, %v4332
  %v4401 = vpack.c.b16 %v4335, %v4334
  %v4402 = vpack.c.b16 %v4337, %v4336
  %v4403 = vpack.c.b16 %v4339, %v4338
  %v4404 = vpack.c.b16 %v4341, %v4340
  %v4405 = vpack.c.b16 %v4343, %v4342
  %v4406 = vpack.c.b16 %v4345, %v4344
  %v4407 = vpack.c.b16 %v4347, %v4346
  %v4408 = vpack.c.b16 %v4349, %v4348
  %v4409 = vpack.c.b16 %v4351, %v4350
  %v4410 = vpack.c.b16 %v4353, %v4352
  %v4411 = vpack.c.b16 %v4355, %v4354
  %v4412 = vpack.c.b16 %v4357, %v4356
  %v4413 = vpack.c.b16 %v4359, %v4358
  %v4414 = vpack.c.b16 %v4361, %v4360
  %v4415 = vpack.c.b16 %v4363, %v4362
  %v4416 = vpack.c.b16 %v4365, %v4364
  %v4417 = vpack.c.b16 %v4367, %v4366
  %v4418 = vpack.c.b16 %v4369, %v4368
  %v4419 = vpack.c.b16 %v4371, %v4370
  %v4420 = vpack.c.b16 %v4373, %v4372
  %v4421 = vpack.c.b16 %v4375, %v4374
  %v4422 = vpack.c.b16 %v4377, %v4376
  %v4423 = vpack.c.b16 %v4379, %v4378
  %v4424 = vpack.c.b16 %v4381, %v4380
  %v4425 = vpack.c.b16 %v4383, %v4382
  %v4426 = vpack.c.b16 %v4385, %v4384
  %v4427 = vpack.c.b16 %v4387, %v4386
  %v4428 = vpack.c.b16 %v4389, %v4388
  %v4429 = vpack.c.b16 %v4391, %v4390
  %v4430 = vpack.c.b16 %v4393, %v4392
  %v4431 = vpack.c.b16 %v4395, %v4394
  %v4469 = vsel %vm1817, %v4139, 0
  %v4472 = vsel %vm1817, %v4144, 0
  %v4475 = vsel %vm1817, %v4149, 0
  %v4478 = vsel %vm1817, %v4154, 0
  %v4481 = vsel %vm1817, %v4159, 0
  %v4484 = vsel %vm1817, %v4164, 0
  %v4487 = vsel %vm1817, %v4169, 0
  %v4490 = vsel %vm1817, %v4174, 0
  %v4493 = vsel %vm1817, %v4179, 0
  %v4496 = vsel %vm1817, %v4184, 0
  %v4499 = vsel %vm1817, %v4189, 0
  %v4502 = vsel %vm1817, %v4194, 0
  %v4505 = vsel %vm1817, %v4199, 0
  %4507 = vmatpush.bf16.msra.mxu0 %v4403
  %4508 = vmatpush.bf16.msra.mxu0 %v4402
  %4509 = vmatpush.bf16.msra.mxu0 %v4401
  %4510 = vmatpush.bf16.msra.mxu0 %v4400
  %4511 = vmatpush.bf16.msra.mxu0 %v4399
  %4512 = vmatpush.bf16.msra.mxu0 %v4398
  %4513 = vmatpush.bf16.msra.mxu0 %v4397
  %4514 = vmatpush.bf16.msra.mxu0 %v4396
  %4515 = vmatmul.bf16.gmra.mxu0 %v4135
  %v4516 = vpop.f32.mrf.mxu0
  %v4517 = vadd.f32 0.0, %v4516
  %v4518 = vpop.f32.mrf.mxu0
  %v4519 = vadd.f32 0.0, %v4518
  %4520 = vmatmul.bf16.gmra.mxu0 %v4140
  %v4521 = vpop.f32.mrf.mxu0
  %v4522 = vadd.f32 0.0, %v4521
  %v4523 = vpop.f32.mrf.mxu0
  %v4524 = vadd.f32 0.0, %v4523
  %4525 = vmatmul.bf16.gmra.mxu0 %v4145
  %v4526 = vpop.f32.mrf.mxu0
  %v4527 = vadd.f32 0.0, %v4526
  %v4528 = vpop.f32.mrf.mxu0
  %v4529 = vadd.f32 0.0, %v4528
  %4530 = vmatmul.bf16.gmra.mxu0 %v4150
  %v4531 = vpop.f32.mrf.mxu0
  %v4532 = vadd.f32 0.0, %v4531
  %v4533 = vpop.f32.mrf.mxu0
  %v4534 = vadd.f32 0.0, %v4533
  %4535 = vmatmul.bf16.gmra.mxu0 %v4155
  %v4536 = vpop.f32.mrf.mxu0
  %v4537 = vadd.f32 0.0, %v4536
  %v4538 = vpop.f32.mrf.mxu0
  %v4539 = vadd.f32 0.0, %v4538
  %4540 = vmatmul.bf16.gmra.mxu0 %v4160
  %v4541 = vpop.f32.mrf.mxu0
  %v4542 = vadd.f32 0.0, %v4541
  %v4543 = vpop.f32.mrf.mxu0
  %v4544 = vadd.f32 0.0, %v4543
  %4545 = vmatmul.bf16.gmra.mxu0 %v4165
  %v4546 = vpop.f32.mrf.mxu0
  %v4547 = vadd.f32 0.0, %v4546
  %v4548 = vpop.f32.mrf.mxu0
  %v4549 = vadd.f32 0.0, %v4548
  %4550 = vmatmul.bf16.gmra.mxu0 %v4170
  %v4551 = vpop.f32.mrf.mxu0
  %v4552 = vadd.f32 0.0, %v4551
  %v4553 = vpop.f32.mrf.mxu0
  %v4554 = vadd.f32 0.0, %v4553
  %4555 = vmatmul.bf16.gmra.mxu0 %v4175
  %v4556 = vpop.f32.mrf.mxu0
  %v4557 = vadd.f32 0.0, %v4556
  %v4558 = vpop.f32.mrf.mxu0
  %v4559 = vadd.f32 0.0, %v4558
  %4560 = vmatmul.bf16.gmra.mxu0 %v4180
  %v4561 = vpop.f32.mrf.mxu0
  %v4562 = vadd.f32 0.0, %v4561
  %v4563 = vpop.f32.mrf.mxu0
  %v4564 = vadd.f32 0.0, %v4563
  %4565 = vmatmul.bf16.gmra.mxu0 %v4185
  %v4566 = vpop.f32.mrf.mxu0
  %v4567 = vadd.f32 0.0, %v4566
  %v4568 = vpop.f32.mrf.mxu0
  %v4569 = vadd.f32 0.0, %v4568
  %4570 = vmatmul.bf16.gmra.mxu0 %v4190
  %v4571 = vpop.f32.mrf.mxu0
  %v4572 = vadd.f32 0.0, %v4571
  %v4573 = vpop.f32.mrf.mxu0
  %v4574 = vadd.f32 0.0, %v4573
  %4575 = vmatmul.bf16.gmra.mxu0 %v4195
  %v4576 = vpop.f32.mrf.mxu0
  %v4577 = vadd.f32 0.0, %v4576
  %v4578 = vpop.f32.mrf.mxu0
  %4579 = vdwg.mxu0
  %4580 = vmatpush.bf16.msra.mxu0 %v4411
  %4581 = vmatpush.bf16.msra.mxu0 %v4410
  %4582 = vmatpush.bf16.msra.mxu0 %v4409
  %4583 = vmatpush.bf16.msra.mxu0 %v4408
  %4584 = vmatpush.bf16.msra.mxu0 %v4407
  %4585 = vmatpush.bf16.msra.mxu0 %v4406
  %4586 = vmatpush.bf16.msra.mxu0 %v4405
  %4587 = vmatpush.bf16.msra.mxu0 %v4404
  %4588 = vmatmul.bf16.gmra.mxu0 %v4136
  %v4589 = vpop.f32.mrf.mxu0
  %v4590 = vadd.f32 %v4517, %v4589
  %v4591 = vpop.f32.mrf.mxu0
  %v4592 = vadd.f32 %v4519, %v4591
  %4593 = vmatmul.bf16.gmra.mxu0 %v4141
  %v4594 = vpop.f32.mrf.mxu0
  %v4595 = vadd.f32 %v4522, %v4594
  %v4596 = vpop.f32.mrf.mxu0
  %v4597 = vadd.f32 %v4524, %v4596
  %4598 = vmatmul.bf16.gmra.mxu0 %v4146
  %v4599 = vpop.f32.mrf.mxu0
  %v4600 = vadd.f32 %v4527, %v4599
  %v4601 = vpop.f32.mrf.mxu0
  %v4602 = vadd.f32 %v4529, %v4601
  %4603 = vmatmul.bf16.gmra.mxu0 %v4151
  %v4604 = vpop.f32.mrf.mxu0
  %v4605 = vadd.f32 %v4532, %v4604
  %v4606 = vpop.f32.mrf.mxu0
  %v4607 = vadd.f32 %v4534, %v4606
  %4608 = vmatmul.bf16.gmra.mxu0 %v4156
  %v4609 = vpop.f32.mrf.mxu0
  %v4610 = vadd.f32 %v4537, %v4609
  %v4611 = vpop.f32.mrf.mxu0
  %v4612 = vadd.f32 %v4539, %v4611
  %4613 = vmatmul.bf16.gmra.mxu0 %v4161
  %v4614 = vpop.f32.mrf.mxu0
  %v4615 = vadd.f32 %v4542, %v4614
  %v4616 = vpop.f32.mrf.mxu0
  %v4617 = vadd.f32 %v4544, %v4616
  %4618 = vmatmul.bf16.gmra.mxu0 %v4166
  %v4619 = vpop.f32.mrf.mxu0
  %v4620 = vadd.f32 %v4547, %v4619
  %v4621 = vpop.f32.mrf.mxu0
  %v4622 = vadd.f32 %v4549, %v4621
  %4623 = vmatmul.bf16.gmra.mxu0 %v4171
  %v4624 = vpop.f32.mrf.mxu0
  %v4625 = vadd.f32 %v4552, %v4624
  %v4626 = vpop.f32.mrf.mxu0
  %v4627 = vadd.f32 %v4554, %v4626
  %4628 = vmatmul.bf16.gmra.mxu0 %v4176
  %v4629 = vpop.f32.mrf.mxu0
  %v4630 = vadd.f32 %v4557, %v4629
  %v4631 = vpop.f32.mrf.mxu0
  %v4632 = vadd.f32 %v4559, %v4631
  %4633 = vmatmul.bf16.gmra.mxu0 %v4181
  %v4634 = vpop.f32.mrf.mxu0
  %v4635 = vadd.f32 %v4562, %v4634
  %v4636 = vpop.f32.mrf.mxu0
  %v4637 = vadd.f32 %v4564, %v4636
  %4638 = vmatmul.bf16.gmra.mxu0 %v4186
  %v4639 = vpop.f32.mrf.mxu0
  %v4640 = vadd.f32 %v4567, %v4639
  %v4641 = vpop.f32.mrf.mxu0
  %v4642 = vadd.f32 %v4569, %v4641
  %4643 = vmatmul.bf16.gmra.mxu0 %v4191
  %v4644 = vpop.f32.mrf.mxu0
  %v4645 = vadd.f32 %v4572, %v4644
  %v4646 = vpop.f32.mrf.mxu0
  %v4647 = vadd.f32 %v4574, %v4646
  %4648 = vmatmul.bf16.gmra.mxu0 %v4196
  %v4649 = vpop.f32.mrf.mxu0
  %v4650 = vadd.f32 %v4577, %v4649
  %v4651 = vpop.f32.mrf.mxu0
  %4652 = vdwg.mxu0
  %4653 = vmatpush.bf16.msra.mxu0 %v4419
  %4654 = vmatpush.bf16.msra.mxu0 %v4418
  %4655 = vmatpush.bf16.msra.mxu0 %v4417
  %4656 = vmatpush.bf16.msra.mxu0 %v4416
  %4657 = vmatpush.bf16.msra.mxu0 %v4415
  %4658 = vmatpush.bf16.msra.mxu0 %v4414
  %4659 = vmatpush.bf16.msra.mxu0 %v4413
  %4660 = vmatpush.bf16.msra.mxu0 %v4412
  %4661 = vmatmul.bf16.gmra.mxu0 %v4137
  %v4662 = vpop.f32.mrf.mxu0
  %v4663 = vadd.f32 %v4590, %v4662
  %v4664 = vpop.f32.mrf.mxu0
  %v4665 = vadd.f32 %v4592, %v4664
  %4666 = vmatmul.bf16.gmra.mxu0 %v4142
  %v4667 = vpop.f32.mrf.mxu0
  %v4668 = vadd.f32 %v4595, %v4667
  %v4669 = vpop.f32.mrf.mxu0
  %v4670 = vadd.f32 %v4597, %v4669
  %4671 = vmatmul.bf16.gmra.mxu0 %v4147
  %v4672 = vpop.f32.mrf.mxu0
  %v4673 = vadd.f32 %v4600, %v4672
  %v4674 = vpop.f32.mrf.mxu0
  %v4675 = vadd.f32 %v4602, %v4674
  %4676 = vmatmul.bf16.gmra.mxu0 %v4152
  %v4677 = vpop.f32.mrf.mxu0
  %v4678 = vadd.f32 %v4605, %v4677
  %v4679 = vpop.f32.mrf.mxu0
  %v4680 = vadd.f32 %v4607, %v4679
  %4681 = vmatmul.bf16.gmra.mxu0 %v4157
  %v4682 = vpop.f32.mrf.mxu0
  %v4683 = vadd.f32 %v4610, %v4682
  %v4684 = vpop.f32.mrf.mxu0
  %v4685 = vadd.f32 %v4612, %v4684
  %4686 = vmatmul.bf16.gmra.mxu0 %v4162
  %v4687 = vpop.f32.mrf.mxu0
  %v4688 = vadd.f32 %v4615, %v4687
  %v4689 = vpop.f32.mrf.mxu0
  %v4690 = vadd.f32 %v4617, %v4689
  %4691 = vmatmul.bf16.gmra.mxu0 %v4167
  %v4692 = vpop.f32.mrf.mxu0
  %v4693 = vadd.f32 %v4620, %v4692
  %v4694 = vpop.f32.mrf.mxu0
  %v4695 = vadd.f32 %v4622, %v4694
  %4696 = vmatmul.bf16.gmra.mxu0 %v4172
  %v4697 = vpop.f32.mrf.mxu0
  %v4698 = vadd.f32 %v4625, %v4697
  %v4699 = vpop.f32.mrf.mxu0
  %v4700 = vadd.f32 %v4627, %v4699
  %4701 = vmatmul.bf16.gmra.mxu0 %v4177
  %v4702 = vpop.f32.mrf.mxu0
  %v4703 = vadd.f32 %v4630, %v4702
  %v4704 = vpop.f32.mrf.mxu0
  %v4705 = vadd.f32 %v4632, %v4704
  %4706 = vmatmul.bf16.gmra.mxu0 %v4182
  %v4707 = vpop.f32.mrf.mxu0
  %v4708 = vadd.f32 %v4635, %v4707
  %v4709 = vpop.f32.mrf.mxu0
  %v4710 = vadd.f32 %v4637, %v4709
  %4711 = vmatmul.bf16.gmra.mxu0 %v4187
  %v4712 = vpop.f32.mrf.mxu0
  %v4713 = vadd.f32 %v4640, %v4712
  %v4714 = vpop.f32.mrf.mxu0
  %v4715 = vadd.f32 %v4642, %v4714
  %4716 = vmatmul.bf16.gmra.mxu0 %v4192
  %v4717 = vpop.f32.mrf.mxu0
  %v4718 = vadd.f32 %v4645, %v4717
  %v4719 = vpop.f32.mrf.mxu0
  %v4720 = vadd.f32 %v4647, %v4719
  %4721 = vmatmul.bf16.gmra.mxu0 %v4197
  %v4722 = vpop.f32.mrf.mxu0
  %v4723 = vadd.f32 %v4650, %v4722
  %v4724 = vpop.f32.mrf.mxu0
  %4725 = vdwg.mxu0
  %4726 = vmatpush.bf16.msra.mxu0 %v4427
  %4727 = vmatpush.bf16.msra.mxu0 %v4426
  %4728 = vmatpush.bf16.msra.mxu0 %v4425
  %4729 = vmatpush.bf16.msra.mxu0 %v4424
  %4730 = vmatpush.bf16.msra.mxu0 %v4423
  %4731 = vmatpush.bf16.msra.mxu0 %v4422
  %4732 = vmatpush.bf16.msra.mxu0 %v4421
  %4733 = vmatpush.bf16.msra.mxu0 %v4420
  %4734 = vmatmul.bf16.gmra.mxu0 %v4138
  %v4735 = vpop.f32.mrf.mxu0
  %v4736 = vadd.f32 %v4663, %v4735
  %v4737 = vpop.f32.mrf.mxu0
  %v4738 = vadd.f32 %v4665, %v4737
  %4739 = vmatmul.bf16.gmra.mxu0 %v4143
  %v4740 = vpop.f32.mrf.mxu0
  %v4741 = vadd.f32 %v4668, %v4740
  %v4742 = vpop.f32.mrf.mxu0
  %v4743 = vadd.f32 %v4670, %v4742
  %4744 = vmatmul.bf16.gmra.mxu0 %v4148
  %v4745 = vpop.f32.mrf.mxu0
  %v4746 = vadd.f32 %v4673, %v4745
  %v4747 = vpop.f32.mrf.mxu0
  %v4748 = vadd.f32 %v4675, %v4747
  %4749 = vmatmul.bf16.gmra.mxu0 %v4153
  %v4750 = vpop.f32.mrf.mxu0
  %v4751 = vadd.f32 %v4678, %v4750
  %v4752 = vpop.f32.mrf.mxu0
  %v4753 = vadd.f32 %v4680, %v4752
  %4754 = vmatmul.bf16.gmra.mxu0 %v4158
  %v4755 = vpop.f32.mrf.mxu0
  %v4756 = vadd.f32 %v4683, %v4755
  %v4757 = vpop.f32.mrf.mxu0
  %v4758 = vadd.f32 %v4685, %v4757
  %4759 = vmatmul.bf16.gmra.mxu0 %v4163
  %v4760 = vpop.f32.mrf.mxu0
  %v4761 = vadd.f32 %v4688, %v4760
  %v4762 = vpop.f32.mrf.mxu0
  %v4763 = vadd.f32 %v4690, %v4762
  %4764 = vmatmul.bf16.gmra.mxu0 %v4168
  %v4765 = vpop.f32.mrf.mxu0
  %v4766 = vadd.f32 %v4693, %v4765
  %v4767 = vpop.f32.mrf.mxu0
  %v4768 = vadd.f32 %v4695, %v4767
  %4769 = vmatmul.bf16.gmra.mxu0 %v4173
  %v4770 = vpop.f32.mrf.mxu0
  %v4771 = vadd.f32 %v4698, %v4770
  %v4772 = vpop.f32.mrf.mxu0
  %v4773 = vadd.f32 %v4700, %v4772
  %4774 = vmatmul.bf16.gmra.mxu0 %v4178
  %v4775 = vpop.f32.mrf.mxu0
  %v4776 = vadd.f32 %v4703, %v4775
  %v4777 = vpop.f32.mrf.mxu0
  %v4778 = vadd.f32 %v4705, %v4777
  %4779 = vmatmul.bf16.gmra.mxu0 %v4183
  %v4780 = vpop.f32.mrf.mxu0
  %v4781 = vadd.f32 %v4708, %v4780
  %v4782 = vpop.f32.mrf.mxu0
  %v4783 = vadd.f32 %v4710, %v4782
  %4784 = vmatmul.bf16.gmra.mxu0 %v4188
  %v4785 = vpop.f32.mrf.mxu0
  %v4786 = vadd.f32 %v4713, %v4785
  %v4787 = vpop.f32.mrf.mxu0
  %v4788 = vadd.f32 %v4715, %v4787
  %4789 = vmatmul.bf16.gmra.mxu0 %v4193
  %v4790 = vpop.f32.mrf.mxu0
  %v4791 = vadd.f32 %v4718, %v4790
  %v4792 = vpop.f32.mrf.mxu0
  %v4793 = vadd.f32 %v4720, %v4792
  %4794 = vmatmul.bf16.gmra.mxu0 %v4198
  %v4795 = vpop.f32.mrf.mxu0
  %v4796 = vadd.f32 %v4723, %v4795
  %v4797 = vpop.f32.mrf.mxu0
  %4798 = vdwg.mxu0
  %4799 = vmatpush.bf16.msra.mxu0 0
  %4800 = vmatpush.bf16.msra.mxu0 0
  %4801 = vmatpush.bf16.msra.mxu0 0
  %4802 = vmatpush.bf16.msra.mxu0 0
  %4803 = vmatpush.bf16.msra.mxu0 %v4431
  %4804 = vmatpush.bf16.msra.mxu0 %v4430
  %4805 = vmatpush.bf16.msra.mxu0 %v4429
  %4806 = vmatpush.bf16.msra.mxu0 %v4428
  %4807 = vmatmul.bf16.gmra.mxu0 %v4469
  %v4808 = vpop.f32.mrf.mxu0
  %v4809 = vadd.f32 %v4736, %v4808
  %v4810 = vpop.f32.mrf.mxu0
  %v4811 = vadd.f32 %v4738, %v4810
  %4812 = vmatmul.bf16.gmra.mxu0 %v4472
  %v4813 = vpop.f32.mrf.mxu0
  %v4814 = vadd.f32 %v4741, %v4813
  %v4815 = vpop.f32.mrf.mxu0
  %v4816 = vadd.f32 %v4743, %v4815
  %4817 = vmatmul.bf16.gmra.mxu0 %v4475
  %v4818 = vpop.f32.mrf.mxu0
  %v4819 = vadd.f32 %v4746, %v4818
  %v4820 = vpop.f32.mrf.mxu0
  %v4821 = vadd.f32 %v4748, %v4820
  %4822 = vmatmul.bf16.gmra.mxu0 %v4478
  %v4823 = vpop.f32.mrf.mxu0
  %v4824 = vadd.f32 %v4751, %v4823
  %v4825 = vpop.f32.mrf.mxu0
  %v4826 = vadd.f32 %v4753, %v4825
  %4827 = vmatmul.bf16.gmra.mxu0 %v4481
  %v4828 = vpop.f32.mrf.mxu0
  %v4829 = vadd.f32 %v4756, %v4828
  %v4830 = vpop.f32.mrf.mxu0
  %v4831 = vadd.f32 %v4758, %v4830
  %4832 = vmatmul.bf16.gmra.mxu0 %v4484
  %v4833 = vpop.f32.mrf.mxu0
  %v4834 = vadd.f32 %v4761, %v4833
  %v4835 = vpop.f32.mrf.mxu0
  %v4836 = vadd.f32 %v4763, %v4835
  %4837 = vmatmul.bf16.gmra.mxu0 %v4487
  %v4838 = vpop.f32.mrf.mxu0
  %v4839 = vadd.f32 %v4766, %v4838
  %v4840 = vpop.f32.mrf.mxu0
  %v4841 = vadd.f32 %v4768, %v4840
  %4842 = vmatmul.bf16.gmra.mxu0 %v4490
  %v4843 = vpop.f32.mrf.mxu0
  %v4844 = vadd.f32 %v4771, %v4843
  %v4845 = vpop.f32.mrf.mxu0
  %v4846 = vadd.f32 %v4773, %v4845
  %4847 = vmatmul.bf16.gmra.mxu0 %v4493
  %v4848 = vpop.f32.mrf.mxu0
  %v4849 = vadd.f32 %v4776, %v4848
  %v4850 = vpop.f32.mrf.mxu0
  %v4851 = vadd.f32 %v4778, %v4850
  %4852 = vmatmul.bf16.gmra.mxu0 %v4496
  %v4853 = vpop.f32.mrf.mxu0
  %v4854 = vadd.f32 %v4781, %v4853
  %v4855 = vpop.f32.mrf.mxu0
  %v4856 = vadd.f32 %v4783, %v4855
  %4857 = vmatmul.bf16.gmra.mxu0 %v4499
  %v4858 = vpop.f32.mrf.mxu0
  %v4859 = vadd.f32 %v4786, %v4858
  %v4860 = vpop.f32.mrf.mxu0
  %v4861 = vadd.f32 %v4788, %v4860
  %4862 = vmatmul.bf16.gmra.mxu0 %v4502
  %v4863 = vpop.f32.mrf.mxu0
  %v4864 = vadd.f32 %v4791, %v4863
  %v4865 = vpop.f32.mrf.mxu0
  %v4866 = vadd.f32 %v4793, %v4865
  %4867 = vmatmul.bf16.gmra.mxu0 %v4505
  %v4868 = vpop.f32.mrf.mxu0
  %v4869 = vadd.f32 %v4796, %v4868
  %v4870 = vpop.f32.mrf.mxu0
  %4871 = vdwg.mxu0
  %v4872 = vmul.f32 %v4809, %v2225
  %v4873 = vmul.f32 %v4811, %v2230
  %v4874 = vmul.f32 %v4814, %v2235
  %v4875 = vmul.f32 %v4816, %v2240
  %v4876 = vmul.f32 %v4819, %v2245
  %v4877 = vmul.f32 %v4821, %v2250
  %v4878 = vmul.f32 %v4824, %v2255
  %v4879 = vmul.f32 %v4826, %v2260
  %v4880 = vmul.f32 %v4829, %v2265
  %v4881 = vmul.f32 %v4831, %v2270
  %v4882 = vmul.f32 %v4834, %v2275
  %v4883 = vmul.f32 %v4836, %v2280
  %v4884 = vmul.f32 %v4839, %v2285
  %v4885 = vmul.f32 %v4841, %v2290
  %v4886 = vmul.f32 %v4844, %v2295
  %v4887 = vmul.f32 %v4846, %v2300
  %v4888 = vmul.f32 %v4849, %v2305
  %v4889 = vmul.f32 %v4851, %v2310
  %v4890 = vmul.f32 %v4854, %v2315
  %v4891 = vmul.f32 %v4856, %v2320
  %v4892 = vmul.f32 %v4859, %v2325
  %v4893 = vmul.f32 %v4861, %v2330
  %v4894 = vmul.f32 %v4864, %v2335
  %v4895 = vmul.f32 %v4866, %v2340
  %v4896 = vmul.f32 %v4869, %v2345
  %v4897 = vsel %vm1817, %v4872, 0.0
  %v4898 = vsel %vm1817, %v4873, 0.0
  %v4899 = vadd.f32 %v4897, %v4898
  %v4900 = vsel %vm1817, %v4874, 0.0
  %v4901 = vadd.f32 %v4899, %v4900
  %v4902 = vsel %vm1817, %v4875, 0.0
  %v4903 = vadd.f32 %v4901, %v4902
  %v4904 = vsel %vm1817, %v4876, 0.0
  %v4905 = vadd.f32 %v4903, %v4904
  %v4906 = vsel %vm1817, %v4877, 0.0
  %v4907 = vadd.f32 %v4905, %v4906
  %v4908 = vsel %vm1817, %v4878, 0.0
  %v4909 = vadd.f32 %v4907, %v4908
  %v4910 = vsel %vm1817, %v4879, 0.0
  %v4911 = vadd.f32 %v4909, %v4910
  %v4912 = vsel %vm1817, %v4880, 0.0
  %v4913 = vadd.f32 %v4911, %v4912
  %v4914 = vsel %vm1817, %v4881, 0.0
  %v4915 = vadd.f32 %v4913, %v4914
  %v4916 = vsel %vm1817, %v4882, 0.0
  %v4917 = vadd.f32 %v4915, %v4916
  %v4918 = vsel %vm1817, %v4883, 0.0
  %v4919 = vadd.f32 %v4917, %v4918
  %v4920 = vsel %vm1817, %v4884, 0.0
  %v4921 = vadd.f32 %v4919, %v4920
  %v4922 = vsel %vm1817, %v4885, 0.0
  %v4923 = vadd.f32 %v4921, %v4922
  %v4924 = vsel %vm1817, %v4886, 0.0
  %v4925 = vadd.f32 %v4923, %v4924
  %v4926 = vsel %vm1817, %v4887, 0.0
  %v4927 = vadd.f32 %v4925, %v4926
  %v4928 = vsel %vm1817, %v4888, 0.0
  %v4929 = vadd.f32 %v4927, %v4928
  %v4930 = vsel %vm1817, %v4889, 0.0
  %v4931 = vadd.f32 %v4929, %v4930
  %v4932 = vsel %vm1817, %v4890, 0.0
  %v4933 = vadd.f32 %v4931, %v4932
  %v4934 = vsel %vm1817, %v4891, 0.0
  %v4935 = vadd.f32 %v4933, %v4934
  %v4936 = vsel %vm1817, %v4892, 0.0
  %v4937 = vadd.f32 %v4935, %v4936
  %v4938 = vsel %vm1817, %v4893, 0.0
  %v4939 = vadd.f32 %v4937, %v4938
  %v4940 = vsel %vm1817, %v4894, 0.0
  %v4941 = vadd.f32 %v4939, %v4940
  %v4942 = vsel %vm1817, %v4895, 0.0
  %v4943 = vadd.f32 %v4941, %v4942
  %v4944 = vsel %vm1817, %v4896, 0.0
  %v4945 = vadd.f32 %v4943, %v4944
  %v4946 = vrot.slane %v4945, 4
  %v4947 = vadd.f32 %v4945, %v4946
  %v4948 = vrot.slane %v4947, 2
  %v4949 = vadd.f32 %v4947, %v4948
  %v4950 = vrot.slane %v4949, 1
  %v4951 = vadd.f32 %v4949, %v4950
  %v4952 = vmul.f32 %v4872, %v4809
  %v4953 = vmul.f32 %v4873, %v4811
  %v4954 = vmul.f32 %v4874, %v4814
  %v4955 = vmul.f32 %v4875, %v4816
  %v4956 = vmul.f32 %v4876, %v4819
  %v4957 = vmul.f32 %v4877, %v4821
  %v4958 = vmul.f32 %v4878, %v4824
  %v4959 = vmul.f32 %v4879, %v4826
  %v4960 = vmul.f32 %v4880, %v4829
  %v4961 = vmul.f32 %v4881, %v4831
  %v4962 = vmul.f32 %v4882, %v4834
  %v4963 = vmul.f32 %v4883, %v4836
  %v4964 = vmul.f32 %v4884, %v4839
  %v4965 = vmul.f32 %v4885, %v4841
  %v4966 = vmul.f32 %v4886, %v4844
  %v4967 = vmul.f32 %v4887, %v4846
  %v4968 = vmul.f32 %v4888, %v4849
  %v4969 = vmul.f32 %v4889, %v4851
  %v4970 = vmul.f32 %v4890, %v4854
  %v4971 = vmul.f32 %v4891, %v4856
  %v4972 = vmul.f32 %v4892, %v4859
  %v4973 = vmul.f32 %v4893, %v4861
  %v4974 = vmul.f32 %v4894, %v4864
  %v4975 = vmul.f32 %v4895, %v4866
  %v4976 = vmul.f32 %v4896, %v4869
  %v4977 = vsel %vm1817, %v4952, 0.0
  %v4978 = vsel %vm1817, %v4953, 0.0
  %v4979 = vadd.f32 %v4977, %v4978
  %v4980 = vsel %vm1817, %v4954, 0.0
  %v4981 = vadd.f32 %v4979, %v4980
  %v4982 = vsel %vm1817, %v4955, 0.0
  %v4983 = vadd.f32 %v4981, %v4982
  %v4984 = vsel %vm1817, %v4956, 0.0
  %v4985 = vadd.f32 %v4983, %v4984
  %v4986 = vsel %vm1817, %v4957, 0.0
  %v4987 = vadd.f32 %v4985, %v4986
  %v4988 = vsel %vm1817, %v4958, 0.0
  %v4989 = vadd.f32 %v4987, %v4988
  %v4990 = vsel %vm1817, %v4959, 0.0
  %v4991 = vadd.f32 %v4989, %v4990
  %v4992 = vsel %vm1817, %v4960, 0.0
  %v4993 = vadd.f32 %v4991, %v4992
  %v4994 = vsel %vm1817, %v4961, 0.0
  %v4995 = vadd.f32 %v4993, %v4994
  %v4996 = vsel %vm1817, %v4962, 0.0
  %v4997 = vadd.f32 %v4995, %v4996
  %v4998 = vsel %vm1817, %v4963, 0.0
  %v4999 = vadd.f32 %v4997, %v4998
  %v5000 = vsel %vm1817, %v4964, 0.0
  %v5001 = vadd.f32 %v4999, %v5000
  %v5002 = vsel %vm1817, %v4965, 0.0
  %v5003 = vadd.f32 %v5001, %v5002
  %v5004 = vsel %vm1817, %v4966, 0.0
  %v5005 = vadd.f32 %v5003, %v5004
  %v5006 = vsel %vm1817, %v4967, 0.0
  %v5007 = vadd.f32 %v5005, %v5006
  %v5008 = vsel %vm1817, %v4968, 0.0
  %v5009 = vadd.f32 %v5007, %v5008
  %v5010 = vsel %vm1817, %v4969, 0.0
  %v5011 = vadd.f32 %v5009, %v5010
  %v5012 = vsel %vm1817, %v4970, 0.0
  %v5013 = vadd.f32 %v5011, %v5012
  %v5014 = vsel %vm1817, %v4971, 0.0
  %v5015 = vadd.f32 %v5013, %v5014
  %v5016 = vsel %vm1817, %v4972, 0.0
  %v5017 = vadd.f32 %v5015, %v5016
  %v5018 = vsel %vm1817, %v4973, 0.0
  %v5019 = vadd.f32 %v5017, %v5018
  %v5020 = vsel %vm1817, %v4974, 0.0
  %v5021 = vadd.f32 %v5019, %v5020
  %v5022 = vsel %vm1817, %v4975, 0.0
  %v5023 = vadd.f32 %v5021, %v5022
  %v5024 = vsel %vm1817, %v4976, 0.0
  %v5025 = vadd.f32 %v5023, %v5024
  %v5026 = vrot.slane %v5025, 4
  %v5027 = vadd.f32 %v5025, %v5026
  %v5028 = vrot.slane %v5027, 2
  %v5029 = vadd.f32 %v5027, %v5028
  %v5030 = vrot.slane %v5029, 1
  %v5031 = vadd.f32 %v5029, %v5030
  %v5032 = vmul.f32 %v4951, 0.0078125
  %v5033 = vmul.f32 %v5031, 0.0078125
  %v5034 = vmul.f32 %v5032, %v5032
  %v5035 = vsub.f32 %v5033, %v5034
  %v5036 = vld [vmem:[%s6] sm:$0x1]
  %v5037 = vadd.f32 %v5035, 1e-05
  %v5038 = vrsqrt.pop %v5037
  %v5039 = vmul.f32 %v5038, %v5037
  %v5040 = vmul.f32 %v5039, %v5038
  %v5041 = vmul.f32 0.5, %v5040
  %v5042 = vsub.f32 1.5, %v5041
  %v5043 = vmul.f32 %v5038, %v5042
  %vm5044 = vweird.f32 %v5037
  %vm5045 = vweird.f32 %v5038
  %vm5046 = vmor %vm5044, %vm5045
  %v5047 = vsel %vm5046, %v5038, %v5043
  %v5048 = vmul.f32 %v5036, %v5047
  %v5049 = vld [vmem:[%s7] sm:$0x1]
  %v5050 = vmul.f32 %v5032, %v5048
  %v5051 = vsub.f32 %v5049, %v5050
  %v5053 = vperm.slane %v5048, 0
  %v5055 = vmul.f32 %v4809, %v5053
  %v5056 = vmul.f32 %v4811, %v5053
  %v5057 = vmul.f32 %v4814, %v5053
  %v5058 = vmul.f32 %v4816, %v5053
  %v5059 = vmul.f32 %v4819, %v5053
  %v5060 = vmul.f32 %v4821, %v5053
  %v5061 = vmul.f32 %v4824, %v5053
  %v5062 = vmul.f32 %v4826, %v5053
  %v5063 = vmul.f32 %v4829, %v5053
  %v5064 = vmul.f32 %v4831, %v5053
  %v5065 = vmul.f32 %v4834, %v5053
  %v5066 = vmul.f32 %v4836, %v5053
  %v5067 = vmul.f32 %v4839, %v5053
  %v5068 = vmul.f32 %v4841, %v5053
  %v5069 = vmul.f32 %v4844, %v5053
  %v5070 = vmul.f32 %v4846, %v5053
  %v5071 = vmul.f32 %v4849, %v5053
  %v5072 = vmul.f32 %v4851, %v5053
  %v5073 = vmul.f32 %v4854, %v5053
  %v5074 = vmul.f32 %v4856, %v5053
  %v5075 = vmul.f32 %v4859, %v5053
  %v5076 = vmul.f32 %v4861, %v5053
  %v5077 = vmul.f32 %v4864, %v5053
  %v5078 = vmul.f32 %v4866, %v5053
  %v5079 = vmul.f32 %v4869, %v5053
  %v5081 = vperm.slane %v5051, 0
  %v5083 = vadd.f32 %v5055, %v5081
  %v5084 = vadd.f32 %v5056, %v5081
  %v5085 = vadd.f32 %v5057, %v5081
  %v5086 = vadd.f32 %v5058, %v5081
  %v5087 = vadd.f32 %v5059, %v5081
  %v5088 = vadd.f32 %v5060, %v5081
  %v5089 = vadd.f32 %v5061, %v5081
  %v5090 = vadd.f32 %v5062, %v5081
  %v5091 = vadd.f32 %v5063, %v5081
  %v5092 = vadd.f32 %v5064, %v5081
  %v5093 = vadd.f32 %v5065, %v5081
  %v5094 = vadd.f32 %v5066, %v5081
  %v5095 = vadd.f32 %v5067, %v5081
  %v5096 = vadd.f32 %v5068, %v5081
  %v5097 = vadd.f32 %v5069, %v5081
  %v5098 = vadd.f32 %v5070, %v5081
  %v5099 = vadd.f32 %v5071, %v5081
  %v5100 = vadd.f32 %v5072, %v5081
  %v5101 = vadd.f32 %v5073, %v5081
  %v5102 = vadd.f32 %v5074, %v5081
  %v5103 = vadd.f32 %v5075, %v5081
  %v5104 = vadd.f32 %v5076, %v5081
  %v5105 = vadd.f32 %v5077, %v5081
  %v5106 = vadd.f32 %v5078, %v5081
  %v5107 = vadd.f32 %v5079, %v5081
  %v5108 = vld [vmem:[%s0 + $0x10] sm:$0xff]
  %v5109 = vld [vmem:[%s0 + $0x18] sm:$0xff]
  %v5110 = vld [vmem:[%s0 + $0x20] sm:$0xff]
  %v5111 = vld [vmem:[%s0 + $0x28] sm:$0xff]
  %v5112 = vld [vmem:[%s0 + $0x30] sm:$0xff]
  %v5113 = vld [vmem:[%s0 + $0x38] sm:$0xff]
  %v5114 = vld [vmem:[%s0 + $0x40] sm:$0xff]
  %v5115 = vld [vmem:[%s0 + $0x48] sm:$0xff]
  %v5116 = vld [vmem:[%s0 + $0x50] sm:$0xff]
  %v5117 = vld [vmem:[%s0 + $0x58] sm:$0xff]
  %v5118 = vld [vmem:[%s0 + $0x60] sm:$0xff]
  %v5119 = vld [vmem:[%s0 + $0x68] sm:$0xff]
  %v5120 = vld [vmem:[%s0 + $0x70] sm:$0xff]
  %v5121 = vld [vmem:[%s0 + $0x78] sm:$0xff]
  %v5122 = vld [vmem:[%s0 + $0x80] sm:$0xff]
  %v5123 = vld [vmem:[%s0 + $0x88] sm:$0xff]
  %v5124 = vld [vmem:[%s0 + $0x90] sm:$0xff]
  %v5125 = vld [vmem:[%s0 + $0x98] sm:$0xff]
  %v5126 = vld [vmem:[%s0 + $0xa0] sm:$0xff]
  %v5127 = vld [vmem:[%s0 + $0xa8] sm:$0xff]
  %v5128 = vld [vmem:[%s0 + $0xb0] sm:$0xff]
  %v5129 = vld [vmem:[%s0 + $0xb8] sm:$0xff]
  %v5130 = vld [vmem:[%s0 + $0xc0] sm:$0xff]
  %v5131 = vld [vmem:[%s0 + $0xc8] sm:$0xff]
  %v5132 = vld [vmem:[%s0 + $0xd0] sm:$0xff]
  %v5133 = vadd.f32 %v5083, %v5108
  %v5134 = vadd.f32 %v5084, %v5109
  %v5135 = vadd.f32 %v5085, %v5110
  %v5136 = vadd.f32 %v5086, %v5111
  %v5137 = vadd.f32 %v5087, %v5112
  %v5138 = vadd.f32 %v5088, %v5113
  %v5139 = vadd.f32 %v5089, %v5114
  %v5140 = vadd.f32 %v5090, %v5115
  %v5141 = vadd.f32 %v5091, %v5116
  %v5142 = vadd.f32 %v5092, %v5117
  %v5143 = vadd.f32 %v5093, %v5118
  %v5144 = vadd.f32 %v5094, %v5119
  %v5145 = vadd.f32 %v5095, %v5120
  %v5146 = vadd.f32 %v5096, %v5121
  %v5147 = vadd.f32 %v5097, %v5122
  %v5148 = vadd.f32 %v5098, %v5123
  %v5149 = vadd.f32 %v5099, %v5124
  %v5150 = vadd.f32 %v5100, %v5125
  %v5151 = vadd.f32 %v5101, %v5126
  %v5152 = vadd.f32 %v5102, %v5127
  %v5153 = vadd.f32 %v5103, %v5128
  %v5154 = vadd.f32 %v5104, %v5129
  %v5155 = vadd.f32 %v5105, %v5130
  %v5156 = vadd.f32 %v5106, %v5131
  %v5157 = vadd.f32 %v5107, %v5132
  %5158 = vst.msk [vmem:[%s9] sm:$0xff] %vm1817, %v5133
  %5159 = vst.msk [vmem:[%s9 + $0x8] sm:$0xff] %vm1817, %v5134
  %5160 = vst.msk [vmem:[%s9 + $0x10] sm:$0xff] %vm1817, %v5135
  %5161 = vst.msk [vmem:[%s9 + $0x18] sm:$0xff] %vm1817, %v5136
  %5162 = vst.msk [vmem:[%s9 + $0x20] sm:$0xff] %vm1817, %v5137
  %5163 = vst.msk [vmem:[%s9 + $0x28] sm:$0xff] %vm1817, %v5138
  %5164 = vst.msk [vmem:[%s9 + $0x30] sm:$0xff] %vm1817, %v5139
  %5165 = vst.msk [vmem:[%s9 + $0x38] sm:$0xff] %vm1817, %v5140
  %5166 = vst.msk [vmem:[%s9 + $0x40] sm:$0xff] %vm1817, %v5141
  %5167 = vst.msk [vmem:[%s9 + $0x48] sm:$0xff] %vm1817, %v5142
  %5168 = vst.msk [vmem:[%s9 + $0x50] sm:$0xff] %vm1817, %v5143
  %5169 = vst.msk [vmem:[%s9 + $0x58] sm:$0xff] %vm1817, %v5144
  %5170 = vst.msk [vmem:[%s9 + $0x60] sm:$0xff] %vm1817, %v5145
  %5171 = vst.msk [vmem:[%s9 + $0x68] sm:$0xff] %vm1817, %v5146
  %5172 = vst.msk [vmem:[%s9 + $0x70] sm:$0xff] %vm1817, %v5147
  %5173 = vst.msk [vmem:[%s9 + $0x78] sm:$0xff] %vm1817, %v5148
  %5174 = vst.msk [vmem:[%s9 + $0x80] sm:$0xff] %vm1817, %v5149
  %5175 = vst.msk [vmem:[%s9 + $0x88] sm:$0xff] %vm1817, %v5150
  %5176 = vst.msk [vmem:[%s9 + $0x90] sm:$0xff] %vm1817, %v5151
  %5177 = vst.msk [vmem:[%s9 + $0x98] sm:$0xff] %vm1817, %v5152
  %5178 = vst.msk [vmem:[%s9 + $0xa0] sm:$0xff] %vm1817, %v5153
  %5179 = vst.msk [vmem:[%s9 + $0xa8] sm:$0xff] %vm1817, %v5154
  %5180 = vst.msk [vmem:[%s9 + $0xb0] sm:$0xff] %vm1817, %v5155
  %5181 = vst.msk [vmem:[%s9 + $0xb8] sm:$0xff] %vm1817, %v5156
  %5182 = vst.msk [vmem:[%s9 + $0xc0] sm:$0xff] %vm1817, %v5157
  // Predicated region
  $region38: #{tpu_custom_call.1} parent=0 // pred_check
    _
  $region39: #{tpu_custom_call.1} parent=0 // pred_check_branch
    %5184 = sbr.rel (0) target = $region41
  $region40: #{tpu_custom_call.1} parent=0 // pred_region
    _
  $region41: #{tpu_custom_call.1} parent=0 // pred_fallthru
    _
  // Predicated region
  $region42: #{tpu_custom_call.1} parent=0 // pred_check
    _
  $region43: #{tpu_custom_call.1} parent=0 // pred_check_branch
    %5186 = sbr.rel (0) target = $region45
  $region44: #{tpu_custom_call.1} parent=0 // pred_region
    _
  $region45: #{tpu_custom_call.1} parent=0 // pred_fallthru
    _

</llo_original>
